<compile_context>
chip_gen: v5e
topology: v5e:2x2
jax: 0.10.0
libtpu: 0.0.40
codegen_flags: <defaults>
</compile_context>

<pallas_src>
import math

import jax
import jax.numpy as jnp
from jax import lax
from jax.experimental import pallas as pl
from jax.experimental.pallas import tpu as pltpu  # noqa: F401  (TPU backend)

H = 300            # embedding_dim == hidden_dim (hardcoded in the PyTorch module)
BLK = 384          # per-gate column block (3 x 128 lanes, zero padded 300 -> 384)
GATE_W = 6 * BLK   # fused gate-matmul output width  (2304 = 9 x 256 -> full MXU tiles)
AUX_W = 11 * BLK   # packed aux row width (6 gate-bias blocks + bhn_f/bhn_b/bc/wo/bo)


def _fused_kernel(x_ref, wg_ref, wc_ref, aux_ref, label_ref, loss_ref, result_ref):
    x = x_ref[...]                                   # (N, 300)
    n_tok = x.shape[0]

    # --- GRU: one wide MXU pass for all six input-gate matmuls (fwd+bwd), with
    # the r/z/n_in biases added in the same sweep.  h0 == 0 => W_hh terms vanish.
    g = (jnp.dot(x, wg_ref[...], preferred_element_type=jnp.float32)
         + aux_ref[:, 0:GATE_W])                     # (N, 2304)

    def aux_blk(b):                                  # (1, 300) row of packed aux
        c = b * BLK
        return aux_ref[:, c:c + H]

    def direction(first_gate_blk, bhn_blk):
        c = first_gate_blk * BLK
        r = jax.nn.sigmoid(g[:, c:c + H])
        z = jax.nn.sigmoid(g[:, c + BLK:c + BLK + H])
        n = jnp.tanh(g[:, c + 2 * BLK:c + 2 * BLK + H] + r * aux_blk(bhn_blk))
        return (1.0 - z) * n                         # (N, 300)

    h_f = direction(0, 6)                            # forward direction
    h_b = direction(3, 7)                            # reverse direction

    # --- content_linear on concat([h_f, h_b]) (split into the two halves)
    out = (jnp.dot(h_f, wc_ref[0], preferred_element_type=jnp.float32)
           + jnp.dot(h_b, wc_ref[1], preferred_element_type=jnp.float32)
           + aux_blk(8))                             # (N, 300)

    # --- self-attention with Q = K = V = out (batch axis of size 1 squeezed)
    scores = lax.dot_general(out, out, (((1,), (1,)), ((), ())),
                             preferred_element_type=jnp.float32)
    scores = scores * (1.0 / math.sqrt(H))           # (N, N)
    scores = scores - jnp.max(scores, axis=-1, keepdims=True)
    p = jnp.exp(scores)
    attn = p * pl.reciprocal(jnp.sum(p, axis=-1, keepdims=True), approx=True)
    # TODO(synk): F.dropout(p=0.1, training=True) on attn is stochastic; identity used.

    # mean over tokens of (attn @ out)  ==  (row-mean of attn) @ out
    attn_mean = jnp.sum(attn, axis=0, keepdims=True) * (1.0 / n_tok)   # (1, N)
    ctx = jnp.dot(attn_mean, out, preferred_element_type=jnp.float32)  # (1, 300)

    # --- output_linear as a lane-dense VPU reduction + sigmoid + SE loss
    logit = (jnp.sum(ctx * aux_blk(9), axis=-1, keepdims=True)
             + aux_ref[0:1, 10 * BLK:10 * BLK + 1])                    # (1, 1)
    result = jax.nn.sigmoid(logit)
    result_ref[...] = result
    loss_ref[...] = (label_ref[...] - result) ** 2


def init_params(key):
    """Deterministic parameter init mimicking PyTorch's default uniform init."""
    ks = jax.random.split(key, 10)

    def u(k, shape, bound):
        return jax.random.uniform(k, shape, jnp.float32, -bound, bound)

    gb = 1.0 / math.sqrt(H)
    return {
        # GRU forward direction (weight_ih_l0 rows ordered [r, z, n], each (H, H))
        "w_ih_f": u(ks[0], (3 * H, H), gb),
        "b_ih_f": u(ks[1], (3 * H,), gb),
        "b_hh_f": u(ks[2], (3 * H,), gb),
        # GRU reverse direction
        "w_ih_b": u(ks[3], (3 * H, H), gb),
        "b_ih_b": u(ks[4], (3 * H,), gb),
        "b_hh_b": u(ks[5], (3 * H,), gb),
        # NOTE: weight_hh_l0{,_reverse} are mathematically unused (h0 == 0, L == 1).
        # content_linear: Linear(2H, H)
        "w_c": u(ks[6], (H, 2 * H), 1.0 / math.sqrt(2 * H)),
        "b_c": u(ks[7], (H,), 1.0 / math.sqrt(2 * H)),
        # output_linear: Linear(H, 1)
        "w_o": u(ks[8], (1, H), gb),
        "b_o": u(ks[9], (1,), gb),
    }


def prepare_params(params):
    """One-time packing of PyTorch-layout params into three lane-dense slabs.
    Hoisted out of the per-event call so no transposes/concats run per event."""
    def pad_w(w):                       # (H, H) -> (H, BLK): zero-pad columns
        return jnp.pad(w, ((0, 0), (0, BLK - H)))

    def pad_r(v):                       # (H,) -> (1, BLK): zero-pad lanes
        return jnp.pad(jnp.reshape(v, (1, H)), ((0, 0), (0, BLK - H)))

    def gate_w(w_ih):                   # rows [r, z, n] -> (in, out) per gate
        return w_ih[0:H].T, w_ih[H:2 * H].T, w_ih[2 * H:3 * H].T

    wr_f, wz_f, wn_f = gate_w(params["w_ih_f"])
    wr_b, wz_b, wn_b = gate_w(params["w_ih_b"])
    w_gates = jnp.concatenate(
        [pad_w(w) for w in (wr_f, wz_f, wn_f, wr_b, wz_b, wn_b)], axis=1)  # (300, 2304)

    def gate_b(b_ih, b_hh):
        br = b_ih[0:H] + b_hh[0:H]
        bz = b_ih[H:2 * H] + b_hh[H:2 * H]
        bin_ = b_ih[2 * H:3 * H]
        bhn = b_hh[2 * H:3 * H]
        return br, bz, bin_, bhn

    br_f, bz_f, bin_f, bhn_f = gate_b(params["b_ih_f"], params["b_hh_f"])
    br_b, bz_b, bin_b, bhn_b = gate_b(params["b_ih_b"], params["b_hh_b"])

    bo_row = jnp.zeros((1, BLK), jnp.float32).at[0, 0].set(params["b_o"][0])
    aux = jnp.concatenate(
        [pad_r(v) for v in (br_f, bz_f, bin_f, br_b, bz_b, bin_b,
                            bhn_f, bhn_b, params["b_c"],
                            jnp.reshape(params["w_o"], (H,)))]
        + [bo_row], axis=1)                                                # (1, 4224)

    wc = jnp.stack([params["w_c"][:, :H].T, params["w_c"][:, H:].T], axis=0)  # (2,300,300)
    return {"w_gates": w_gates, "wc": wc, "aux": aux}


def model_forward(packed, x_data, label):
    """x_data: anything reshapeable to (N, 300) (torch's .view(1, -1, 300)); label: scalar."""
    x = jnp.asarray(x_data, jnp.float32).reshape(-1, H)   # (N, 300)
    lab = jnp.asarray(label, jnp.float32).reshape(1, 1)

    loss, result = pl.pallas_call(
        _fused_kernel,
        out_shape=(
            jax.ShapeDtypeStruct((1, 1), jnp.float32),    # loss
            jax.ShapeDtypeStruct((1, 1), jnp.float32),    # result
        ),
    )(x, packed["w_gates"], packed["wc"], packed["aux"], lab)

    # Match torch shapes: both (1,)
    return loss.reshape(1), result.reshape(1)


if __name__ == "__main__":
    key = jax.random.PRNGKey(0)
    pkey, xkey = jax.random.split(key)
    params = init_params(pkey)
    packed = prepare_params(params)        # one-time weight packing (outside jit)

    N = 8  # "tokens": torch sees event[0].view(1, -1, 300) == (1, 8, 300)
    x_data = jax.random.normal(xkey, (N, H), jnp.float32)   # event[0]
    label = jnp.float32(1.0)                                # event[1]

    fwd = jax.jit(model_forward)
    loss, result = fwd(packed, x_data, label)
    jax.block_until_ready((loss, result))
    print("KERNEL_OK")
</pallas_src>

<mosaic_0001>
module attributes {stable_mosaic.version = 11 : i64} {
  func.func @_fused_kernel(%arg0: memref<8x300xf32, #tpu.memory_space<vmem>>, %arg1: memref<300x2304xf32, #tpu.memory_space<vmem>>, %arg2: memref<2x300x300xf32, #tpu.memory_space<vmem>>, %arg3: memref<1x4224xf32, #tpu.memory_space<vmem>>, %arg4: memref<1x1xf32, #tpu.memory_space<vmem>>, %arg5: memref<1x1xf32, #tpu.memory_space<vmem>>, %arg6: memref<1x1xf32, #tpu.memory_space<vmem>>) attributes {dimension_semantics = [], scalar_prefetch = 0 : i64, scratch_operands = 0 : i64, tpu.core_type = #tpu.core_type<tc>} {
    %c0 = arith.constant 0 : index
    %c0_0 = arith.constant 0 : index
    %0 = vector.load %arg0[%c0, %c0_0] : memref<8x300xf32, #tpu.memory_space<vmem>>, vector<8x300xf32>
    %c0_1 = arith.constant 0 : index
    %c0_2 = arith.constant 0 : index
    %1 = vector.load %arg1[%c0_1, %c0_2] : memref<300x2304xf32, #tpu.memory_space<vmem>>, vector<300x2304xf32>
    %cst = arith.constant dense<0.000000e+00> : vector<8x2304xf32>
    %2 = tpu.matmul %0, %1, %cst {dimension_numbers = #tpu.dot_dimension_numbers<[1], [0], [0], [1], [0, 0, 1, 1], [], []>} : vector<8x300xf32>, vector<300x2304xf32>, vector<8x2304xf32> -> vector<8x2304xf32>
    %c0_3 = arith.constant 0 : index
    %c0_4 = arith.constant 0 : index
    %3 = vector.load %arg3[%c0_3, %c0_4] : memref<1x4224xf32, #tpu.memory_space<vmem>>, vector<1x2304xf32>
    %4 = vector.broadcast %3 : vector<1x2304xf32> to vector<8x2304xf32>
    %5 = arith.addf %2, %4 : vector<8x2304xf32>
    %6 = vector.extract_strided_slice %5 {offsets = [0, 0], sizes = [8, 300], strides = [1, 1]} : vector<8x2304xf32> to vector<8x300xf32>
    %7 = arith.negf %6 : vector<8x300xf32>
    %8 = math.exp %7 : vector<8x300xf32>
    %cst_5 = arith.constant 1.000000e+00 : f32
    %9 = vector.broadcast %cst_5 : f32 to vector<8x300xf32>
    %10 = arith.addf %9, %8 : vector<8x300xf32>
    %11 = arith.divf %9, %10 : vector<8x300xf32>
    %12 = vector.extract_strided_slice %5 {offsets = [0, 384], sizes = [8, 300], strides = [1, 1]} : vector<8x2304xf32> to vector<8x300xf32>
    %13 = arith.negf %12 : vector<8x300xf32>
    %14 = math.exp %13 : vector<8x300xf32>
    %cst_6 = arith.constant 1.000000e+00 : f32
    %15 = vector.broadcast %cst_6 : f32 to vector<8x300xf32>
    %16 = arith.addf %15, %14 : vector<8x300xf32>
    %17 = arith.divf %15, %16 : vector<8x300xf32>
    %18 = vector.extract_strided_slice %5 {offsets = [0, 768], sizes = [8, 300], strides = [1, 1]} : vector<8x2304xf32> to vector<8x300xf32>
    %c0_7 = arith.constant 0 : index
    %c2304 = arith.constant 2304 : index
    %19 = vector.load %arg3[%c0_7, %c2304] : memref<1x4224xf32, #tpu.memory_space<vmem>>, vector<1x300xf32>
    %20 = vector.broadcast %19 : vector<1x300xf32> to vector<8x300xf32>
    %21 = arith.mulf %11, %20 : vector<8x300xf32>
    %22 = arith.addf %18, %21 : vector<8x300xf32>
    %23 = math.tanh %22 : vector<8x300xf32>
    %cst_8 = arith.constant 1.000000e+00 : f32
    %24 = vector.broadcast %cst_8 : f32 to vector<8x300xf32>
    %25 = arith.subf %24, %17 : vector<8x300xf32>
    %26 = arith.mulf %25, %23 : vector<8x300xf32>
    %27 = vector.extract_strided_slice %5 {offsets = [0, 1152], sizes = [8, 300], strides = [1, 1]} : vector<8x2304xf32> to vector<8x300xf32>
    %28 = arith.negf %27 : vector<8x300xf32>
    %29 = math.exp %28 : vector<8x300xf32>
    %cst_9 = arith.constant 1.000000e+00 : f32
    %30 = vector.broadcast %cst_9 : f32 to vector<8x300xf32>
    %31 = arith.addf %30, %29 : vector<8x300xf32>
    %32 = arith.divf %30, %31 : vector<8x300xf32>
    %33 = vector.extract_strided_slice %5 {offsets = [0, 1536], sizes = [8, 300], strides = [1, 1]} : vector<8x2304xf32> to vector<8x300xf32>
    %34 = arith.negf %33 : vector<8x300xf32>
    %35 = math.exp %34 : vector<8x300xf32>
    %cst_10 = arith.constant 1.000000e+00 : f32
    %36 = vector.broadcast %cst_10 : f32 to vector<8x300xf32>
    %37 = arith.addf %36, %35 : vector<8x300xf32>
    %38 = arith.divf %36, %37 : vector<8x300xf32>
    %39 = vector.extract_strided_slice %5 {offsets = [0, 1920], sizes = [8, 300], strides = [1, 1]} : vector<8x2304xf32> to vector<8x300xf32>
    %c0_11 = arith.constant 0 : index
    %c2688 = arith.constant 2688 : index
    %40 = vector.load %arg3[%c0_11, %c2688] : memref<1x4224xf32, #tpu.memory_space<vmem>>, vector<1x300xf32>
    %41 = vector.broadcast %40 : vector<1x300xf32> to vector<8x300xf32>
    %42 = arith.mulf %32, %41 : vector<8x300xf32>
    %43 = arith.addf %39, %42 : vector<8x300xf32>
    %44 = math.tanh %43 : vector<8x300xf32>
    %cst_12 = arith.constant 1.000000e+00 : f32
    %45 = vector.broadcast %cst_12 : f32 to vector<8x300xf32>
    %46 = arith.subf %45, %38 : vector<8x300xf32>
    %47 = arith.mulf %46, %44 : vector<8x300xf32>
    %c0_13 = arith.constant 0 : index
    %c0_14 = arith.constant 0 : index
    %c0_15 = arith.constant 0 : index
    %48 = vector.load %arg2[%c0_13, %c0_14, %c0_15] : memref<2x300x300xf32, #tpu.memory_space<vmem>>, vector<1x300x300xf32>
    %49 = vector.shape_cast %48 : vector<1x300x300xf32> to vector<300x300xf32>
    %cst_16 = arith.constant dense<0.000000e+00> : vector<8x300xf32>
    %50 = tpu.matmul %26, %49, %cst_16 {dimension_numbers = #tpu.dot_dimension_numbers<[1], [0], [0], [1], [0, 0, 1, 1], [], []>} : vector<8x300xf32>, vector<300x300xf32>, vector<8x300xf32> -> vector<8x300xf32>
    %c1 = arith.constant 1 : index
    %c0_17 = arith.constant 0 : index
    %c0_18 = arith.constant 0 : index
    %51 = vector.load %arg2[%c1, %c0_17, %c0_18] : memref<2x300x300xf32, #tpu.memory_space<vmem>>, vector<1x300x300xf32>
    %52 = vector.shape_cast %51 : vector<1x300x300xf32> to vector<300x300xf32>
    %cst_19 = arith.constant dense<0.000000e+00> : vector<8x300xf32>
    %53 = tpu.matmul %47, %52, %cst_19 {dimension_numbers = #tpu.dot_dimension_numbers<[1], [0], [0], [1], [0, 0, 1, 1], [], []>} : vector<8x300xf32>, vector<300x300xf32>, vector<8x300xf32> -> vector<8x300xf32>
    %54 = arith.addf %50, %53 : vector<8x300xf32>
    %c0_20 = arith.constant 0 : index
    %c3072 = arith.constant 3072 : index
    %55 = vector.load %arg3[%c0_20, %c3072] : memref<1x4224xf32, #tpu.memory_space<vmem>>, vector<1x300xf32>
    %56 = vector.broadcast %55 : vector<1x300xf32> to vector<8x300xf32>
    %57 = arith.addf %54, %56 : vector<8x300xf32>
    %cst_21 = arith.constant dense<0.000000e+00> : vector<8x8xf32>
    %58 = tpu.matmul %57, %57, %cst_21 {dimension_numbers = #tpu.dot_dimension_numbers<[1], [1], [0], [0], [0, 0, 1, 0], [], []>} : vector<8x300xf32>, vector<8x300xf32>, vector<8x8xf32> -> vector<8x8xf32>
    %cst_22 = arith.constant 0.0577350259 : f32
    %59 = vector.broadcast %cst_22 : f32 to vector<8x8xf32>
    %60 = arith.mulf %58, %59 : vector<8x8xf32>
    %cst_23 = arith.constant dense<0xFF800000> : vector<8xf32>
    %61 = vector.multi_reduction <maximumf>, %60, %cst_23 [1] : vector<8x8xf32> to vector<8xf32>
    %62 = vector.shape_cast %61 : vector<8xf32> to vector<8x1xf32>
    %63 = vector.broadcast %62 : vector<8x1xf32> to vector<8x8xf32>
    %64 = arith.subf %60, %63 : vector<8x8xf32>
    %65 = math.exp %64 : vector<8x8xf32>
    %cst_24 = arith.constant dense<0.000000e+00> : vector<8xf32>
    %66 = vector.multi_reduction <add>, %65, %cst_24 [1] : vector<8x8xf32> to vector<8xf32>
    %67 = vector.shape_cast %66 : vector<8xf32> to vector<8x1xf32>
    %68 = tpu.reciprocal %67 {approx = true} : vector<8x1xf32> -> vector<8x1xf32>
    %69 = vector.broadcast %68 : vector<8x1xf32> to vector<8x8xf32>
    %70 = arith.mulf %65, %69 : vector<8x8xf32>
    %cst_25 = arith.constant dense<0.000000e+00> : vector<8xf32>
    %71 = vector.multi_reduction <add>, %70, %cst_25 [0] : vector<8x8xf32> to vector<8xf32>
    %72 = vector.shape_cast %71 : vector<8xf32> to vector<1x8xf32>
    %cst_26 = arith.constant 1.250000e-01 : f32
    %73 = vector.broadcast %cst_26 : f32 to vector<1x8xf32>
    %74 = arith.mulf %72, %73 : vector<1x8xf32>
    %cst_27 = arith.constant dense<0.000000e+00> : vector<1x300xf32>
    %75 = tpu.matmul %74, %57, %cst_27 {dimension_numbers = #tpu.dot_dimension_numbers<[1], [0], [0], [1], [0, 0, 1, 1], [], []>} : vector<1x8xf32>, vector<8x300xf32>, vector<1x300xf32> -> vector<1x300xf32>
    %c0_28 = arith.constant 0 : index
    %c3456 = arith.constant 3456 : index
    %76 = vector.load %arg3[%c0_28, %c3456] : memref<1x4224xf32, #tpu.memory_space<vmem>>, vector<1x300xf32>
    %77 = arith.mulf %75, %76 : vector<1x300xf32>
    %cst_29 = arith.constant dense<0.000000e+00> : vector<1xf32>
    %78 = vector.multi_reduction <add>, %77, %cst_29 [1] : vector<1x300xf32> to vector<1xf32>
    %79 = vector.shape_cast %78 : vector<1xf32> to vector<1x1xf32>
    %c0_30 = arith.constant 0 : index
    %c3840 = arith.constant 3840 : index
    %80 = vector.load %arg3[%c0_30, %c3840] : memref<1x4224xf32, #tpu.memory_space<vmem>>, vector<1x1xf32>
    %81 = arith.addf %79, %80 : vector<1x1xf32>
    %82 = arith.negf %81 : vector<1x1xf32>
    %83 = math.exp %82 : vector<1x1xf32>
    %cst_31 = arith.constant 1.000000e+00 : f32
    %84 = vector.broadcast %cst_31 : f32 to vector<1x1xf32>
    %85 = arith.addf %84, %83 : vector<1x1xf32>
    %86 = arith.divf %84, %85 : vector<1x1xf32>
    %c0_32 = arith.constant 0 : index
    %c0_33 = arith.constant 0 : index
    %87 = vector.load %arg6[%c0_32, %c0_33] : memref<1x1xf32, #tpu.memory_space<vmem>>, vector<1x1xf32>
    tpu.vector_store %arg6[%c0_32, %c0_33], %86 {strides = array<i32>} : memref<1x1xf32, #tpu.memory_space<vmem>>, vector<1x1xf32>,
    %c0_34 = arith.constant 0 : index
    %c0_35 = arith.constant 0 : index
    %88 = vector.load %arg4[%c0_34, %c0_35] : memref<1x1xf32, #tpu.memory_space<vmem>>, vector<1x1xf32>
    %89 = arith.subf %88, %86 : vector<1x1xf32>
    %90 = arith.mulf %89, %89 : vector<1x1xf32>
    %c0_36 = arith.constant 0 : index
    %c0_37 = arith.constant 0 : index
    %91 = vector.load %arg5[%c0_36, %c0_37] : memref<1x1xf32, #tpu.memory_space<vmem>>, vector<1x1xf32>
    tpu.vector_store %arg5[%c0_36, %c0_37], %90 {strides = array<i32>} : memref<1x1xf32, #tpu.memory_space<vmem>>, vector<1x1xf32>,
    return
  }
}

</mosaic_0001>

<llo_original>
// kernel: model_forward.1
$region0: #{model_forward.1}
  #allocation0 [shape = 'u32[]', space=smem, size = 0x4, offset = 0x4, fixed_abs, tag = 'smem constant byte address 0x4 - core index']
  #allocation1 [shape = 'u32[72,128]{1,0:T(1,128)}', space=vmem, size = 0x9000, scoped, tag = 'internal scratch']
  #allocation2 [shape = 'f32[1,1]{1,0:T(1,128)S(1)}', space=vmem, size = 0x200, scoped, tag = 'scoped memory for model_forward.1']
  %s0 = inlined_call_operand.hbm [shape: f32[8,300], index: 0, kind: input, shape index: {}]
  %s1 = inlined_call_operand.hbm [shape: f32[300,2304], index: 1, kind: input, shape index: {}]
  %s2 = inlined_call_operand.vmem [shape: f32[2,300,300], index: 2, kind: input, shape index: {}]
  %s3 = inlined_call_operand.hbm [shape: f32[1,4224], index: 3, kind: input, shape index: {}]
  %s4 = inlined_call_operand.<no memory space> [shape: f32[1,1], index: 4, kind: input, shape index: {}]
  %s5 = inlined_call_operand.hbm [shape: f32[1,1], index: 5, kind: output, shape index: {0}]
  %s6 = inlined_call_operand.hbm [shape: f32[1,1], index: 6, kind: output, shape index: {1}]
  %7 = xla_tuple %s5, %s6
  %s8 = sld [smem:[#allocation0]]
  $region50: #{model_forward.1} parent=0
    _
  %s10 = ssub.s32 1, %s8
  %s11 = scalar_select 0, %s10, %s8
  %v12 = vstv %s4
  %13 = vst [vmem:[#allocation2] sm:$0x1] %v12
  $region1: #{model_forward.1} parent=0
    #allocation3 [shape = 'u8[12288]{0}', space=vmem, size = 0x3000, scoped, tag = 'input window, operand 0, single buffered']
    #allocation4 [shape = 's32[1]{0}', space=sflag, size = 0x4, scoped, tag = 'scoped memory for model_forward.1']
    #allocation5 [shape = 's32[1]{0}', space=sflag, size = 0x4, scoped, tag = 'scoped memory for model_forward.1']
    #allocation6 [shape = 'u8[2801664]{0}', space=vmem, size = 0x2ac000, scoped, tag = 'input window, operand 1, single buffered']
    #allocation7 [shape = 's32[1]{0}', space=sflag, size = 0x4, scoped, tag = 'scoped memory for model_forward.1']
    #allocation8 [shape = 'u8[16896]{0}', space=vmem, size = 0x4400, scoped, tag = 'input window, operand 3, single buffered']
    #allocation9 [shape = 'u8[512]{0}', space=vmem, size = 0x400, scoped, tag = 'output window, operand 0, single buffered']
    #allocation10 [shape = 'u8[512]{0}', space=vmem, size = 0x400, scoped, tag = 'output window, operand 1, single buffered']
    #allocation11 [shape = 's32[1]{0}', space=sflag, size = 0x4, scoped, tag = 'scoped memory for model_forward.1']
    %14 = vsyncpa [#allocation4], 0
    %15 = vsyncpa [#allocation7], 0
    %16 = vsyncpa [#allocation5], 0
    %17 = vsyncpa [#allocation11], 0
    // Predicated region
    $region2: #{model_forward.1} parent=1 // pred_check
      _
    $region3: #{model_forward.1} parent=1 // pred_check_branch
      %19 = sbr.rel (0) target = $region5
    $region4: #{model_forward.1} parent=1 // pred_region
      %21 = vsyncadd [#allocation4], 0
      %s23 = sshll.u32 %s0, 4
      %s24 = int_to_ptr.hbm [resolvable:$true] %s23
      %s25 = sshll.u32 [#allocation3], 4
      %s26 = int_to_ptr.vmem [resolvable:$true] %s25
      %28 = dma.hbm_to_vmem [thread:$0]  %s24, 384, %s26, [#allocation4]
    $region5: #{model_forward.1} parent=1 // pred_fallthru
      _
    // Predicated region
    $region6: #{model_forward.1} parent=1 // pred_check
      _
    $region7: #{model_forward.1} parent=1 // pred_check_branch
      %30 = sbr.rel (0) target = $region9
    $region8: #{model_forward.1} parent=1 // pred_region
      %32 = vsyncadd [#allocation7], 0
      %s33 = sshll.u32 %s1, 4
      %s34 = int_to_ptr.hbm [resolvable:$true] %s33
      %s35 = sshll.u32 [#allocation6], 4
      %s36 = int_to_ptr.vmem [resolvable:$true] %s35
      %41 = dma.hbm_to_vmem [thread:$0]  %s34, 87552, %s36, [#allocation7], 2304, 2304, 144
    $region9: #{model_forward.1} parent=1 // pred_fallthru
      _
    // Predicated region
    $region10: #{model_forward.1} parent=1 // pred_check
      _
    $region11: #{model_forward.1} parent=1 // pred_check_branch
      %43 = sbr.rel (0) target = $region13
    $region12: #{model_forward.1} parent=1 // pred_region
      _
    $region13: #{model_forward.1} parent=1 // pred_fallthru
      _
    // Predicated region
    $region14: #{model_forward.1} parent=1 // pred_check
      _
    $region15: #{model_forward.1} parent=1 // pred_check_branch
      %45 = sbr.rel (0) target = $region17
    $region16: #{model_forward.1} parent=1 // pred_region
      %47 = vsyncadd [#allocation7], 0
      %s49 = sshll.u32 %s3, 4
      %s50 = int_to_ptr.hbm [resolvable:$true] %s49
      %s51 = sshll.u32 [#allocation8], 4
      %s52 = int_to_ptr.vmem [resolvable:$true] %s51
      %54 = dma.hbm_to_vmem [thread:$0]  %s50, 528, %s52, [#allocation7]
    $region17: #{model_forward.1} parent=1 // pred_fallthru
      _
    // Predicated region
    $region18: #{model_forward.1} parent=1 // pred_check
      _
    $region19: #{model_forward.1} parent=1 // pred_check_branch
      %56 = sbr.rel (0) target = $region21
    $region20: #{model_forward.1} parent=1 // pred_region
      _
    $region21: #{model_forward.1} parent=1 // pred_fallthru
      _
    // Predicated region
    $region22: #{model_forward.1} parent=1 // pred_check
      _
    $region23: #{model_forward.1} parent=1 // pred_check_branch
      %58 = sbr.rel (0) target = $region25
    $region24: #{model_forward.1} parent=1 // pred_region
      %60 = dma.done [#allocation4], 384
    $region25: #{model_forward.1} parent=1 // pred_fallthru
      _
    // Predicated region
    $region26: #{model_forward.1} parent=1 // pred_check
      _
    $region27: #{model_forward.1} parent=1 // pred_check_branch
      %62 = sbr.rel (0) target = $region29
    $region28: #{model_forward.1} parent=1 // pred_region
      %64 = dma.done [#allocation7], 87552
    $region29: #{model_forward.1} parent=1 // pred_fallthru
      _
    // Predicated region
    $region30: #{model_forward.1} parent=1 // pred_check
      _
    $region31: #{model_forward.1} parent=1 // pred_check_branch
      %66 = sbr.rel (0) target = $region33
    $region32: #{model_forward.1} parent=1 // pred_region
      %68 = dma.done [#allocation7], 528
    $region33: #{model_forward.1} parent=1 // pred_fallthru
      _
    %v69 = vld [vmem:[#allocation3] sm:$0xff]
    %v70 = vld [vmem:[#allocation3 + $0x8] sm:$0xff]
    %v71 = vld [vmem:[#allocation3 + $0x10] sm:$0xff]
    %v72 = vld [vmem:[#allocation6] sm:$0xff]
    %v73 = vld [vmem:[#allocation6 + $0x8] sm:$0xff]
    %v74 = vld [vmem:[#allocation6 + $0x10] sm:$0xff]
    %v75 = vld [vmem:[#allocation6 + $0x18] sm:$0xff]
    %v76 = vld [vmem:[#allocation6 + $0x20] sm:$0xff]
    %v77 = vld [vmem:[#allocation6 + $0x28] sm:$0xff]
    %v78 = vld [vmem:[#allocation6 + $0x30] sm:$0xff]
    %v79 = vld [vmem:[#allocation6 + $0x38] sm:$0xff]
    %v80 = vld [vmem:[#allocation6 + $0x40] sm:$0xff]
    %v81 = vld [vmem:[#allocation6 + $0x48] sm:$0xff]
    %v82 = vld [vmem:[#allocation6 + $0x50] sm:$0xff]
    %v83 = vld [vmem:[#allocation6 + $0x58] sm:$0xff]
    %v84 = vld [vmem:[#allocation6 + $0x60] sm:$0xff]
    %v85 = vld [vmem:[#allocation6 + $0x68] sm:$0xff]
    %v86 = vld [vmem:[#allocation6 + $0x70] sm:$0xff]
    %v87 = vld [vmem:[#allocation6 + $0x78] sm:$0xff]
    %v88 = vld [vmem:[#allocation6 + $0x80] sm:$0xff]
    %v89 = vld [vmem:[#allocation6 + $0x88] sm:$0xff]
    %v90 = vld [vmem:[#allocation6 + $0x90] sm:$0xff]
    %v91 = vld [vmem:[#allocation6 + $0x98] sm:$0xff]
    %v92 = vld [vmem:[#allocation6 + $0xa0] sm:$0xff]
    %v93 = vld [vmem:[#allocation6 + $0xa8] sm:$0xff]
    %v94 = vld [vmem:[#allocation6 + $0xb0] sm:$0xff]
    %v95 = vld [vmem:[#allocation6 + $0xb8] sm:$0xff]
    %v96 = vld [vmem:[#allocation6 + $0xc0] sm:$0xff]
    %v97 = vld [vmem:[#allocation6 + $0xc8] sm:$0xff]
    %v98 = vld [vmem:[#allocation6 + $0xd0] sm:$0xff]
    %v99 = vld [vmem:[#allocation6 + $0xd8] sm:$0xff]
    %v100 = vld [vmem:[#allocation6 + $0xe0] sm:$0xff]
    %v101 = vld [vmem:[#allocation6 + $0xe8] sm:$0xff]
    %v102 = vld [vmem:[#allocation6 + $0xf0] sm:$0xff]
    %v103 = vld [vmem:[#allocation6 + $0xf8] sm:$0xff]
    %v104 = vld [vmem:[#allocation6 + $0x100] sm:$0xff]
    %v105 = vld [vmem:[#allocation6 + $0x108] sm:$0xff]
    %v106 = vld [vmem:[#allocation6 + $0x110] sm:$0xff]
    %v107 = vld [vmem:[#allocation6 + $0x118] sm:$0xff]
    %v108 = vld [vmem:[#allocation6 + $0x120] sm:$0xff]
    %v109 = vld [vmem:[#allocation6 + $0x128] sm:$0xff]
    %v110 = vld [vmem:[#allocation6 + $0x130] sm:$0xff]
    %v111 = vld [vmem:[#allocation6 + $0x138] sm:$0xff]
    %v112 = vld [vmem:[#allocation6 + $0x140] sm:$0xff]
    %v113 = vld [vmem:[#allocation6 + $0x148] sm:$0xff]
    %v114 = vld [vmem:[#allocation6 + $0x150] sm:$0xff]
    %v115 = vld [vmem:[#allocation6 + $0x158] sm:$0xff]
    %v116 = vld [vmem:[#allocation6 + $0x160] sm:$0xff]
    %v117 = vld [vmem:[#allocation6 + $0x168] sm:$0xff]
    %v118 = vld [vmem:[#allocation6 + $0x170] sm:$0xff]
    %v119 = vld [vmem:[#allocation6 + $0x178] sm:$0xff]
    %v120 = vld [vmem:[#allocation6 + $0x180] sm:$0xff]
    %v121 = vld [vmem:[#allocation6 + $0x188] sm:$0xff]
    %v122 = vld [vmem:[#allocation6 + $0x190] sm:$0xff]
    %v123 = vld [vmem:[#allocation6 + $0x198] sm:$0xff]
    %v124 = vld [vmem:[#allocation6 + $0x1a0] sm:$0xff]
    %v125 = vld [vmem:[#allocation6 + $0x1a8] sm:$0xff]
    %v126 = vld [vmem:[#allocation6 + $0x1b0] sm:$0xff]
    %v127 = vld [vmem:[#allocation6 + $0x1b8] sm:$0xff]
    %v128 = vld [vmem:[#allocation6 + $0x1c0] sm:$0xff]
    %v129 = vld [vmem:[#allocation6 + $0x1c8] sm:$0xff]
    %v130 = vld [vmem:[#allocation6 + $0x1d0] sm:$0xff]
    %v131 = vld [vmem:[#allocation6 + $0x1d8] sm:$0xff]
    %v132 = vld [vmem:[#allocation6 + $0x1e0] sm:$0xff]
    %v133 = vld [vmem:[#allocation6 + $0x1e8] sm:$0xff]
    %v134 = vld [vmem:[#allocation6 + $0x1f0] sm:$0xff]
    %v135 = vld [vmem:[#allocation6 + $0x1f8] sm:$0xff]
    %v136 = vld [vmem:[#allocation6 + $0x200] sm:$0xff]
    %v137 = vld [vmem:[#allocation6 + $0x208] sm:$0xff]
    %v138 = vld [vmem:[#allocation6 + $0x210] sm:$0xff]
    %v139 = vld [vmem:[#allocation6 + $0x218] sm:$0xff]
    %v140 = vld [vmem:[#allocation6 + $0x220] sm:$0xff]
    %v141 = vld [vmem:[#allocation6 + $0x228] sm:$0xff]
    %v142 = vld [vmem:[#allocation6 + $0x230] sm:$0xff]
    %v143 = vld [vmem:[#allocation6 + $0x238] sm:$0xff]
    %v144 = vld [vmem:[#allocation6 + $0x240] sm:$0xff]
    %v145 = vld [vmem:[#allocation6 + $0x248] sm:$0xff]
    %v146 = vld [vmem:[#allocation6 + $0x250] sm:$0xff]
    %v147 = vld [vmem:[#allocation6 + $0x258] sm:$0xff]
    %v148 = vld [vmem:[#allocation6 + $0x260] sm:$0xff]
    %v149 = vld [vmem:[#allocation6 + $0x268] sm:$0xff]
    %v150 = vld [vmem:[#allocation6 + $0x270] sm:$0xff]
    %v151 = vld [vmem:[#allocation6 + $0x278] sm:$0xff]
    %v152 = vld [vmem:[#allocation6 + $0x280] sm:$0xff]
    %v153 = vld [vmem:[#allocation6 + $0x288] sm:$0xff]
    %v154 = vld [vmem:[#allocation6 + $0x290] sm:$0xff]
    %v155 = vld [vmem:[#allocation6 + $0x298] sm:$0xff]
    %v156 = vld [vmem:[#allocation6 + $0x2a0] sm:$0xff]
    %v157 = vld [vmem:[#allocation6 + $0x2a8] sm:$0xff]
    %v158 = vld [vmem:[#allocation6 + $0x2b0] sm:$0xff]
    %v159 = vld [vmem:[#allocation6 + $0x2b8] sm:$0xff]
    %v160 = vld [vmem:[#allocation6 + $0x2c0] sm:$0xff]
    %v161 = vld [vmem:[#allocation6 + $0x2c8] sm:$0xff]
    %v162 = vld [vmem:[#allocation6 + $0x2d0] sm:$0xff]
    %v163 = vld [vmem:[#allocation6 + $0x2d8] sm:$0xff]
    %v164 = vld [vmem:[#allocation6 + $0x2e0] sm:$0xff]
    %v165 = vld [vmem:[#allocation6 + $0x2e8] sm:$0xff]
    %v166 = vld [vmem:[#allocation6 + $0x2f0] sm:$0xff]
    %v167 = vld [vmem:[#allocation6 + $0x2f8] sm:$0xff]
    %v168 = vld [vmem:[#allocation6 + $0x300] sm:$0xff]
    %v169 = vld [vmem:[#allocation6 + $0x308] sm:$0xff]
    %v170 = vld [vmem:[#allocation6 + $0x310] sm:$0xff]
    %v171 = vld [vmem:[#allocation6 + $0x318] sm:$0xff]
    %v172 = vld [vmem:[#allocation6 + $0x320] sm:$0xff]
    %v173 = vld [vmem:[#allocation6 + $0x328] sm:$0xff]
    %v174 = vld [vmem:[#allocation6 + $0x330] sm:$0xff]
    %v175 = vld [vmem:[#allocation6 + $0x338] sm:$0xff]
    %v176 = vld [vmem:[#allocation6 + $0x340] sm:$0xff]
    %v177 = vld [vmem:[#allocation6 + $0x348] sm:$0xff]
    %v178 = vld [vmem:[#allocation6 + $0x350] sm:$0xff]
    %v179 = vld [vmem:[#allocation6 + $0x358] sm:$0xff]
    %v180 = vld [vmem:[#allocation6 + $0x360] sm:$0xff]
    %v181 = vld [vmem:[#allocation6 + $0x368] sm:$0xff]
    %v182 = vld [vmem:[#allocation6 + $0x370] sm:$0xff]
    %v183 = vld [vmem:[#allocation6 + $0x378] sm:$0xff]
    %v184 = vld [vmem:[#allocation6 + $0x380] sm:$0xff]
    %v185 = vld [vmem:[#allocation6 + $0x388] sm:$0xff]
    %v186 = vld [vmem:[#allocation6 + $0x390] sm:$0xff]
    %v187 = vld [vmem:[#allocation6 + $0x398] sm:$0xff]
    %v188 = vld [vmem:[#allocation6 + $0x3a0] sm:$0xff]
    %v189 = vld [vmem:[#allocation6 + $0x3a8] sm:$0xff]
    %v190 = vld [vmem:[#allocation6 + $0x3b0] sm:$0xff]
    %v191 = vld [vmem:[#allocation6 + $0x3b8] sm:$0xff]
    %v192 = vld [vmem:[#allocation6 + $0x3c0] sm:$0xff]
    %v193 = vld [vmem:[#allocation6 + $0x3c8] sm:$0xff]
    %v194 = vld [vmem:[#allocation6 + $0x3d0] sm:$0xff]
    %v195 = vld [vmem:[#allocation6 + $0x3d8] sm:$0xff]
    %v196 = vld [vmem:[#allocation6 + $0x3e0] sm:$0xff]
    %v197 = vld [vmem:[#allocation6 + $0x3e8] sm:$0xff]
    %v198 = vld [vmem:[#allocation6 + $0x3f0] sm:$0xff]
    %v199 = vld [vmem:[#allocation6 + $0x3f8] sm:$0xff]
    %v200 = vld [vmem:[#allocation6 + $0x400] sm:$0xff]
    %v201 = vld [vmem:[#allocation6 + $0x408] sm:$0xff]
    %v202 = vld [vmem:[#allocation6 + $0x410] sm:$0xff]
    %v203 = vld [vmem:[#allocation6 + $0x418] sm:$0xff]
    %v204 = vld [vmem:[#allocation6 + $0x420] sm:$0xff]
    %v205 = vld [vmem:[#allocation6 + $0x428] sm:$0xff]
    %v206 = vld [vmem:[#allocation6 + $0x430] sm:$0xff]
    %v207 = vld [vmem:[#allocation6 + $0x438] sm:$0xff]
    %v208 = vld [vmem:[#allocation6 + $0x440] sm:$0xff]
    %v209 = vld [vmem:[#allocation6 + $0x448] sm:$0xff]
    %v210 = vld [vmem:[#allocation6 + $0x450] sm:$0xff]
    %v211 = vld [vmem:[#allocation6 + $0x458] sm:$0xff]
    %v212 = vld [vmem:[#allocation6 + $0x460] sm:$0xff]
    %v213 = vld [vmem:[#allocation6 + $0x468] sm:$0xff]
    %v214 = vld [vmem:[#allocation6 + $0x470] sm:$0xff]
    %v215 = vld [vmem:[#allocation6 + $0x478] sm:$0xff]
    %v216 = vld [vmem:[#allocation6 + $0x480] sm:$0xff]
    %v217 = vld [vmem:[#allocation6 + $0x488] sm:$0xff]
    %v218 = vld [vmem:[#allocation6 + $0x490] sm:$0xff]
    %v219 = vld [vmem:[#allocation6 + $0x498] sm:$0xff]
    %v220 = vld [vmem:[#allocation6 + $0x4a0] sm:$0xff]
    %v221 = vld [vmem:[#allocation6 + $0x4a8] sm:$0xff]
    %v222 = vld [vmem:[#allocation6 + $0x4b0] sm:$0xff]
    %v223 = vld [vmem:[#allocation6 + $0x4b8] sm:$0xff]
    %v224 = vld [vmem:[#allocation6 + $0x4c0] sm:$0xff]
    %v225 = vld [vmem:[#allocation6 + $0x4c8] sm:$0xff]
    %v226 = vld [vmem:[#allocation6 + $0x4d0] sm:$0xff]
    %v227 = vld [vmem:[#allocation6 + $0x4d8] sm:$0xff]
    %v228 = vld [vmem:[#allocation6 + $0x4e0] sm:$0xff]
    %v229 = vld [vmem:[#allocation6 + $0x4e8] sm:$0xff]
    %v230 = vld [vmem:[#allocation6 + $0x4f0] sm:$0xff]
    %v231 = vld [vmem:[#allocation6 + $0x4f8] sm:$0xff]
    %v232 = vld [vmem:[#allocation6 + $0x500] sm:$0xff]
    %v233 = vld [vmem:[#allocation6 + $0x508] sm:$0xff]
    %v234 = vld [vmem:[#allocation6 + $0x510] sm:$0xff]
    %v235 = vld [vmem:[#allocation6 + $0x518] sm:$0xff]
    %v236 = vld [vmem:[#allocation6 + $0x520] sm:$0xff]
    %v237 = vld [vmem:[#allocation6 + $0x528] sm:$0xff]
    %v238 = vld [vmem:[#allocation6 + $0x530] sm:$0xff]
    %v239 = vld [vmem:[#allocation6 + $0x538] sm:$0xff]
    %v240 = vld [vmem:[#allocation6 + $0x540] sm:$0xff]
    %v241 = vld [vmem:[#allocation6 + $0x548] sm:$0xff]
    %v242 = vld [vmem:[#allocation6 + $0x550] sm:$0xff]
    %v243 = vld [vmem:[#allocation6 + $0x558] sm:$0xff]
    %v244 = vld [vmem:[#allocation6 + $0x560] sm:$0xff]
    %v245 = vld [vmem:[#allocation6 + $0x568] sm:$0xff]
    %v246 = vld [vmem:[#allocation6 + $0x570] sm:$0xff]
    %v247 = vld [vmem:[#allocation6 + $0x578] sm:$0xff]
    %v248 = vld [vmem:[#allocation6 + $0x580] sm:$0xff]
    %v249 = vld [vmem:[#allocation6 + $0x588] sm:$0xff]
    %v250 = vld [vmem:[#allocation6 + $0x590] sm:$0xff]
    %v251 = vld [vmem:[#allocation6 + $0x598] sm:$0xff]
    %v252 = vld [vmem:[#allocation6 + $0x5a0] sm:$0xff]
    %v253 = vld [vmem:[#allocation6 + $0x5a8] sm:$0xff]
    %v254 = vld [vmem:[#allocation6 + $0x5b0] sm:$0xff]
    %v255 = vld [vmem:[#allocation6 + $0x5b8] sm:$0xff]
    %v256 = vld [vmem:[#allocation6 + $0x5c0] sm:$0xff]
    %v257 = vld [vmem:[#allocation6 + $0x5c8] sm:$0xff]
    %v258 = vld [vmem:[#allocation6 + $0x5d0] sm:$0xff]
    %v259 = vld [vmem:[#allocation6 + $0x5d8] sm:$0xff]
    %v260 = vld [vmem:[#allocation6 + $0x5e0] sm:$0xff]
    %v261 = vld [vmem:[#allocation6 + $0x5e8] sm:$0xff]
    %v262 = vld [vmem:[#allocation6 + $0x5f0] sm:$0xff]
    %v263 = vld [vmem:[#allocation6 + $0x5f8] sm:$0xff]
    %v264 = vld [vmem:[#allocation6 + $0x600] sm:$0xff]
    %v265 = vld [vmem:[#allocation6 + $0x608] sm:$0xff]
    %v266 = vld [vmem:[#allocation6 + $0x610] sm:$0xff]
    %v267 = vld [vmem:[#allocation6 + $0x618] sm:$0xff]
    %v268 = vld [vmem:[#allocation6 + $0x620] sm:$0xff]
    %v269 = vld [vmem:[#allocation6 + $0x628] sm:$0xff]
    %v270 = vld [vmem:[#allocation6 + $0x630] sm:$0xff]
    %v271 = vld [vmem:[#allocation6 + $0x638] sm:$0xff]
    %v272 = vld [vmem:[#allocation6 + $0x640] sm:$0xff]
    %v273 = vld [vmem:[#allocation6 + $0x648] sm:$0xff]
    %v274 = vld [vmem:[#allocation6 + $0x650] sm:$0xff]
    %v275 = vld [vmem:[#allocation6 + $0x658] sm:$0xff]
    %v276 = vld [vmem:[#allocation6 + $0x660] sm:$0xff]
    %v277 = vld [vmem:[#allocation6 + $0x668] sm:$0xff]
    %v278 = vld [vmem:[#allocation6 + $0x670] sm:$0xff]
    %v279 = vld [vmem:[#allocation6 + $0x678] sm:$0xff]
    %v280 = vld [vmem:[#allocation6 + $0x680] sm:$0xff]
    %v281 = vld [vmem:[#allocation6 + $0x688] sm:$0xff]
    %v282 = vld [vmem:[#allocation6 + $0x690] sm:$0xff]
    %v283 = vld [vmem:[#allocation6 + $0x698] sm:$0xff]
    %v284 = vld [vmem:[#allocation6 + $0x6a0] sm:$0xff]
    %v285 = vld [vmem:[#allocation6 + $0x6a8] sm:$0xff]
    %v286 = vld [vmem:[#allocation6 + $0x6b0] sm:$0xff]
    %v287 = vld [vmem:[#allocation6 + $0x6b8] sm:$0xff]
    %v288 = vld [vmem:[#allocation6 + $0x6c0] sm:$0xff]
    %v289 = vld [vmem:[#allocation6 + $0x6c8] sm:$0xff]
    %v290 = vld [vmem:[#allocation6 + $0x6d0] sm:$0xff]
    %v291 = vld [vmem:[#allocation6 + $0x6d8] sm:$0xff]
    %v292 = vld [vmem:[#allocation6 + $0x6e0] sm:$0xff]
    %v293 = vld [vmem:[#allocation6 + $0x6e8] sm:$0xff]
    %v294 = vld [vmem:[#allocation6 + $0x6f0] sm:$0xff]
    %v295 = vld [vmem:[#allocation6 + $0x6f8] sm:$0xff]
    %v296 = vld [vmem:[#allocation6 + $0x700] sm:$0xff]
    %v297 = vld [vmem:[#allocation6 + $0x708] sm:$0xff]
    %v298 = vld [vmem:[#allocation6 + $0x710] sm:$0xff]
    %v299 = vld [vmem:[#allocation6 + $0x718] sm:$0xff]
    %v300 = vld [vmem:[#allocation6 + $0x720] sm:$0xff]
    %v301 = vld [vmem:[#allocation6 + $0x728] sm:$0xff]
    %v302 = vld [vmem:[#allocation6 + $0x730] sm:$0xff]
    %v303 = vld [vmem:[#allocation6 + $0x738] sm:$0xff]
    %v304 = vld [vmem:[#allocation6 + $0x740] sm:$0xff]
    %v305 = vld [vmem:[#allocation6 + $0x748] sm:$0xff]
    %v306 = vld [vmem:[#allocation6 + $0x750] sm:$0xff]
    %v307 = vld [vmem:[#allocation6 + $0x758] sm:$0xff]
    %v308 = vld [vmem:[#allocation6 + $0x760] sm:$0xff]
    %v309 = vld [vmem:[#allocation6 + $0x768] sm:$0xff]
    %v310 = vld [vmem:[#allocation6 + $0x770] sm:$0xff]
    %v311 = vld [vmem:[#allocation6 + $0x778] sm:$0xff]
    %v312 = vld [vmem:[#allocation6 + $0x780] sm:$0xff]
    %v313 = vld [vmem:[#allocation6 + $0x788] sm:$0xff]
    %v314 = vld [vmem:[#allocation6 + $0x790] sm:$0xff]
    %v315 = vld [vmem:[#allocation6 + $0x798] sm:$0xff]
    %v316 = vld [vmem:[#allocation6 + $0x7a0] sm:$0xff]
    %v317 = vld [vmem:[#allocation6 + $0x7a8] sm:$0xff]
    %v318 = vld [vmem:[#allocation6 + $0x7b0] sm:$0xff]
    %v319 = vld [vmem:[#allocation6 + $0x7b8] sm:$0xff]
    %v320 = vld [vmem:[#allocation6 + $0x7c0] sm:$0xff]
    %v321 = vld [vmem:[#allocation6 + $0x7c8] sm:$0xff]
    %v322 = vld [vmem:[#allocation6 + $0x7d0] sm:$0xff]
    %v323 = vld [vmem:[#allocation6 + $0x7d8] sm:$0xff]
    %v324 = vld [vmem:[#allocation6 + $0x7e0] sm:$0xff]
    %v325 = vld [vmem:[#allocation6 + $0x7e8] sm:$0xff]
    %v326 = vld [vmem:[#allocation6 + $0x7f0] sm:$0xff]
    %v327 = vld [vmem:[#allocation6 + $0x7f8] sm:$0xff]
    %v328 = vld [vmem:[#allocation6 + $0x800] sm:$0xff]
    %v329 = vld [vmem:[#allocation6 + $0x808] sm:$0xff]
    %v330 = vld [vmem:[#allocation6 + $0x810] sm:$0xff]
    %v331 = vld [vmem:[#allocation6 + $0x818] sm:$0xff]
    %v332 = vld [vmem:[#allocation6 + $0x820] sm:$0xff]
    %v333 = vld [vmem:[#allocation6 + $0x828] sm:$0xff]
    %v334 = vld [vmem:[#allocation6 + $0x830] sm:$0xff]
    %v335 = vld [vmem:[#allocation6 + $0x838] sm:$0xff]
    %v336 = vld [vmem:[#allocation6 + $0x840] sm:$0xff]
    %v337 = vld [vmem:[#allocation6 + $0x848] sm:$0xff]
    %v338 = vld [vmem:[#allocation6 + $0x850] sm:$0xff]
    %v339 = vld [vmem:[#allocation6 + $0x858] sm:$0xff]
    %v340 = vld [vmem:[#allocation6 + $0x860] sm:$0xff]
    %v341 = vld [vmem:[#allocation6 + $0x868] sm:$0xff]
    %v342 = vld [vmem:[#allocation6 + $0x870] sm:$0xff]
    %v343 = vld [vmem:[#allocation6 + $0x878] sm:$0xff]
    %v344 = vld [vmem:[#allocation6 + $0x880] sm:$0xff]
    %v345 = vld [vmem:[#allocation6 + $0x888] sm:$0xff]
    %v346 = vld [vmem:[#allocation6 + $0x890] sm:$0xff]
    %v347 = vld [vmem:[#allocation6 + $0x898] sm:$0xff]
    %v348 = vld [vmem:[#allocation6 + $0x8a0] sm:$0xff]
    %v349 = vld [vmem:[#allocation6 + $0x8a8] sm:$0xff]
    %v350 = vld [vmem:[#allocation6 + $0x8b0] sm:$0xff]
    %v351 = vld [vmem:[#allocation6 + $0x8b8] sm:$0xff]
    %v352 = vld [vmem:[#allocation6 + $0x8c0] sm:$0xff]
    %v353 = vld [vmem:[#allocation6 + $0x8c8] sm:$0xff]
    %v354 = vld [vmem:[#allocation6 + $0x8d0] sm:$0xff]
    %v355 = vld [vmem:[#allocation6 + $0x8d8] sm:$0xff]
    %v356 = vld [vmem:[#allocation6 + $0x8e0] sm:$0xff]
    %v357 = vld [vmem:[#allocation6 + $0x8e8] sm:$0xff]
    %v358 = vld [vmem:[#allocation6 + $0x8f0] sm:$0xff]
    %v359 = vld [vmem:[#allocation6 + $0x8f8] sm:$0xff]
    %v360 = vld [vmem:[#allocation6 + $0x900] sm:$0xff]
    %v361 = vld [vmem:[#allocation6 + $0x908] sm:$0xff]
    %v362 = vld [vmem:[#allocation6 + $0x910] sm:$0xff]
    %v363 = vld [vmem:[#allocation6 + $0x918] sm:$0xff]
    %v364 = vld [vmem:[#allocation6 + $0x920] sm:$0xff]
    %v365 = vld [vmem:[#allocation6 + $0x928] sm:$0xff]
    %v366 = vld [vmem:[#allocation6 + $0x930] sm:$0xff]
    %v367 = vld [vmem:[#allocation6 + $0x938] sm:$0xff]
    %v368 = vld [vmem:[#allocation6 + $0x940] sm:$0xff]
    %v369 = vld [vmem:[#allocation6 + $0x948] sm:$0xff]
    %v370 = vld [vmem:[#allocation6 + $0x950] sm:$0xff]
    %v371 = vld [vmem:[#allocation6 + $0x958] sm:$0xff]
    %v372 = vld [vmem:[#allocation6 + $0x960] sm:$0xff]
    %v373 = vld [vmem:[#allocation6 + $0x968] sm:$0xff]
    %v374 = vld [vmem:[#allocation6 + $0x970] sm:$0xff]
    %v375 = vld [vmem:[#allocation6 + $0x978] sm:$0xff]
    %v376 = vld [vmem:[#allocation6 + $0x980] sm:$0xff]
    %v377 = vld [vmem:[#allocation6 + $0x988] sm:$0xff]
    %v378 = vld [vmem:[#allocation6 + $0x990] sm:$0xff]
    %v379 = vld [vmem:[#allocation6 + $0x998] sm:$0xff]
    %v380 = vld [vmem:[#allocation6 + $0x9a0] sm:$0xff]
    %v381 = vld [vmem:[#allocation6 + $0x9a8] sm:$0xff]
    %v382 = vld [vmem:[#allocation6 + $0x9b0] sm:$0xff]
    %v383 = vld [vmem:[#allocation6 + $0x9b8] sm:$0xff]
    %v384 = vld [vmem:[#allocation6 + $0x9c0] sm:$0xff]
    %v385 = vld [vmem:[#allocation6 + $0x9c8] sm:$0xff]
    %v386 = vld [vmem:[#allocation6 + $0x9d0] sm:$0xff]
    %v387 = vld [vmem:[#allocation6 + $0x9d8] sm:$0xff]
    %v388 = vld [vmem:[#allocation6 + $0x9e0] sm:$0xff]
    %v389 = vld [vmem:[#allocation6 + $0x9e8] sm:$0xff]
    %v390 = vld [vmem:[#allocation6 + $0x9f0] sm:$0xff]
    %v391 = vld [vmem:[#allocation6 + $0x9f8] sm:$0xff]
    %v392 = vld [vmem:[#allocation6 + $0xa00] sm:$0xff]
    %v393 = vld [vmem:[#allocation6 + $0xa08] sm:$0xff]
    %v394 = vld [vmem:[#allocation6 + $0xa10] sm:$0xff]
    %v395 = vld [vmem:[#allocation6 + $0xa18] sm:$0xff]
    %v396 = vld [vmem:[#allocation6 + $0xa20] sm:$0xff]
    %v397 = vld [vmem:[#allocation6 + $0xa28] sm:$0xff]
    %v398 = vld [vmem:[#allocation6 + $0xa30] sm:$0xff]
    %v399 = vld [vmem:[#allocation6 + $0xa38] sm:$0xff]
    %v400 = vld [vmem:[#allocation6 + $0xa40] sm:$0xff]
    %v401 = vld [vmem:[#allocation6 + $0xa48] sm:$0xff]
    %v402 = vld [vmem:[#allocation6 + $0xa50] sm:$0xff]
    %v403 = vld [vmem:[#allocation6 + $0xa58] sm:$0xff]
    %v404 = vld [vmem:[#allocation6 + $0xa60] sm:$0xff]
    %v405 = vld [vmem:[#allocation6 + $0xa68] sm:$0xff]
    %v406 = vld [vmem:[#allocation6 + $0xa70] sm:$0xff]
    %v407 = vld [vmem:[#allocation6 + $0xa78] sm:$0xff]
    %v408 = vld [vmem:[#allocation6 + $0xa80] sm:$0xff]
    %v409 = vld [vmem:[#allocation6 + $0xa88] sm:$0xff]
    %v410 = vld [vmem:[#allocation6 + $0xa90] sm:$0xff]
    %v411 = vld [vmem:[#allocation6 + $0xa98] sm:$0xff]
    %v412 = vld [vmem:[#allocation6 + $0xaa0] sm:$0xff]
    %v413 = vld [vmem:[#allocation6 + $0xaa8] sm:$0xff]
    %v414 = vld [vmem:[#allocation6 + $0xab0] sm:$0xff]
    %v415 = vld [vmem:[#allocation6 + $0xab8] sm:$0xff]
    %v416 = vld [vmem:[#allocation6 + $0xac0] sm:$0xff]
    %v417 = vld [vmem:[#allocation6 + $0xac8] sm:$0xff]
    %v418 = vld [vmem:[#allocation6 + $0xad0] sm:$0xff]
    %v419 = vld [vmem:[#allocation6 + $0xad8] sm:$0xff]
    %v420 = vld [vmem:[#allocation6 + $0xae0] sm:$0xff]
    %v421 = vld [vmem:[#allocation6 + $0xae8] sm:$0xff]
    %v422 = vld [vmem:[#allocation6 + $0xaf0] sm:$0xff]
    %v423 = vld [vmem:[#allocation6 + $0xaf8] sm:$0xff]
    %v424 = vld [vmem:[#allocation6 + $0xb00] sm:$0xff]
    %v425 = vld [vmem:[#allocation6 + $0xb08] sm:$0xff]
    %v426 = vld [vmem:[#allocation6 + $0xb10] sm:$0xff]
    %v427 = vld [vmem:[#allocation6 + $0xb18] sm:$0xff]
    %v428 = vld [vmem:[#allocation6 + $0xb20] sm:$0xff]
    %v429 = vld [vmem:[#allocation6 + $0xb28] sm:$0xff]
    %v430 = vld [vmem:[#allocation6 + $0xb30] sm:$0xff]
    %v431 = vld [vmem:[#allocation6 + $0xb38] sm:$0xff]
    %v432 = vld [vmem:[#allocation6 + $0xb40] sm:$0xff]
    %v433 = vld [vmem:[#allocation6 + $0xb48] sm:$0xff]
    %v434 = vld [vmem:[#allocation6 + $0xb50] sm:$0xff]
    %v435 = vld [vmem:[#allocation6 + $0xb58] sm:$0xff]
    %v436 = vld [vmem:[#allocation6 + $0xb60] sm:$0xff]
    %v437 = vld [vmem:[#allocation6 + $0xb68] sm:$0xff]
    %v438 = vld [vmem:[#allocation6 + $0xb70] sm:$0xff]
    %v439 = vld [vmem:[#allocation6 + $0xb78] sm:$0xff]
    %v440 = vld [vmem:[#allocation6 + $0xb80] sm:$0xff]
    %v441 = vld [vmem:[#allocation6 + $0xb88] sm:$0xff]
    %v442 = vld [vmem:[#allocation6 + $0xb90] sm:$0xff]
    %v443 = vld [vmem:[#allocation6 + $0xb98] sm:$0xff]
    %v444 = vld [vmem:[#allocation6 + $0xba0] sm:$0xff]
    %v445 = vld [vmem:[#allocation6 + $0xba8] sm:$0xff]
    %v446 = vld [vmem:[#allocation6 + $0xbb0] sm:$0xff]
    %v447 = vld [vmem:[#allocation6 + $0xbb8] sm:$0xff]
    %v448 = vld [vmem:[#allocation6 + $0xbc0] sm:$0xff]
    %v449 = vld [vmem:[#allocation6 + $0xbc8] sm:$0xff]
    %v450 = vld [vmem:[#allocation6 + $0xbd0] sm:$0xff]
    %v451 = vld [vmem:[#allocation6 + $0xbd8] sm:$0xff]
    %v452 = vld [vmem:[#allocation6 + $0xbe0] sm:$0xff]
    %v453 = vld [vmem:[#allocation6 + $0xbe8] sm:$0xff]
    %v454 = vld [vmem:[#allocation6 + $0xbf0] sm:$0xff]
    %v455 = vld [vmem:[#allocation6 + $0xbf8] sm:$0xff]
    %v456 = vld [vmem:[#allocation6 + $0xc00] sm:$0xff]
    %v457 = vld [vmem:[#allocation6 + $0xc08] sm:$0xff]
    %v458 = vld [vmem:[#allocation6 + $0xc10] sm:$0xff]
    %v459 = vld [vmem:[#allocation6 + $0xc18] sm:$0xff]
    %v460 = vld [vmem:[#allocation6 + $0xc20] sm:$0xff]
    %v461 = vld [vmem:[#allocation6 + $0xc28] sm:$0xff]
    %v462 = vld [vmem:[#allocation6 + $0xc30] sm:$0xff]
    %v463 = vld [vmem:[#allocation6 + $0xc38] sm:$0xff]
    %v464 = vld [vmem:[#allocation6 + $0xc40] sm:$0xff]
    %v465 = vld [vmem:[#allocation6 + $0xc48] sm:$0xff]
    %v466 = vld [vmem:[#allocation6 + $0xc50] sm:$0xff]
    %v467 = vld [vmem:[#allocation6 + $0xc58] sm:$0xff]
    %v468 = vld [vmem:[#allocation6 + $0xc60] sm:$0xff]
    %v469 = vld [vmem:[#allocation6 + $0xc68] sm:$0xff]
    %v470 = vld [vmem:[#allocation6 + $0xc70] sm:$0xff]
    %v471 = vld [vmem:[#allocation6 + $0xc78] sm:$0xff]
    %v472 = vld [vmem:[#allocation6 + $0xc80] sm:$0xff]
    %v473 = vld [vmem:[#allocation6 + $0xc88] sm:$0xff]
    %v474 = vld [vmem:[#allocation6 + $0xc90] sm:$0xff]
    %v475 = vld [vmem:[#allocation6 + $0xc98] sm:$0xff]
    %v476 = vld [vmem:[#allocation6 + $0xca0] sm:$0xff]
    %v477 = vld [vmem:[#allocation6 + $0xca8] sm:$0xff]
    %v478 = vld [vmem:[#allocation6 + $0xcb0] sm:$0xff]
    %v479 = vld [vmem:[#allocation6 + $0xcb8] sm:$0xff]
    %v480 = vld [vmem:[#allocation6 + $0xcc0] sm:$0xff]
    %v481 = vld [vmem:[#allocation6 + $0xcc8] sm:$0xff]
    %v482 = vld [vmem:[#allocation6 + $0xcd0] sm:$0xff]
    %v483 = vld [vmem:[#allocation6 + $0xcd8] sm:$0xff]
    %v484 = vld [vmem:[#allocation6 + $0xce0] sm:$0xff]
    %v485 = vld [vmem:[#allocation6 + $0xce8] sm:$0xff]
    %v486 = vld [vmem:[#allocation6 + $0xcf0] sm:$0xff]
    %v487 = vld [vmem:[#allocation6 + $0xcf8] sm:$0xff]
    %v488 = vld [vmem:[#allocation6 + $0xd00] sm:$0xff]
    %v489 = vld [vmem:[#allocation6 + $0xd08] sm:$0xff]
    %v490 = vld [vmem:[#allocation6 + $0xd10] sm:$0xff]
    %v491 = vld [vmem:[#allocation6 + $0xd18] sm:$0xff]
    %v492 = vld [vmem:[#allocation6 + $0xd20] sm:$0xff]
    %v493 = vld [vmem:[#allocation6 + $0xd28] sm:$0xff]
    %v494 = vld [vmem:[#allocation6 + $0xd30] sm:$0xff]
    %v495 = vld [vmem:[#allocation6 + $0xd38] sm:$0xff]
    %v496 = vld [vmem:[#allocation6 + $0xd40] sm:$0xff]
    %v497 = vld [vmem:[#allocation6 + $0xd48] sm:$0xff]
    %v498 = vld [vmem:[#allocation6 + $0xd50] sm:$0xff]
    %v499 = vld [vmem:[#allocation6 + $0xd58] sm:$0xff]
    %v500 = vld [vmem:[#allocation6 + $0xd60] sm:$0xff]
    %v501 = vld [vmem:[#allocation6 + $0xd68] sm:$0xff]
    %v502 = vld [vmem:[#allocation6 + $0xd70] sm:$0xff]
    %v503 = vld [vmem:[#allocation6 + $0xd78] sm:$0xff]
    %v504 = vld [vmem:[#allocation6 + $0xd80] sm:$0xff]
    %v505 = vld [vmem:[#allocation6 + $0xd88] sm:$0xff]
    %v506 = vld [vmem:[#allocation6 + $0xd90] sm:$0xff]
    %v507 = vld [vmem:[#allocation6 + $0xd98] sm:$0xff]
    %v508 = vld [vmem:[#allocation6 + $0xda0] sm:$0xff]
    %v509 = vld [vmem:[#allocation6 + $0xda8] sm:$0xff]
    %v510 = vld [vmem:[#allocation6 + $0xdb0] sm:$0xff]
    %v511 = vld [vmem:[#allocation6 + $0xdb8] sm:$0xff]
    %v512 = vld [vmem:[#allocation6 + $0xdc0] sm:$0xff]
    %v513 = vld [vmem:[#allocation6 + $0xdc8] sm:$0xff]
    %v514 = vld [vmem:[#allocation6 + $0xdd0] sm:$0xff]
    %v515 = vld [vmem:[#allocation6 + $0xdd8] sm:$0xff]
    %v516 = vld [vmem:[#allocation6 + $0xde0] sm:$0xff]
    %v517 = vld [vmem:[#allocation6 + $0xde8] sm:$0xff]
    %v518 = vld [vmem:[#allocation6 + $0xdf0] sm:$0xff]
    %v519 = vld [vmem:[#allocation6 + $0xdf8] sm:$0xff]
    %v520 = vld [vmem:[#allocation6 + $0xe00] sm:$0xff]
    %v521 = vld [vmem:[#allocation6 + $0xe08] sm:$0xff]
    %v522 = vld [vmem:[#allocation6 + $0xe10] sm:$0xff]
    %v523 = vld [vmem:[#allocation6 + $0xe18] sm:$0xff]
    %v524 = vld [vmem:[#allocation6 + $0xe20] sm:$0xff]
    %v525 = vld [vmem:[#allocation6 + $0xe28] sm:$0xff]
    %v526 = vld [vmem:[#allocation6 + $0xe30] sm:$0xff]
    %v527 = vld [vmem:[#allocation6 + $0xe38] sm:$0xff]
    %v528 = vld [vmem:[#allocation6 + $0xe40] sm:$0xff]
    %v529 = vld [vmem:[#allocation6 + $0xe48] sm:$0xff]
    %v530 = vld [vmem:[#allocation6 + $0xe50] sm:$0xff]
    %v531 = vld [vmem:[#allocation6 + $0xe58] sm:$0xff]
    %v532 = vld [vmem:[#allocation6 + $0xe60] sm:$0xff]
    %v533 = vld [vmem:[#allocation6 + $0xe68] sm:$0xff]
    %v534 = vld [vmem:[#allocation6 + $0xe70] sm:$0xff]
    %v535 = vld [vmem:[#allocation6 + $0xe78] sm:$0xff]
    %v536 = vld [vmem:[#allocation6 + $0xe80] sm:$0xff]
    %v537 = vld [vmem:[#allocation6 + $0xe88] sm:$0xff]
    %v538 = vld [vmem:[#allocation6 + $0xe90] sm:$0xff]
    %v539 = vld [vmem:[#allocation6 + $0xe98] sm:$0xff]
    %v540 = vld [vmem:[#allocation6 + $0xea0] sm:$0xff]
    %v541 = vld [vmem:[#allocation6 + $0xea8] sm:$0xff]
    %v542 = vld [vmem:[#allocation6 + $0xeb0] sm:$0xff]
    %v543 = vld [vmem:[#allocation6 + $0xeb8] sm:$0xff]
    %v544 = vld [vmem:[#allocation6 + $0xec0] sm:$0xff]
    %v545 = vld [vmem:[#allocation6 + $0xec8] sm:$0xff]
    %v546 = vld [vmem:[#allocation6 + $0xed0] sm:$0xff]
    %v547 = vld [vmem:[#allocation6 + $0xed8] sm:$0xff]
    %v548 = vld [vmem:[#allocation6 + $0xee0] sm:$0xff]
    %v549 = vld [vmem:[#allocation6 + $0xee8] sm:$0xff]
    %v550 = vld [vmem:[#allocation6 + $0xef0] sm:$0xff]
    %v551 = vld [vmem:[#allocation6 + $0xef8] sm:$0xff]
    %v552 = vld [vmem:[#allocation6 + $0xf00] sm:$0xff]
    %v553 = vld [vmem:[#allocation6 + $0xf08] sm:$0xff]
    %v554 = vld [vmem:[#allocation6 + $0xf10] sm:$0xff]
    %v555 = vld [vmem:[#allocation6 + $0xf18] sm:$0xff]
    %v556 = vld [vmem:[#allocation6 + $0xf20] sm:$0xff]
    %v557 = vld [vmem:[#allocation6 + $0xf28] sm:$0xff]
    %v558 = vld [vmem:[#allocation6 + $0xf30] sm:$0xff]
    %v559 = vld [vmem:[#allocation6 + $0xf38] sm:$0xff]
    %v560 = vld [vmem:[#allocation6 + $0xf40] sm:$0xff]
    %v561 = vld [vmem:[#allocation6 + $0xf48] sm:$0xff]
    %v562 = vld [vmem:[#allocation6 + $0xf50] sm:$0xff]
    %v563 = vld [vmem:[#allocation6 + $0xf58] sm:$0xff]
    %v564 = vld [vmem:[#allocation6 + $0xf60] sm:$0xff]
    %v565 = vld [vmem:[#allocation6 + $0xf68] sm:$0xff]
    %v566 = vld [vmem:[#allocation6 + $0xf70] sm:$0xff]
    %v567 = vld [vmem:[#allocation6 + $0xf78] sm:$0xff]
    %v568 = vld [vmem:[#allocation6 + $0xf80] sm:$0xff]
    %v569 = vld [vmem:[#allocation6 + $0xf88] sm:$0xff]
    %v570 = vld [vmem:[#allocation6 + $0xf90] sm:$0xff]
    %v571 = vld [vmem:[#allocation6 + $0xf98] sm:$0xff]
    %v572 = vld [vmem:[#allocation6 + $0xfa0] sm:$0xff]
    %v573 = vld [vmem:[#allocation6 + $0xfa8] sm:$0xff]
    %v574 = vld [vmem:[#allocation6 + $0xfb0] sm:$0xff]
    %v575 = vld [vmem:[#allocation6 + $0xfb8] sm:$0xff]
    %v576 = vld [vmem:[#allocation6 + $0xfc0] sm:$0xff]
    %v577 = vld [vmem:[#allocation6 + $0xfc8] sm:$0xff]
    %v578 = vld [vmem:[#allocation6 + $0xfd0] sm:$0xff]
    %v579 = vld [vmem:[#allocation6 + $0xfd8] sm:$0xff]
    %v580 = vld [vmem:[#allocation6 + $0xfe0] sm:$0xff]
    %v581 = vld [vmem:[#allocation6 + $0xfe8] sm:$0xff]
    %v582 = vld [vmem:[#allocation6 + $0xff0] sm:$0xff]
    %v583 = vld [vmem:[#allocation6 + $0xff8] sm:$0xff]
    %v584 = vld [vmem:[#allocation6 + $0x1000] sm:$0xff]
    %v585 = vld [vmem:[#allocation6 + $0x1008] sm:$0xff]
    %v586 = vld [vmem:[#allocation6 + $0x1010] sm:$0xff]
    %v587 = vld [vmem:[#allocation6 + $0x1018] sm:$0xff]
    %v588 = vld [vmem:[#allocation6 + $0x1020] sm:$0xff]
    %v589 = vld [vmem:[#allocation6 + $0x1028] sm:$0xff]
    %v590 = vld [vmem:[#allocation6 + $0x1030] sm:$0xff]
    %v591 = vld [vmem:[#allocation6 + $0x1038] sm:$0xff]
    %v592 = vld [vmem:[#allocation6 + $0x1040] sm:$0xff]
    %v593 = vld [vmem:[#allocation6 + $0x1048] sm:$0xff]
    %v594 = vld [vmem:[#allocation6 + $0x1050] sm:$0xff]
    %v595 = vld [vmem:[#allocation6 + $0x1058] sm:$0xff]
    %v596 = vld [vmem:[#allocation6 + $0x1060] sm:$0xff]
    %v597 = vld [vmem:[#allocation6 + $0x1068] sm:$0xff]
    %v598 = vld [vmem:[#allocation6 + $0x1070] sm:$0xff]
    %v599 = vld [vmem:[#allocation6 + $0x1078] sm:$0xff]
    %v600 = vld [vmem:[#allocation6 + $0x1080] sm:$0xff]
    %v601 = vld [vmem:[#allocation6 + $0x1088] sm:$0xff]
    %v602 = vld [vmem:[#allocation6 + $0x1090] sm:$0xff]
    %v603 = vld [vmem:[#allocation6 + $0x1098] sm:$0xff]
    %v604 = vld [vmem:[#allocation6 + $0x10a0] sm:$0xff]
    %v605 = vld [vmem:[#allocation6 + $0x10a8] sm:$0xff]
    %v606 = vld [vmem:[#allocation6 + $0x10b0] sm:$0xff]
    %v607 = vld [vmem:[#allocation6 + $0x10b8] sm:$0xff]
    %v608 = vld [vmem:[#allocation6 + $0x10c0] sm:$0xff]
    %v609 = vld [vmem:[#allocation6 + $0x10c8] sm:$0xff]
    %v610 = vld [vmem:[#allocation6 + $0x10d0] sm:$0xff]
    %v611 = vld [vmem:[#allocation6 + $0x10d8] sm:$0xff]
    %v612 = vld [vmem:[#allocation6 + $0x10e0] sm:$0xff]
    %v613 = vld [vmem:[#allocation6 + $0x10e8] sm:$0xff]
    %v614 = vld [vmem:[#allocation6 + $0x10f0] sm:$0xff]
    %v615 = vld [vmem:[#allocation6 + $0x10f8] sm:$0xff]
    %v616 = vld [vmem:[#allocation6 + $0x1100] sm:$0xff]
    %v617 = vld [vmem:[#allocation6 + $0x1108] sm:$0xff]
    %v618 = vld [vmem:[#allocation6 + $0x1110] sm:$0xff]
    %v619 = vld [vmem:[#allocation6 + $0x1118] sm:$0xff]
    %v620 = vld [vmem:[#allocation6 + $0x1120] sm:$0xff]
    %v621 = vld [vmem:[#allocation6 + $0x1128] sm:$0xff]
    %v622 = vld [vmem:[#allocation6 + $0x1130] sm:$0xff]
    %v623 = vld [vmem:[#allocation6 + $0x1138] sm:$0xff]
    %v624 = vld [vmem:[#allocation6 + $0x1140] sm:$0xff]
    %v625 = vld [vmem:[#allocation6 + $0x1148] sm:$0xff]
    %v626 = vld [vmem:[#allocation6 + $0x1150] sm:$0xff]
    %v627 = vld [vmem:[#allocation6 + $0x1158] sm:$0xff]
    %v628 = vld [vmem:[#allocation6 + $0x1160] sm:$0xff]
    %v629 = vld [vmem:[#allocation6 + $0x1168] sm:$0xff]
    %v630 = vld [vmem:[#allocation6 + $0x1170] sm:$0xff]
    %v631 = vld [vmem:[#allocation6 + $0x1178] sm:$0xff]
    %v632 = vld [vmem:[#allocation6 + $0x1180] sm:$0xff]
    %v633 = vld [vmem:[#allocation6 + $0x1188] sm:$0xff]
    %v634 = vld [vmem:[#allocation6 + $0x1190] sm:$0xff]
    %v635 = vld [vmem:[#allocation6 + $0x1198] sm:$0xff]
    %v636 = vld [vmem:[#allocation6 + $0x11a0] sm:$0xff]
    %v637 = vld [vmem:[#allocation6 + $0x11a8] sm:$0xff]
    %v638 = vld [vmem:[#allocation6 + $0x11b0] sm:$0xff]
    %v639 = vld [vmem:[#allocation6 + $0x11b8] sm:$0xff]
    %v640 = vld [vmem:[#allocation6 + $0x11c0] sm:$0xff]
    %v641 = vld [vmem:[#allocation6 + $0x11c8] sm:$0xff]
    %v642 = vld [vmem:[#allocation6 + $0x11d0] sm:$0xff]
    %v643 = vld [vmem:[#allocation6 + $0x11d8] sm:$0xff]
    %v644 = vld [vmem:[#allocation6 + $0x11e0] sm:$0xff]
    %v645 = vld [vmem:[#allocation6 + $0x11e8] sm:$0xff]
    %v646 = vld [vmem:[#allocation6 + $0x11f0] sm:$0xff]
    %v647 = vld [vmem:[#allocation6 + $0x11f8] sm:$0xff]
    %v648 = vld [vmem:[#allocation6 + $0x1200] sm:$0xff]
    %v649 = vld [vmem:[#allocation6 + $0x1208] sm:$0xff]
    %v650 = vld [vmem:[#allocation6 + $0x1210] sm:$0xff]
    %v651 = vld [vmem:[#allocation6 + $0x1218] sm:$0xff]
    %v652 = vld [vmem:[#allocation6 + $0x1220] sm:$0xff]
    %v653 = vld [vmem:[#allocation6 + $0x1228] sm:$0xff]
    %v654 = vld [vmem:[#allocation6 + $0x1230] sm:$0xff]
    %v655 = vld [vmem:[#allocation6 + $0x1238] sm:$0xff]
    %v656 = vld [vmem:[#allocation6 + $0x1240] sm:$0xff]
    %v657 = vld [vmem:[#allocation6 + $0x1248] sm:$0xff]
    %v658 = vld [vmem:[#allocation6 + $0x1250] sm:$0xff]
    %v659 = vld [vmem:[#allocation6 + $0x1258] sm:$0xff]
    %v660 = vld [vmem:[#allocation6 + $0x1260] sm:$0xff]
    %v661 = vld [vmem:[#allocation6 + $0x1268] sm:$0xff]
    %v662 = vld [vmem:[#allocation6 + $0x1270] sm:$0xff]
    %v663 = vld [vmem:[#allocation6 + $0x1278] sm:$0xff]
    %v664 = vld [vmem:[#allocation6 + $0x1280] sm:$0xff]
    %v665 = vld [vmem:[#allocation6 + $0x1288] sm:$0xff]
    %v666 = vld [vmem:[#allocation6 + $0x1290] sm:$0xff]
    %v667 = vld [vmem:[#allocation6 + $0x1298] sm:$0xff]
    %v668 = vld [vmem:[#allocation6 + $0x12a0] sm:$0xff]
    %v669 = vld [vmem:[#allocation6 + $0x12a8] sm:$0xff]
    %v670 = vld [vmem:[#allocation6 + $0x12b0] sm:$0xff]
    %v671 = vld [vmem:[#allocation6 + $0x12b8] sm:$0xff]
    %v672 = vld [vmem:[#allocation6 + $0x12c0] sm:$0xff]
    %v673 = vld [vmem:[#allocation6 + $0x12c8] sm:$0xff]
    %v674 = vld [vmem:[#allocation6 + $0x12d0] sm:$0xff]
    %v675 = vld [vmem:[#allocation6 + $0x12d8] sm:$0xff]
    %v676 = vld [vmem:[#allocation6 + $0x12e0] sm:$0xff]
    %v677 = vld [vmem:[#allocation6 + $0x12e8] sm:$0xff]
    %v678 = vld [vmem:[#allocation6 + $0x12f0] sm:$0xff]
    %v679 = vld [vmem:[#allocation6 + $0x12f8] sm:$0xff]
    %v680 = vld [vmem:[#allocation6 + $0x1300] sm:$0xff]
    %v681 = vld [vmem:[#allocation6 + $0x1308] sm:$0xff]
    %v682 = vld [vmem:[#allocation6 + $0x1310] sm:$0xff]
    %v683 = vld [vmem:[#allocation6 + $0x1318] sm:$0xff]
    %v684 = vld [vmem:[#allocation6 + $0x1320] sm:$0xff]
    %v685 = vld [vmem:[#allocation6 + $0x1328] sm:$0xff]
    %v686 = vld [vmem:[#allocation6 + $0x1330] sm:$0xff]
    %v687 = vld [vmem:[#allocation6 + $0x1338] sm:$0xff]
    %v688 = vld [vmem:[#allocation6 + $0x1340] sm:$0xff]
    %v689 = vld [vmem:[#allocation6 + $0x1348] sm:$0xff]
    %v690 = vld [vmem:[#allocation6 + $0x1350] sm:$0xff]
    %v691 = vld [vmem:[#allocation6 + $0x1358] sm:$0xff]
    %v692 = vld [vmem:[#allocation6 + $0x1360] sm:$0xff]
    %v693 = vld [vmem:[#allocation6 + $0x1368] sm:$0xff]
    %v694 = vld [vmem:[#allocation6 + $0x1370] sm:$0xff]
    %v695 = vld [vmem:[#allocation6 + $0x1378] sm:$0xff]
    %v696 = vld [vmem:[#allocation6 + $0x1380] sm:$0xff]
    %v697 = vld [vmem:[#allocation6 + $0x1388] sm:$0xff]
    %v698 = vld [vmem:[#allocation6 + $0x1390] sm:$0xff]
    %v699 = vld [vmem:[#allocation6 + $0x1398] sm:$0xff]
    %v700 = vld [vmem:[#allocation6 + $0x13a0] sm:$0xff]
    %v701 = vld [vmem:[#allocation6 + $0x13a8] sm:$0xff]
    %v702 = vld [vmem:[#allocation6 + $0x13b0] sm:$0xff]
    %v703 = vld [vmem:[#allocation6 + $0x13b8] sm:$0xff]
    %v704 = vld [vmem:[#allocation6 + $0x13c0] sm:$0xff]
    %v705 = vld [vmem:[#allocation6 + $0x13c8] sm:$0xff]
    %v706 = vld [vmem:[#allocation6 + $0x13d0] sm:$0xff]
    %v707 = vld [vmem:[#allocation6 + $0x13d8] sm:$0xff]
    %v708 = vld [vmem:[#allocation6 + $0x13e0] sm:$0xff]
    %v709 = vld [vmem:[#allocation6 + $0x13e8] sm:$0xff]
    %v710 = vld [vmem:[#allocation6 + $0x13f0] sm:$0xff]
    %v711 = vld [vmem:[#allocation6 + $0x13f8] sm:$0xff]
    %v712 = vld [vmem:[#allocation6 + $0x1400] sm:$0xff]
    %v713 = vld [vmem:[#allocation6 + $0x1408] sm:$0xff]
    %v714 = vld [vmem:[#allocation6 + $0x1410] sm:$0xff]
    %v715 = vld [vmem:[#allocation6 + $0x1418] sm:$0xff]
    %v716 = vld [vmem:[#allocation6 + $0x1420] sm:$0xff]
    %v717 = vld [vmem:[#allocation6 + $0x1428] sm:$0xff]
    %v718 = vld [vmem:[#allocation6 + $0x1430] sm:$0xff]
    %v719 = vld [vmem:[#allocation6 + $0x1438] sm:$0xff]
    %v720 = vld [vmem:[#allocation6 + $0x1440] sm:$0xff]
    %v721 = vld [vmem:[#allocation6 + $0x1448] sm:$0xff]
    %v722 = vld [vmem:[#allocation6 + $0x1450] sm:$0xff]
    %v723 = vld [vmem:[#allocation6 + $0x1458] sm:$0xff]
    %v724 = vld [vmem:[#allocation6 + $0x1460] sm:$0xff]
    %v725 = vld [vmem:[#allocation6 + $0x1468] sm:$0xff]
    %v726 = vld [vmem:[#allocation6 + $0x1470] sm:$0xff]
    %v727 = vld [vmem:[#allocation6 + $0x1478] sm:$0xff]
    %v728 = vld [vmem:[#allocation6 + $0x1480] sm:$0xff]
    %v729 = vld [vmem:[#allocation6 + $0x1488] sm:$0xff]
    %v730 = vld [vmem:[#allocation6 + $0x1490] sm:$0xff]
    %v731 = vld [vmem:[#allocation6 + $0x1498] sm:$0xff]
    %v732 = vld [vmem:[#allocation6 + $0x14a0] sm:$0xff]
    %v733 = vld [vmem:[#allocation6 + $0x14a8] sm:$0xff]
    %v734 = vld [vmem:[#allocation6 + $0x14b0] sm:$0xff]
    %v735 = vld [vmem:[#allocation6 + $0x14b8] sm:$0xff]
    %v736 = vld [vmem:[#allocation6 + $0x14c0] sm:$0xff]
    %v737 = vld [vmem:[#allocation6 + $0x14c8] sm:$0xff]
    %v738 = vld [vmem:[#allocation6 + $0x14d0] sm:$0xf]
    %v739 = vld [vmem:[#allocation6 + $0x14d8] sm:$0xf]
    %v740 = vld [vmem:[#allocation6 + $0x14e0] sm:$0xf]
    %v741 = vld [vmem:[#allocation6 + $0x14e8] sm:$0xf]
    %v742 = vld [vmem:[#allocation6 + $0x14f0] sm:$0xf]
    %v743 = vld [vmem:[#allocation6 + $0x14f8] sm:$0xf]
    %v744 = vld [vmem:[#allocation6 + $0x1500] sm:$0xf]
    %v745 = vld [vmem:[#allocation6 + $0x1508] sm:$0xf]
    %v746 = vld [vmem:[#allocation6 + $0x1510] sm:$0xf]
    %v747 = vld [vmem:[#allocation6 + $0x1518] sm:$0xf]
    %v748 = vld [vmem:[#allocation6 + $0x1520] sm:$0xf]
    %v749 = vld [vmem:[#allocation6 + $0x1528] sm:$0xf]
    %v750 = vld [vmem:[#allocation6 + $0x1530] sm:$0xf]
    %v751 = vld [vmem:[#allocation6 + $0x1538] sm:$0xf]
    %v752 = vld [vmem:[#allocation6 + $0x1540] sm:$0xf]
    %v753 = vld [vmem:[#allocation6 + $0x1548] sm:$0xf]
    %v754 = vld [vmem:[#allocation6 + $0x1550] sm:$0xf]
    %v755 = vld [vmem:[#allocation6 + $0x1558] sm:$0xf]
    %v756 = vld [vmem:[#allocation8] sm:$0xff]
    %v757 = vld [vmem:[#allocation8 + $0x8] sm:$0xff]
    %v758 = vld [vmem:[#allocation8 + $0x10] sm:$0x3]
    %v762 = vperm.slane %v756, 0
    %v763 = vperm.slane %v756, 1
    %v764 = vperm.slane %v756, 2
    %v765 = vperm.slane %v756, 3
    %v766 = vperm.slane %v756, 4
    %v767 = vperm.slane %v756, 5
    %v768 = vperm.slane %v756, 6
    %v769 = vperm.slane %v756, 7
    %v770 = vperm.slane %v757, 0
    %v771 = vperm.slane %v757, 1
    %v772 = vperm.slane %v757, 2
    %v773 = vperm.slane %v757, 3
    %v774 = vperm.slane %v757, 4
    %v775 = vperm.slane %v757, 5
    %v776 = vperm.slane %v757, 6
    %v777 = vperm.slane %v757, 7
    %v778 = vperm.slane %v758, 0
    %v779 = vperm.slane %v758, 1
    %vm798 = vcmask 359424
    %v800 = vsel %vm798, %v71, 0
    %vm802 = vcmask 1043456
    %v804 = vsel %vm802, %v738, 0
    %v807 = vsel %vm802, %v739, 0
    %v810 = vsel %vm802, %v740, 0
    %v813 = vsel %vm802, %v741, 0
    %v816 = vsel %vm802, %v742, 0
    %v819 = vsel %vm802, %v743, 0
    %v822 = vsel %vm802, %v744, 0
    %v825 = vsel %vm802, %v745, 0
    %v828 = vsel %vm802, %v746, 0
    %v831 = vsel %vm802, %v747, 0
    %v834 = vsel %vm802, %v748, 0
    %v837 = vsel %vm802, %v749, 0
    %v840 = vsel %vm802, %v750, 0
    %v843 = vsel %vm802, %v751, 0
    %v846 = vsel %vm802, %v752, 0
    %v849 = vsel %vm802, %v753, 0
    %v852 = vsel %vm802, %v754, 0
    %v855 = vsel %vm802, %v755, 0
    %857 = vmatpush.msra.mxu0 %v342
    %858 = vmatpush.msra.mxu0 %v324
    %859 = vmatpush.msra.mxu0 %v306
    %860 = vmatpush.msra.mxu0 %v288
    %861 = vmatpush.msra.mxu0 %v270
    %862 = vmatpush.msra.mxu0 %v252
    %863 = vmatpush.msra.mxu0 %v234
    %864 = vmatpush.msra.mxu0 %v216
    %865 = vmatpush.msra.mxu0 %v198
    %866 = vmatpush.msra.mxu0 %v180
    %867 = vmatpush.msra.mxu0 %v162
    %868 = vmatpush.msra.mxu0 %v144
    %869 = vmatpush.msra.mxu0 %v126
    %870 = vmatpush.msra.mxu0 %v108
    %871 = vmatpush.msra.mxu0 %v90
    %872 = vmatpush.msra.mxu0 %v72
    %873 = vmatmul.f32.gmra.mxu0 %v69
    %v874 = vpop.f32.mrf.mxu0
    %v875 = vadd.f32 %v762, %v874
    %876 = vdwg.mxu0
    %877 = vmatpush.msra.mxu0 %v630
    %878 = vmatpush.msra.mxu0 %v612
    %879 = vmatpush.msra.mxu0 %v594
    %880 = vmatpush.msra.mxu0 %v576
    %881 = vmatpush.msra.mxu0 %v558
    %882 = vmatpush.msra.mxu0 %v540
    %883 = vmatpush.msra.mxu0 %v522
    %884 = vmatpush.msra.mxu0 %v504
    %885 = vmatpush.msra.mxu0 %v486
    %886 = vmatpush.msra.mxu0 %v468
    %887 = vmatpush.msra.mxu0 %v450
    %888 = vmatpush.msra.mxu0 %v432
    %889 = vmatpush.msra.mxu0 %v414
    %890 = vmatpush.msra.mxu0 %v396
    %891 = vmatpush.msra.mxu0 %v378
    %892 = vmatpush.msra.mxu0 %v360
    %893 = vmatmul.f32.gmra.mxu0 %v70
    %v894 = vpop.f32.mrf.mxu0
    %v895 = vadd.f32 %v875, %v894
    %896 = vdwg.mxu0
    %897 = vmatpush.msra.mxu0 0.0
    %898 = vmatpush.msra.mxu0 0.0
    %899 = vmatpush.msra.mxu0 0.0
    %900 = vmatpush.msra.mxu0 0.0
    %901 = vmatpush.msra.mxu0 0.0
    %902 = vmatpush.msra.mxu0 0.0
    %903 = vmatpush.msra.mxu0 0.0
    %904 = vmatpush.msra.mxu0 0.0
    %905 = vmatpush.msra.mxu0 0.0
    %906 = vmatpush.msra.mxu0 0.0
    %907 = vmatpush.msra.mxu0 %v804
    %908 = vmatpush.msra.mxu0 %v720
    %909 = vmatpush.msra.mxu0 %v702
    %910 = vmatpush.msra.mxu0 %v684
    %911 = vmatpush.msra.mxu0 %v666
    %912 = vmatpush.msra.mxu0 %v648
    %913 = vmatmul.f32.gmra.mxu0 %v800
    %v914 = vpop.f32.mrf.mxu0
    %v915 = vadd.f32 %v895, %v914
    %916 = vdwg.mxu0
    %917 = vmatpush.msra.mxu0 %v343
    %918 = vmatpush.msra.mxu0 %v325
    %919 = vmatpush.msra.mxu0 %v307
    %920 = vmatpush.msra.mxu0 %v289
    %921 = vmatpush.msra.mxu0 %v271
    %922 = vmatpush.msra.mxu0 %v253
    %923 = vmatpush.msra.mxu0 %v235
    %924 = vmatpush.msra.mxu0 %v217
    %925 = vmatpush.msra.mxu0 %v199
    %926 = vmatpush.msra.mxu0 %v181
    %927 = vmatpush.msra.mxu0 %v163
    %928 = vmatpush.msra.mxu0 %v145
    %929 = vmatpush.msra.mxu0 %v127
    %930 = vmatpush.msra.mxu0 %v109
    %931 = vmatpush.msra.mxu0 %v91
    %932 = vmatpush.msra.mxu0 %v73
    %933 = vmatmul.f32.gmra.mxu0 %v69
    %v934 = vpop.f32.mrf.mxu0
    %v935 = vadd.f32 %v763, %v934
    %936 = vdwg.mxu0
    %937 = vmatpush.msra.mxu0 %v631
    %938 = vmatpush.msra.mxu0 %v613
    %939 = vmatpush.msra.mxu0 %v595
    %940 = vmatpush.msra.mxu0 %v577
    %941 = vmatpush.msra.mxu0 %v559
    %942 = vmatpush.msra.mxu0 %v541
    %943 = vmatpush.msra.mxu0 %v523
    %944 = vmatpush.msra.mxu0 %v505
    %945 = vmatpush.msra.mxu0 %v487
    %946 = vmatpush.msra.mxu0 %v469
    %947 = vmatpush.msra.mxu0 %v451
    %948 = vmatpush.msra.mxu0 %v433
    %949 = vmatpush.msra.mxu0 %v415
    %950 = vmatpush.msra.mxu0 %v397
    %951 = vmatpush.msra.mxu0 %v379
    %952 = vmatpush.msra.mxu0 %v361
    %953 = vmatmul.f32.gmra.mxu0 %v70
    %v954 = vpop.f32.mrf.mxu0
    %v955 = vadd.f32 %v935, %v954
    %956 = vdwg.mxu0
    %957 = vmatpush.msra.mxu0 0.0
    %958 = vmatpush.msra.mxu0 0.0
    %959 = vmatpush.msra.mxu0 0.0
    %960 = vmatpush.msra.mxu0 0.0
    %961 = vmatpush.msra.mxu0 0.0
    %962 = vmatpush.msra.mxu0 0.0
    %963 = vmatpush.msra.mxu0 0.0
    %964 = vmatpush.msra.mxu0 0.0
    %965 = vmatpush.msra.mxu0 0.0
    %966 = vmatpush.msra.mxu0 0.0
    %967 = vmatpush.msra.mxu0 %v807
    %968 = vmatpush.msra.mxu0 %v721
    %969 = vmatpush.msra.mxu0 %v703
    %970 = vmatpush.msra.mxu0 %v685
    %971 = vmatpush.msra.mxu0 %v667
    %972 = vmatpush.msra.mxu0 %v649
    %973 = vmatmul.f32.gmra.mxu0 %v800
    %v974 = vpop.f32.mrf.mxu0
    %v975 = vadd.f32 %v955, %v974
    %976 = vdwg.mxu0
    %977 = vmatpush.msra.mxu0 %v344
    %978 = vmatpush.msra.mxu0 %v326
    %979 = vmatpush.msra.mxu0 %v308
    %980 = vmatpush.msra.mxu0 %v290
    %981 = vmatpush.msra.mxu0 %v272
    %982 = vmatpush.msra.mxu0 %v254
    %983 = vmatpush.msra.mxu0 %v236
    %984 = vmatpush.msra.mxu0 %v218
    %985 = vmatpush.msra.mxu0 %v200
    %986 = vmatpush.msra.mxu0 %v182
    %987 = vmatpush.msra.mxu0 %v164
    %988 = vmatpush.msra.mxu0 %v146
    %989 = vmatpush.msra.mxu0 %v128
    %990 = vmatpush.msra.mxu0 %v110
    %991 = vmatpush.msra.mxu0 %v92
    %992 = vmatpush.msra.mxu0 %v74
    %993 = vmatmul.f32.gmra.mxu0 %v69
    %v994 = vpop.f32.mrf.mxu0
    %v995 = vadd.f32 %v764, %v994
    %996 = vdwg.mxu0
    %997 = vmatpush.msra.mxu0 %v632
    %998 = vmatpush.msra.mxu0 %v614
    %999 = vmatpush.msra.mxu0 %v596
    %1000 = vmatpush.msra.mxu0 %v578
    %1001 = vmatpush.msra.mxu0 %v560
    %1002 = vmatpush.msra.mxu0 %v542
    %1003 = vmatpush.msra.mxu0 %v524
    %1004 = vmatpush.msra.mxu0 %v506
    %1005 = vmatpush.msra.mxu0 %v488
    %1006 = vmatpush.msra.mxu0 %v470
    %1007 = vmatpush.msra.mxu0 %v452
    %1008 = vmatpush.msra.mxu0 %v434
    %1009 = vmatpush.msra.mxu0 %v416
    %1010 = vmatpush.msra.mxu0 %v398
    %1011 = vmatpush.msra.mxu0 %v380
    %1012 = vmatpush.msra.mxu0 %v362
    %1013 = vmatmul.f32.gmra.mxu0 %v70
    %v1014 = vpop.f32.mrf.mxu0
    %v1015 = vadd.f32 %v995, %v1014
    %1016 = vdwg.mxu0
    %1017 = vmatpush.msra.mxu0 0.0
    %1018 = vmatpush.msra.mxu0 0.0
    %1019 = vmatpush.msra.mxu0 0.0
    %1020 = vmatpush.msra.mxu0 0.0
    %1021 = vmatpush.msra.mxu0 0.0
    %1022 = vmatpush.msra.mxu0 0.0
    %1023 = vmatpush.msra.mxu0 0.0
    %1024 = vmatpush.msra.mxu0 0.0
    %1025 = vmatpush.msra.mxu0 0.0
    %1026 = vmatpush.msra.mxu0 0.0
    %1027 = vmatpush.msra.mxu0 %v810
    %1028 = vmatpush.msra.mxu0 %v722
    %1029 = vmatpush.msra.mxu0 %v704
    %1030 = vmatpush.msra.mxu0 %v686
    %1031 = vmatpush.msra.mxu0 %v668
    %1032 = vmatpush.msra.mxu0 %v650
    %1033 = vmatmul.f32.gmra.mxu0 %v800
    %v1034 = vpop.f32.mrf.mxu0
    %v1035 = vadd.f32 %v1015, %v1034
    %1036 = vdwg.mxu0
    %1037 = vmatpush.msra.mxu0 %v345
    %1038 = vmatpush.msra.mxu0 %v327
    %1039 = vmatpush.msra.mxu0 %v309
    %1040 = vmatpush.msra.mxu0 %v291
    %1041 = vmatpush.msra.mxu0 %v273
    %1042 = vmatpush.msra.mxu0 %v255
    %1043 = vmatpush.msra.mxu0 %v237
    %1044 = vmatpush.msra.mxu0 %v219
    %1045 = vmatpush.msra.mxu0 %v201
    %1046 = vmatpush.msra.mxu0 %v183
    %1047 = vmatpush.msra.mxu0 %v165
    %1048 = vmatpush.msra.mxu0 %v147
    %1049 = vmatpush.msra.mxu0 %v129
    %1050 = vmatpush.msra.mxu0 %v111
    %1051 = vmatpush.msra.mxu0 %v93
    %1052 = vmatpush.msra.mxu0 %v75
    %1053 = vmatmul.f32.gmra.mxu0 %v69
    %v1054 = vpop.f32.mrf.mxu0
    %v1055 = vadd.f32 %v765, %v1054
    %1056 = vdwg.mxu0
    %1057 = vmatpush.msra.mxu0 %v633
    %1058 = vmatpush.msra.mxu0 %v615
    %1059 = vmatpush.msra.mxu0 %v597
    %1060 = vmatpush.msra.mxu0 %v579
    %1061 = vmatpush.msra.mxu0 %v561
    %1062 = vmatpush.msra.mxu0 %v543
    %1063 = vmatpush.msra.mxu0 %v525
    %1064 = vmatpush.msra.mxu0 %v507
    %1065 = vmatpush.msra.mxu0 %v489
    %1066 = vmatpush.msra.mxu0 %v471
    %1067 = vmatpush.msra.mxu0 %v453
    %1068 = vmatpush.msra.mxu0 %v435
    %1069 = vmatpush.msra.mxu0 %v417
    %1070 = vmatpush.msra.mxu0 %v399
    %1071 = vmatpush.msra.mxu0 %v381
    %1072 = vmatpush.msra.mxu0 %v363
    %1073 = vmatmul.f32.gmra.mxu0 %v70
    %v1074 = vpop.f32.mrf.mxu0
    %v1075 = vadd.f32 %v1055, %v1074
    %1076 = vdwg.mxu0
    %1077 = vmatpush.msra.mxu0 0.0
    %1078 = vmatpush.msra.mxu0 0.0
    %1079 = vmatpush.msra.mxu0 0.0
    %1080 = vmatpush.msra.mxu0 0.0
    %1081 = vmatpush.msra.mxu0 0.0
    %1082 = vmatpush.msra.mxu0 0.0
    %1083 = vmatpush.msra.mxu0 0.0
    %1084 = vmatpush.msra.mxu0 0.0
    %1085 = vmatpush.msra.mxu0 0.0
    %1086 = vmatpush.msra.mxu0 0.0
    %1087 = vmatpush.msra.mxu0 %v813
    %1088 = vmatpush.msra.mxu0 %v723
    %1089 = vmatpush.msra.mxu0 %v705
    %1090 = vmatpush.msra.mxu0 %v687
    %1091 = vmatpush.msra.mxu0 %v669
    %1092 = vmatpush.msra.mxu0 %v651
    %1093 = vmatmul.f32.gmra.mxu0 %v800
    %v1094 = vpop.f32.mrf.mxu0
    %v1095 = vadd.f32 %v1075, %v1094
    %1096 = vdwg.mxu0
    %1097 = vmatpush.msra.mxu0 %v346
    %1098 = vmatpush.msra.mxu0 %v328
    %1099 = vmatpush.msra.mxu0 %v310
    %1100 = vmatpush.msra.mxu0 %v292
    %1101 = vmatpush.msra.mxu0 %v274
    %1102 = vmatpush.msra.mxu0 %v256
    %1103 = vmatpush.msra.mxu0 %v238
    %1104 = vmatpush.msra.mxu0 %v220
    %1105 = vmatpush.msra.mxu0 %v202
    %1106 = vmatpush.msra.mxu0 %v184
    %1107 = vmatpush.msra.mxu0 %v166
    %1108 = vmatpush.msra.mxu0 %v148
    %1109 = vmatpush.msra.mxu0 %v130
    %1110 = vmatpush.msra.mxu0 %v112
    %1111 = vmatpush.msra.mxu0 %v94
    %1112 = vmatpush.msra.mxu0 %v76
    %1113 = vmatmul.f32.gmra.mxu0 %v69
    %v1114 = vpop.f32.mrf.mxu0
    %v1115 = vadd.f32 %v766, %v1114
    %1116 = vdwg.mxu0
    %1117 = vmatpush.msra.mxu0 %v634
    %1118 = vmatpush.msra.mxu0 %v616
    %1119 = vmatpush.msra.mxu0 %v598
    %1120 = vmatpush.msra.mxu0 %v580
    %1121 = vmatpush.msra.mxu0 %v562
    %1122 = vmatpush.msra.mxu0 %v544
    %1123 = vmatpush.msra.mxu0 %v526
    %1124 = vmatpush.msra.mxu0 %v508
    %1125 = vmatpush.msra.mxu0 %v490
    %1126 = vmatpush.msra.mxu0 %v472
    %1127 = vmatpush.msra.mxu0 %v454
    %1128 = vmatpush.msra.mxu0 %v436
    %1129 = vmatpush.msra.mxu0 %v418
    %1130 = vmatpush.msra.mxu0 %v400
    %1131 = vmatpush.msra.mxu0 %v382
    %1132 = vmatpush.msra.mxu0 %v364
    %1133 = vmatmul.f32.gmra.mxu0 %v70
    %v1134 = vpop.f32.mrf.mxu0
    %v1135 = vadd.f32 %v1115, %v1134
    %1136 = vdwg.mxu0
    %1137 = vmatpush.msra.mxu0 0.0
    %1138 = vmatpush.msra.mxu0 0.0
    %1139 = vmatpush.msra.mxu0 0.0
    %1140 = vmatpush.msra.mxu0 0.0
    %1141 = vmatpush.msra.mxu0 0.0
    %1142 = vmatpush.msra.mxu0 0.0
    %1143 = vmatpush.msra.mxu0 0.0
    %1144 = vmatpush.msra.mxu0 0.0
    %1145 = vmatpush.msra.mxu0 0.0
    %1146 = vmatpush.msra.mxu0 0.0
    %1147 = vmatpush.msra.mxu0 %v816
    %1148 = vmatpush.msra.mxu0 %v724
    %1149 = vmatpush.msra.mxu0 %v706
    %1150 = vmatpush.msra.mxu0 %v688
    %1151 = vmatpush.msra.mxu0 %v670
    %1152 = vmatpush.msra.mxu0 %v652
    %1153 = vmatmul.f32.gmra.mxu0 %v800
    %v1154 = vpop.f32.mrf.mxu0
    %v1155 = vadd.f32 %v1135, %v1154
    %1156 = vdwg.mxu0
    %1157 = vmatpush.msra.mxu0 %v347
    %1158 = vmatpush.msra.mxu0 %v329
    %1159 = vmatpush.msra.mxu0 %v311
    %1160 = vmatpush.msra.mxu0 %v293
    %1161 = vmatpush.msra.mxu0 %v275
    %1162 = vmatpush.msra.mxu0 %v257
    %1163 = vmatpush.msra.mxu0 %v239
    %1164 = vmatpush.msra.mxu0 %v221
    %1165 = vmatpush.msra.mxu0 %v203
    %1166 = vmatpush.msra.mxu0 %v185
    %1167 = vmatpush.msra.mxu0 %v167
    %1168 = vmatpush.msra.mxu0 %v149
    %1169 = vmatpush.msra.mxu0 %v131
    %1170 = vmatpush.msra.mxu0 %v113
    %1171 = vmatpush.msra.mxu0 %v95
    %1172 = vmatpush.msra.mxu0 %v77
    %1173 = vmatmul.f32.gmra.mxu0 %v69
    %v1174 = vpop.f32.mrf.mxu0
    %v1175 = vadd.f32 %v767, %v1174
    %1176 = vdwg.mxu0
    %1177 = vmatpush.msra.mxu0 %v635
    %1178 = vmatpush.msra.mxu0 %v617
    %1179 = vmatpush.msra.mxu0 %v599
    %1180 = vmatpush.msra.mxu0 %v581
    %1181 = vmatpush.msra.mxu0 %v563
    %1182 = vmatpush.msra.mxu0 %v545
    %1183 = vmatpush.msra.mxu0 %v527
    %1184 = vmatpush.msra.mxu0 %v509
    %1185 = vmatpush.msra.mxu0 %v491
    %1186 = vmatpush.msra.mxu0 %v473
    %1187 = vmatpush.msra.mxu0 %v455
    %1188 = vmatpush.msra.mxu0 %v437
    %1189 = vmatpush.msra.mxu0 %v419
    %1190 = vmatpush.msra.mxu0 %v401
    %1191 = vmatpush.msra.mxu0 %v383
    %1192 = vmatpush.msra.mxu0 %v365
    %1193 = vmatmul.f32.gmra.mxu0 %v70
    %v1194 = vpop.f32.mrf.mxu0
    %v1195 = vadd.f32 %v1175, %v1194
    %1196 = vdwg.mxu0
    %1197 = vmatpush.msra.mxu0 0.0
    %1198 = vmatpush.msra.mxu0 0.0
    %1199 = vmatpush.msra.mxu0 0.0
    %1200 = vmatpush.msra.mxu0 0.0
    %1201 = vmatpush.msra.mxu0 0.0
    %1202 = vmatpush.msra.mxu0 0.0
    %1203 = vmatpush.msra.mxu0 0.0
    %1204 = vmatpush.msra.mxu0 0.0
    %1205 = vmatpush.msra.mxu0 0.0
    %1206 = vmatpush.msra.mxu0 0.0
    %1207 = vmatpush.msra.mxu0 %v819
    %1208 = vmatpush.msra.mxu0 %v725
    %1209 = vmatpush.msra.mxu0 %v707
    %1210 = vmatpush.msra.mxu0 %v689
    %1211 = vmatpush.msra.mxu0 %v671
    %1212 = vmatpush.msra.mxu0 %v653
    %1213 = vmatmul.f32.gmra.mxu0 %v800
    %v1214 = vpop.f32.mrf.mxu0
    %v1215 = vadd.f32 %v1195, %v1214
    %1216 = vdwg.mxu0
    %1217 = vmatpush.msra.mxu0 %v348
    %1218 = vmatpush.msra.mxu0 %v330
    %1219 = vmatpush.msra.mxu0 %v312
    %1220 = vmatpush.msra.mxu0 %v294
    %1221 = vmatpush.msra.mxu0 %v276
    %1222 = vmatpush.msra.mxu0 %v258
    %1223 = vmatpush.msra.mxu0 %v240
    %1224 = vmatpush.msra.mxu0 %v222
    %1225 = vmatpush.msra.mxu0 %v204
    %1226 = vmatpush.msra.mxu0 %v186
    %1227 = vmatpush.msra.mxu0 %v168
    %1228 = vmatpush.msra.mxu0 %v150
    %1229 = vmatpush.msra.mxu0 %v132
    %1230 = vmatpush.msra.mxu0 %v114
    %1231 = vmatpush.msra.mxu0 %v96
    %1232 = vmatpush.msra.mxu0 %v78
    %1233 = vmatmul.f32.gmra.mxu0 %v69
    %v1234 = vpop.f32.mrf.mxu0
    %v1235 = vadd.f32 %v768, %v1234
    %1236 = vdwg.mxu0
    %1237 = vmatpush.msra.mxu0 %v636
    %1238 = vmatpush.msra.mxu0 %v618
    %1239 = vmatpush.msra.mxu0 %v600
    %1240 = vmatpush.msra.mxu0 %v582
    %1241 = vmatpush.msra.mxu0 %v564
    %1242 = vmatpush.msra.mxu0 %v546
    %1243 = vmatpush.msra.mxu0 %v528
    %1244 = vmatpush.msra.mxu0 %v510
    %1245 = vmatpush.msra.mxu0 %v492
    %1246 = vmatpush.msra.mxu0 %v474
    %1247 = vmatpush.msra.mxu0 %v456
    %1248 = vmatpush.msra.mxu0 %v438
    %1249 = vmatpush.msra.mxu0 %v420
    %1250 = vmatpush.msra.mxu0 %v402
    %1251 = vmatpush.msra.mxu0 %v384
    %1252 = vmatpush.msra.mxu0 %v366
    %1253 = vmatmul.f32.gmra.mxu0 %v70
    %v1254 = vpop.f32.mrf.mxu0
    %v1255 = vadd.f32 %v1235, %v1254
    %1256 = vdwg.mxu0
    %1257 = vmatpush.msra.mxu0 0.0
    %1258 = vmatpush.msra.mxu0 0.0
    %1259 = vmatpush.msra.mxu0 0.0
    %1260 = vmatpush.msra.mxu0 0.0
    %1261 = vmatpush.msra.mxu0 0.0
    %1262 = vmatpush.msra.mxu0 0.0
    %1263 = vmatpush.msra.mxu0 0.0
    %1264 = vmatpush.msra.mxu0 0.0
    %1265 = vmatpush.msra.mxu0 0.0
    %1266 = vmatpush.msra.mxu0 0.0
    %1267 = vmatpush.msra.mxu0 %v822
    %1268 = vmatpush.msra.mxu0 %v726
    %1269 = vmatpush.msra.mxu0 %v708
    %1270 = vmatpush.msra.mxu0 %v690
    %1271 = vmatpush.msra.mxu0 %v672
    %1272 = vmatpush.msra.mxu0 %v654
    %1273 = vmatmul.f32.gmra.mxu0 %v800
    %v1274 = vpop.f32.mrf.mxu0
    %v1275 = vadd.f32 %v1255, %v1274
    %1276 = vdwg.mxu0
    %1277 = vmatpush.msra.mxu0 %v349
    %1278 = vmatpush.msra.mxu0 %v331
    %1279 = vmatpush.msra.mxu0 %v313
    %1280 = vmatpush.msra.mxu0 %v295
    %1281 = vmatpush.msra.mxu0 %v277
    %1282 = vmatpush.msra.mxu0 %v259
    %1283 = vmatpush.msra.mxu0 %v241
    %1284 = vmatpush.msra.mxu0 %v223
    %1285 = vmatpush.msra.mxu0 %v205
    %1286 = vmatpush.msra.mxu0 %v187
    %1287 = vmatpush.msra.mxu0 %v169
    %1288 = vmatpush.msra.mxu0 %v151
    %1289 = vmatpush.msra.mxu0 %v133
    %1290 = vmatpush.msra.mxu0 %v115
    %1291 = vmatpush.msra.mxu0 %v97
    %1292 = vmatpush.msra.mxu0 %v79
    %1293 = vmatmul.f32.gmra.mxu0 %v69
    %v1294 = vpop.f32.mrf.mxu0
    %v1295 = vadd.f32 %v769, %v1294
    %1296 = vdwg.mxu0
    %1297 = vmatpush.msra.mxu0 %v637
    %1298 = vmatpush.msra.mxu0 %v619
    %1299 = vmatpush.msra.mxu0 %v601
    %1300 = vmatpush.msra.mxu0 %v583
    %1301 = vmatpush.msra.mxu0 %v565
    %1302 = vmatpush.msra.mxu0 %v547
    %1303 = vmatpush.msra.mxu0 %v529
    %1304 = vmatpush.msra.mxu0 %v511
    %1305 = vmatpush.msra.mxu0 %v493
    %1306 = vmatpush.msra.mxu0 %v475
    %1307 = vmatpush.msra.mxu0 %v457
    %1308 = vmatpush.msra.mxu0 %v439
    %1309 = vmatpush.msra.mxu0 %v421
    %1310 = vmatpush.msra.mxu0 %v403
    %1311 = vmatpush.msra.mxu0 %v385
    %1312 = vmatpush.msra.mxu0 %v367
    %1313 = vmatmul.f32.gmra.mxu0 %v70
    %v1314 = vpop.f32.mrf.mxu0
    %v1315 = vadd.f32 %v1295, %v1314
    %1316 = vdwg.mxu0
    %1317 = vmatpush.msra.mxu0 0.0
    %1318 = vmatpush.msra.mxu0 0.0
    %1319 = vmatpush.msra.mxu0 0.0
    %1320 = vmatpush.msra.mxu0 0.0
    %1321 = vmatpush.msra.mxu0 0.0
    %1322 = vmatpush.msra.mxu0 0.0
    %1323 = vmatpush.msra.mxu0 0.0
    %1324 = vmatpush.msra.mxu0 0.0
    %1325 = vmatpush.msra.mxu0 0.0
    %1326 = vmatpush.msra.mxu0 0.0
    %1327 = vmatpush.msra.mxu0 %v825
    %1328 = vmatpush.msra.mxu0 %v727
    %1329 = vmatpush.msra.mxu0 %v709
    %1330 = vmatpush.msra.mxu0 %v691
    %1331 = vmatpush.msra.mxu0 %v673
    %1332 = vmatpush.msra.mxu0 %v655
    %1333 = vmatmul.f32.gmra.mxu0 %v800
    %v1334 = vpop.f32.mrf.mxu0
    %v1335 = vadd.f32 %v1315, %v1334
    %1336 = vdwg.mxu0
    %1337 = vmatpush.msra.mxu0 %v350
    %1338 = vmatpush.msra.mxu0 %v332
    %1339 = vmatpush.msra.mxu0 %v314
    %1340 = vmatpush.msra.mxu0 %v296
    %1341 = vmatpush.msra.mxu0 %v278
    %1342 = vmatpush.msra.mxu0 %v260
    %1343 = vmatpush.msra.mxu0 %v242
    %1344 = vmatpush.msra.mxu0 %v224
    %1345 = vmatpush.msra.mxu0 %v206
    %1346 = vmatpush.msra.mxu0 %v188
    %1347 = vmatpush.msra.mxu0 %v170
    %1348 = vmatpush.msra.mxu0 %v152
    %1349 = vmatpush.msra.mxu0 %v134
    %1350 = vmatpush.msra.mxu0 %v116
    %1351 = vmatpush.msra.mxu0 %v98
    %1352 = vmatpush.msra.mxu0 %v80
    %1353 = vmatmul.f32.gmra.mxu0 %v69
    %v1354 = vpop.f32.mrf.mxu0
    %v1355 = vadd.f32 %v770, %v1354
    %1356 = vdwg.mxu0
    %1357 = vmatpush.msra.mxu0 %v638
    %1358 = vmatpush.msra.mxu0 %v620
    %1359 = vmatpush.msra.mxu0 %v602
    %1360 = vmatpush.msra.mxu0 %v584
    %1361 = vmatpush.msra.mxu0 %v566
    %1362 = vmatpush.msra.mxu0 %v548
    %1363 = vmatpush.msra.mxu0 %v530
    %1364 = vmatpush.msra.mxu0 %v512
    %1365 = vmatpush.msra.mxu0 %v494
    %1366 = vmatpush.msra.mxu0 %v476
    %1367 = vmatpush.msra.mxu0 %v458
    %1368 = vmatpush.msra.mxu0 %v440
    %1369 = vmatpush.msra.mxu0 %v422
    %1370 = vmatpush.msra.mxu0 %v404
    %1371 = vmatpush.msra.mxu0 %v386
    %1372 = vmatpush.msra.mxu0 %v368
    %1373 = vmatmul.f32.gmra.mxu0 %v70
    %v1374 = vpop.f32.mrf.mxu0
    %v1375 = vadd.f32 %v1355, %v1374
    %1376 = vdwg.mxu0
    %1377 = vmatpush.msra.mxu0 0.0
    %1378 = vmatpush.msra.mxu0 0.0
    %1379 = vmatpush.msra.mxu0 0.0
    %1380 = vmatpush.msra.mxu0 0.0
    %1381 = vmatpush.msra.mxu0 0.0
    %1382 = vmatpush.msra.mxu0 0.0
    %1383 = vmatpush.msra.mxu0 0.0
    %1384 = vmatpush.msra.mxu0 0.0
    %1385 = vmatpush.msra.mxu0 0.0
    %1386 = vmatpush.msra.mxu0 0.0
    %1387 = vmatpush.msra.mxu0 %v828
    %1388 = vmatpush.msra.mxu0 %v728
    %1389 = vmatpush.msra.mxu0 %v710
    %1390 = vmatpush.msra.mxu0 %v692
    %1391 = vmatpush.msra.mxu0 %v674
    %1392 = vmatpush.msra.mxu0 %v656
    %1393 = vmatmul.f32.gmra.mxu0 %v800
    %v1394 = vpop.f32.mrf.mxu0
    %v1395 = vadd.f32 %v1375, %v1394
    %1396 = vdwg.mxu0
    %1397 = vmatpush.msra.mxu0 %v351
    %1398 = vmatpush.msra.mxu0 %v333
    %1399 = vmatpush.msra.mxu0 %v315
    %1400 = vmatpush.msra.mxu0 %v297
    %1401 = vmatpush.msra.mxu0 %v279
    %1402 = vmatpush.msra.mxu0 %v261
    %1403 = vmatpush.msra.mxu0 %v243
    %1404 = vmatpush.msra.mxu0 %v225
    %1405 = vmatpush.msra.mxu0 %v207
    %1406 = vmatpush.msra.mxu0 %v189
    %1407 = vmatpush.msra.mxu0 %v171
    %1408 = vmatpush.msra.mxu0 %v153
    %1409 = vmatpush.msra.mxu0 %v135
    %1410 = vmatpush.msra.mxu0 %v117
    %1411 = vmatpush.msra.mxu0 %v99
    %1412 = vmatpush.msra.mxu0 %v81
    %1413 = vmatmul.f32.gmra.mxu0 %v69
    %v1414 = vpop.f32.mrf.mxu0
    %v1415 = vadd.f32 %v771, %v1414
    %1416 = vdwg.mxu0
    %1417 = vmatpush.msra.mxu0 %v639
    %1418 = vmatpush.msra.mxu0 %v621
    %1419 = vmatpush.msra.mxu0 %v603
    %1420 = vmatpush.msra.mxu0 %v585
    %1421 = vmatpush.msra.mxu0 %v567
    %1422 = vmatpush.msra.mxu0 %v549
    %1423 = vmatpush.msra.mxu0 %v531
    %1424 = vmatpush.msra.mxu0 %v513
    %1425 = vmatpush.msra.mxu0 %v495
    %1426 = vmatpush.msra.mxu0 %v477
    %1427 = vmatpush.msra.mxu0 %v459
    %1428 = vmatpush.msra.mxu0 %v441
    %1429 = vmatpush.msra.mxu0 %v423
    %1430 = vmatpush.msra.mxu0 %v405
    %1431 = vmatpush.msra.mxu0 %v387
    %1432 = vmatpush.msra.mxu0 %v369
    %1433 = vmatmul.f32.gmra.mxu0 %v70
    %v1434 = vpop.f32.mrf.mxu0
    %v1435 = vadd.f32 %v1415, %v1434
    %1436 = vdwg.mxu0
    %1437 = vmatpush.msra.mxu0 0.0
    %1438 = vmatpush.msra.mxu0 0.0
    %1439 = vmatpush.msra.mxu0 0.0
    %1440 = vmatpush.msra.mxu0 0.0
    %1441 = vmatpush.msra.mxu0 0.0
    %1442 = vmatpush.msra.mxu0 0.0
    %1443 = vmatpush.msra.mxu0 0.0
    %1444 = vmatpush.msra.mxu0 0.0
    %1445 = vmatpush.msra.mxu0 0.0
    %1446 = vmatpush.msra.mxu0 0.0
    %1447 = vmatpush.msra.mxu0 %v831
    %1448 = vmatpush.msra.mxu0 %v729
    %1449 = vmatpush.msra.mxu0 %v711
    %1450 = vmatpush.msra.mxu0 %v693
    %1451 = vmatpush.msra.mxu0 %v675
    %1452 = vmatpush.msra.mxu0 %v657
    %1453 = vmatmul.f32.gmra.mxu0 %v800
    %v1454 = vpop.f32.mrf.mxu0
    %v1455 = vadd.f32 %v1435, %v1454
    %1456 = vdwg.mxu0
    %1457 = vmatpush.msra.mxu0 %v352
    %1458 = vmatpush.msra.mxu0 %v334
    %1459 = vmatpush.msra.mxu0 %v316
    %1460 = vmatpush.msra.mxu0 %v298
    %1461 = vmatpush.msra.mxu0 %v280
    %1462 = vmatpush.msra.mxu0 %v262
    %1463 = vmatpush.msra.mxu0 %v244
    %1464 = vmatpush.msra.mxu0 %v226
    %1465 = vmatpush.msra.mxu0 %v208
    %1466 = vmatpush.msra.mxu0 %v190
    %1467 = vmatpush.msra.mxu0 %v172
    %1468 = vmatpush.msra.mxu0 %v154
    %1469 = vmatpush.msra.mxu0 %v136
    %1470 = vmatpush.msra.mxu0 %v118
    %1471 = vmatpush.msra.mxu0 %v100
    %1472 = vmatpush.msra.mxu0 %v82
    %1473 = vmatmul.f32.gmra.mxu0 %v69
    %v1474 = vpop.f32.mrf.mxu0
    %v1475 = vadd.f32 %v772, %v1474
    %1476 = vdwg.mxu0
    %1477 = vmatpush.msra.mxu0 %v640
    %1478 = vmatpush.msra.mxu0 %v622
    %1479 = vmatpush.msra.mxu0 %v604
    %1480 = vmatpush.msra.mxu0 %v586
    %1481 = vmatpush.msra.mxu0 %v568
    %1482 = vmatpush.msra.mxu0 %v550
    %1483 = vmatpush.msra.mxu0 %v532
    %1484 = vmatpush.msra.mxu0 %v514
    %1485 = vmatpush.msra.mxu0 %v496
    %1486 = vmatpush.msra.mxu0 %v478
    %1487 = vmatpush.msra.mxu0 %v460
    %1488 = vmatpush.msra.mxu0 %v442
    %1489 = vmatpush.msra.mxu0 %v424
    %1490 = vmatpush.msra.mxu0 %v406
    %1491 = vmatpush.msra.mxu0 %v388
    %1492 = vmatpush.msra.mxu0 %v370
    %1493 = vmatmul.f32.gmra.mxu0 %v70
    %v1494 = vpop.f32.mrf.mxu0
    %v1495 = vadd.f32 %v1475, %v1494
    %1496 = vdwg.mxu0
    %1497 = vmatpush.msra.mxu0 0.0
    %1498 = vmatpush.msra.mxu0 0.0
    %1499 = vmatpush.msra.mxu0 0.0
    %1500 = vmatpush.msra.mxu0 0.0
    %1501 = vmatpush.msra.mxu0 0.0
    %1502 = vmatpush.msra.mxu0 0.0
    %1503 = vmatpush.msra.mxu0 0.0
    %1504 = vmatpush.msra.mxu0 0.0
    %1505 = vmatpush.msra.mxu0 0.0
    %1506 = vmatpush.msra.mxu0 0.0
    %1507 = vmatpush.msra.mxu0 %v834
    %1508 = vmatpush.msra.mxu0 %v730
    %1509 = vmatpush.msra.mxu0 %v712
    %1510 = vmatpush.msra.mxu0 %v694
    %1511 = vmatpush.msra.mxu0 %v676
    %1512 = vmatpush.msra.mxu0 %v658
    %1513 = vmatmul.f32.gmra.mxu0 %v800
    %v1514 = vpop.f32.mrf.mxu0
    %v1515 = vadd.f32 %v1495, %v1514
    %1516 = vdwg.mxu0
    %1517 = vmatpush.msra.mxu0 %v353
    %1518 = vmatpush.msra.mxu0 %v335
    %1519 = vmatpush.msra.mxu0 %v317
    %1520 = vmatpush.msra.mxu0 %v299
    %1521 = vmatpush.msra.mxu0 %v281
    %1522 = vmatpush.msra.mxu0 %v263
    %1523 = vmatpush.msra.mxu0 %v245
    %1524 = vmatpush.msra.mxu0 %v227
    %1525 = vmatpush.msra.mxu0 %v209
    %1526 = vmatpush.msra.mxu0 %v191
    %1527 = vmatpush.msra.mxu0 %v173
    %1528 = vmatpush.msra.mxu0 %v155
    %1529 = vmatpush.msra.mxu0 %v137
    %1530 = vmatpush.msra.mxu0 %v119
    %1531 = vmatpush.msra.mxu0 %v101
    %1532 = vmatpush.msra.mxu0 %v83
    %1533 = vmatmul.f32.gmra.mxu0 %v69
    %v1534 = vpop.f32.mrf.mxu0
    %v1535 = vadd.f32 %v773, %v1534
    %1536 = vdwg.mxu0
    %1537 = vmatpush.msra.mxu0 %v641
    %1538 = vmatpush.msra.mxu0 %v623
    %1539 = vmatpush.msra.mxu0 %v605
    %1540 = vmatpush.msra.mxu0 %v587
    %1541 = vmatpush.msra.mxu0 %v569
    %1542 = vmatpush.msra.mxu0 %v551
    %1543 = vmatpush.msra.mxu0 %v533
    %1544 = vmatpush.msra.mxu0 %v515
    %1545 = vmatpush.msra.mxu0 %v497
    %1546 = vmatpush.msra.mxu0 %v479
    %1547 = vmatpush.msra.mxu0 %v461
    %1548 = vmatpush.msra.mxu0 %v443
    %1549 = vmatpush.msra.mxu0 %v425
    %1550 = vmatpush.msra.mxu0 %v407
    %1551 = vmatpush.msra.mxu0 %v389
    %1552 = vmatpush.msra.mxu0 %v371
    %1553 = vmatmul.f32.gmra.mxu0 %v70
    %v1554 = vpop.f32.mrf.mxu0
    %v1555 = vadd.f32 %v1535, %v1554
    %1556 = vdwg.mxu0
    %1557 = vmatpush.msra.mxu0 0.0
    %1558 = vmatpush.msra.mxu0 0.0
    %1559 = vmatpush.msra.mxu0 0.0
    %1560 = vmatpush.msra.mxu0 0.0
    %1561 = vmatpush.msra.mxu0 0.0
    %1562 = vmatpush.msra.mxu0 0.0
    %1563 = vmatpush.msra.mxu0 0.0
    %1564 = vmatpush.msra.mxu0 0.0
    %1565 = vmatpush.msra.mxu0 0.0
    %1566 = vmatpush.msra.mxu0 0.0
    %1567 = vmatpush.msra.mxu0 %v837
    %1568 = vmatpush.msra.mxu0 %v731
    %1569 = vmatpush.msra.mxu0 %v713
    %1570 = vmatpush.msra.mxu0 %v695
    %1571 = vmatpush.msra.mxu0 %v677
    %1572 = vmatpush.msra.mxu0 %v659
    %1573 = vmatmul.f32.gmra.mxu0 %v800
    %v1574 = vpop.f32.mrf.mxu0
    %v1575 = vadd.f32 %v1555, %v1574
    %1576 = vdwg.mxu0
    %1577 = vmatpush.msra.mxu0 %v354
    %1578 = vmatpush.msra.mxu0 %v336
    %1579 = vmatpush.msra.mxu0 %v318
    %1580 = vmatpush.msra.mxu0 %v300
    %1581 = vmatpush.msra.mxu0 %v282
    %1582 = vmatpush.msra.mxu0 %v264
    %1583 = vmatpush.msra.mxu0 %v246
    %1584 = vmatpush.msra.mxu0 %v228
    %1585 = vmatpush.msra.mxu0 %v210
    %1586 = vmatpush.msra.mxu0 %v192
    %1587 = vmatpush.msra.mxu0 %v174
    %1588 = vmatpush.msra.mxu0 %v156
    %1589 = vmatpush.msra.mxu0 %v138
    %1590 = vmatpush.msra.mxu0 %v120
    %1591 = vmatpush.msra.mxu0 %v102
    %1592 = vmatpush.msra.mxu0 %v84
    %1593 = vmatmul.f32.gmra.mxu0 %v69
    %v1594 = vpop.f32.mrf.mxu0
    %v1595 = vadd.f32 %v774, %v1594
    %1596 = vdwg.mxu0
    %1597 = vmatpush.msra.mxu0 %v642
    %1598 = vmatpush.msra.mxu0 %v624
    %1599 = vmatpush.msra.mxu0 %v606
    %1600 = vmatpush.msra.mxu0 %v588
    %1601 = vmatpush.msra.mxu0 %v570
    %1602 = vmatpush.msra.mxu0 %v552
    %1603 = vmatpush.msra.mxu0 %v534
    %1604 = vmatpush.msra.mxu0 %v516
    %1605 = vmatpush.msra.mxu0 %v498
    %1606 = vmatpush.msra.mxu0 %v480
    %1607 = vmatpush.msra.mxu0 %v462
    %1608 = vmatpush.msra.mxu0 %v444
    %1609 = vmatpush.msra.mxu0 %v426
    %1610 = vmatpush.msra.mxu0 %v408
    %1611 = vmatpush.msra.mxu0 %v390
    %1612 = vmatpush.msra.mxu0 %v372
    %1613 = vmatmul.f32.gmra.mxu0 %v70
    %v1614 = vpop.f32.mrf.mxu0
    %v1615 = vadd.f32 %v1595, %v1614
    %1616 = vdwg.mxu0
    %1617 = vmatpush.msra.mxu0 0.0
    %1618 = vmatpush.msra.mxu0 0.0
    %1619 = vmatpush.msra.mxu0 0.0
    %1620 = vmatpush.msra.mxu0 0.0
    %1621 = vmatpush.msra.mxu0 0.0
    %1622 = vmatpush.msra.mxu0 0.0
    %1623 = vmatpush.msra.mxu0 0.0
    %1624 = vmatpush.msra.mxu0 0.0
    %1625 = vmatpush.msra.mxu0 0.0
    %1626 = vmatpush.msra.mxu0 0.0
    %1627 = vmatpush.msra.mxu0 %v840
    %1628 = vmatpush.msra.mxu0 %v732
    %1629 = vmatpush.msra.mxu0 %v714
    %1630 = vmatpush.msra.mxu0 %v696
    %1631 = vmatpush.msra.mxu0 %v678
    %1632 = vmatpush.msra.mxu0 %v660
    %1633 = vmatmul.f32.gmra.mxu0 %v800
    %v1634 = vpop.f32.mrf.mxu0
    %v1635 = vadd.f32 %v1615, %v1634
    %1636 = vdwg.mxu0
    %1637 = vmatpush.msra.mxu0 %v355
    %1638 = vmatpush.msra.mxu0 %v337
    %1639 = vmatpush.msra.mxu0 %v319
    %1640 = vmatpush.msra.mxu0 %v301
    %1641 = vmatpush.msra.mxu0 %v283
    %1642 = vmatpush.msra.mxu0 %v265
    %1643 = vmatpush.msra.mxu0 %v247
    %1644 = vmatpush.msra.mxu0 %v229
    %1645 = vmatpush.msra.mxu0 %v211
    %1646 = vmatpush.msra.mxu0 %v193
    %1647 = vmatpush.msra.mxu0 %v175
    %1648 = vmatpush.msra.mxu0 %v157
    %1649 = vmatpush.msra.mxu0 %v139
    %1650 = vmatpush.msra.mxu0 %v121
    %1651 = vmatpush.msra.mxu0 %v103
    %1652 = vmatpush.msra.mxu0 %v85
    %1653 = vmatmul.f32.gmra.mxu0 %v69
    %v1654 = vpop.f32.mrf.mxu0
    %v1655 = vadd.f32 %v775, %v1654
    %1656 = vdwg.mxu0
    %1657 = vmatpush.msra.mxu0 %v643
    %1658 = vmatpush.msra.mxu0 %v625
    %1659 = vmatpush.msra.mxu0 %v607
    %1660 = vmatpush.msra.mxu0 %v589
    %1661 = vmatpush.msra.mxu0 %v571
    %1662 = vmatpush.msra.mxu0 %v553
    %1663 = vmatpush.msra.mxu0 %v535
    %1664 = vmatpush.msra.mxu0 %v517
    %1665 = vmatpush.msra.mxu0 %v499
    %1666 = vmatpush.msra.mxu0 %v481
    %1667 = vmatpush.msra.mxu0 %v463
    %1668 = vmatpush.msra.mxu0 %v445
    %1669 = vmatpush.msra.mxu0 %v427
    %1670 = vmatpush.msra.mxu0 %v409
    %1671 = vmatpush.msra.mxu0 %v391
    %1672 = vmatpush.msra.mxu0 %v373
    %1673 = vmatmul.f32.gmra.mxu0 %v70
    %v1674 = vpop.f32.mrf.mxu0
    %v1675 = vadd.f32 %v1655, %v1674
    %1676 = vdwg.mxu0
    %1677 = vmatpush.msra.mxu0 0.0
    %1678 = vmatpush.msra.mxu0 0.0
    %1679 = vmatpush.msra.mxu0 0.0
    %1680 = vmatpush.msra.mxu0 0.0
    %1681 = vmatpush.msra.mxu0 0.0
    %1682 = vmatpush.msra.mxu0 0.0
    %1683 = vmatpush.msra.mxu0 0.0
    %1684 = vmatpush.msra.mxu0 0.0
    %1685 = vmatpush.msra.mxu0 0.0
    %1686 = vmatpush.msra.mxu0 0.0
    %1687 = vmatpush.msra.mxu0 %v843
    %1688 = vmatpush.msra.mxu0 %v733
    %1689 = vmatpush.msra.mxu0 %v715
    %1690 = vmatpush.msra.mxu0 %v697
    %1691 = vmatpush.msra.mxu0 %v679
    %1692 = vmatpush.msra.mxu0 %v661
    %1693 = vmatmul.f32.gmra.mxu0 %v800
    %v1694 = vpop.f32.mrf.mxu0
    %v1695 = vadd.f32 %v1675, %v1694
    %1696 = vdwg.mxu0
    %1697 = vmatpush.msra.mxu0 %v356
    %1698 = vmatpush.msra.mxu0 %v338
    %1699 = vmatpush.msra.mxu0 %v320
    %1700 = vmatpush.msra.mxu0 %v302
    %1701 = vmatpush.msra.mxu0 %v284
    %1702 = vmatpush.msra.mxu0 %v266
    %1703 = vmatpush.msra.mxu0 %v248
    %1704 = vmatpush.msra.mxu0 %v230
    %1705 = vmatpush.msra.mxu0 %v212
    %1706 = vmatpush.msra.mxu0 %v194
    %1707 = vmatpush.msra.mxu0 %v176
    %1708 = vmatpush.msra.mxu0 %v158
    %1709 = vmatpush.msra.mxu0 %v140
    %1710 = vmatpush.msra.mxu0 %v122
    %1711 = vmatpush.msra.mxu0 %v104
    %1712 = vmatpush.msra.mxu0 %v86
    %1713 = vmatmul.f32.gmra.mxu0 %v69
    %v1714 = vpop.f32.mrf.mxu0
    %v1715 = vadd.f32 %v776, %v1714
    %1716 = vdwg.mxu0
    %1717 = vmatpush.msra.mxu0 %v644
    %1718 = vmatpush.msra.mxu0 %v626
    %1719 = vmatpush.msra.mxu0 %v608
    %1720 = vmatpush.msra.mxu0 %v590
    %1721 = vmatpush.msra.mxu0 %v572
    %1722 = vmatpush.msra.mxu0 %v554
    %1723 = vmatpush.msra.mxu0 %v536
    %1724 = vmatpush.msra.mxu0 %v518
    %1725 = vmatpush.msra.mxu0 %v500
    %1726 = vmatpush.msra.mxu0 %v482
    %1727 = vmatpush.msra.mxu0 %v464
    %1728 = vmatpush.msra.mxu0 %v446
    %1729 = vmatpush.msra.mxu0 %v428
    %1730 = vmatpush.msra.mxu0 %v410
    %1731 = vmatpush.msra.mxu0 %v392
    %1732 = vmatpush.msra.mxu0 %v374
    %1733 = vmatmul.f32.gmra.mxu0 %v70
    %v1734 = vpop.f32.mrf.mxu0
    %v1735 = vadd.f32 %v1715, %v1734
    %1736 = vdwg.mxu0
    %1737 = vmatpush.msra.mxu0 0.0
    %1738 = vmatpush.msra.mxu0 0.0
    %1739 = vmatpush.msra.mxu0 0.0
    %1740 = vmatpush.msra.mxu0 0.0
    %1741 = vmatpush.msra.mxu0 0.0
    %1742 = vmatpush.msra.mxu0 0.0
    %1743 = vmatpush.msra.mxu0 0.0
    %1744 = vmatpush.msra.mxu0 0.0
    %1745 = vmatpush.msra.mxu0 0.0
    %1746 = vmatpush.msra.mxu0 0.0
    %1747 = vmatpush.msra.mxu0 %v846
    %1748 = vmatpush.msra.mxu0 %v734
    %1749 = vmatpush.msra.mxu0 %v716
    %1750 = vmatpush.msra.mxu0 %v698
    %1751 = vmatpush.msra.mxu0 %v680
    %1752 = vmatpush.msra.mxu0 %v662
    %1753 = vmatmul.f32.gmra.mxu0 %v800
    %v1754 = vpop.f32.mrf.mxu0
    %v1755 = vadd.f32 %v1735, %v1754
    %1756 = vdwg.mxu0
    %1757 = vmatpush.msra.mxu0 %v357
    %1758 = vmatpush.msra.mxu0 %v339
    %1759 = vmatpush.msra.mxu0 %v321
    %1760 = vmatpush.msra.mxu0 %v303
    %1761 = vmatpush.msra.mxu0 %v285
    %1762 = vmatpush.msra.mxu0 %v267
    %1763 = vmatpush.msra.mxu0 %v249
    %1764 = vmatpush.msra.mxu0 %v231
    %1765 = vmatpush.msra.mxu0 %v213
    %1766 = vmatpush.msra.mxu0 %v195
    %1767 = vmatpush.msra.mxu0 %v177
    %1768 = vmatpush.msra.mxu0 %v159
    %1769 = vmatpush.msra.mxu0 %v141
    %1770 = vmatpush.msra.mxu0 %v123
    %1771 = vmatpush.msra.mxu0 %v105
    %1772 = vmatpush.msra.mxu0 %v87
    %1773 = vmatmul.f32.gmra.mxu0 %v69
    %v1774 = vpop.f32.mrf.mxu0
    %v1775 = vadd.f32 %v777, %v1774
    %1776 = vdwg.mxu0
    %1777 = vmatpush.msra.mxu0 %v645
    %1778 = vmatpush.msra.mxu0 %v627
    %1779 = vmatpush.msra.mxu0 %v609
    %1780 = vmatpush.msra.mxu0 %v591
    %1781 = vmatpush.msra.mxu0 %v573
    %1782 = vmatpush.msra.mxu0 %v555
    %1783 = vmatpush.msra.mxu0 %v537
    %1784 = vmatpush.msra.mxu0 %v519
    %1785 = vmatpush.msra.mxu0 %v501
    %1786 = vmatpush.msra.mxu0 %v483
    %1787 = vmatpush.msra.mxu0 %v465
    %1788 = vmatpush.msra.mxu0 %v447
    %1789 = vmatpush.msra.mxu0 %v429
    %1790 = vmatpush.msra.mxu0 %v411
    %1791 = vmatpush.msra.mxu0 %v393
    %1792 = vmatpush.msra.mxu0 %v375
    %1793 = vmatmul.f32.gmra.mxu0 %v70
    %v1794 = vpop.f32.mrf.mxu0
    %v1795 = vadd.f32 %v1775, %v1794
    %1796 = vdwg.mxu0
    %1797 = vmatpush.msra.mxu0 0.0
    %1798 = vmatpush.msra.mxu0 0.0
    %1799 = vmatpush.msra.mxu0 0.0
    %1800 = vmatpush.msra.mxu0 0.0
    %1801 = vmatpush.msra.mxu0 0.0
    %1802 = vmatpush.msra.mxu0 0.0
    %1803 = vmatpush.msra.mxu0 0.0
    %1804 = vmatpush.msra.mxu0 0.0
    %1805 = vmatpush.msra.mxu0 0.0
    %1806 = vmatpush.msra.mxu0 0.0
    %1807 = vmatpush.msra.mxu0 %v849
    %1808 = vmatpush.msra.mxu0 %v735
    %1809 = vmatpush.msra.mxu0 %v717
    %1810 = vmatpush.msra.mxu0 %v699
    %1811 = vmatpush.msra.mxu0 %v681
    %1812 = vmatpush.msra.mxu0 %v663
    %1813 = vmatmul.f32.gmra.mxu0 %v800
    %v1814 = vpop.f32.mrf.mxu0
    %v1815 = vadd.f32 %v1795, %v1814
    %1816 = vdwg.mxu0
    %1817 = vmatpush.msra.mxu0 %v358
    %1818 = vmatpush.msra.mxu0 %v340
    %1819 = vmatpush.msra.mxu0 %v322
    %1820 = vmatpush.msra.mxu0 %v304
    %1821 = vmatpush.msra.mxu0 %v286
    %1822 = vmatpush.msra.mxu0 %v268
    %1823 = vmatpush.msra.mxu0 %v250
    %1824 = vmatpush.msra.mxu0 %v232
    %1825 = vmatpush.msra.mxu0 %v214
    %1826 = vmatpush.msra.mxu0 %v196
    %1827 = vmatpush.msra.mxu0 %v178
    %1828 = vmatpush.msra.mxu0 %v160
    %1829 = vmatpush.msra.mxu0 %v142
    %1830 = vmatpush.msra.mxu0 %v124
    %1831 = vmatpush.msra.mxu0 %v106
    %1832 = vmatpush.msra.mxu0 %v88
    %1833 = vmatmul.f32.gmra.mxu0 %v69
    %v1834 = vpop.f32.mrf.mxu0
    %v1835 = vadd.f32 %v778, %v1834
    %1836 = vdwg.mxu0
    %1837 = vmatpush.msra.mxu0 %v646
    %1838 = vmatpush.msra.mxu0 %v628
    %1839 = vmatpush.msra.mxu0 %v610
    %1840 = vmatpush.msra.mxu0 %v592
    %1841 = vmatpush.msra.mxu0 %v574
    %1842 = vmatpush.msra.mxu0 %v556
    %1843 = vmatpush.msra.mxu0 %v538
    %1844 = vmatpush.msra.mxu0 %v520
    %1845 = vmatpush.msra.mxu0 %v502
    %1846 = vmatpush.msra.mxu0 %v484
    %1847 = vmatpush.msra.mxu0 %v466
    %1848 = vmatpush.msra.mxu0 %v448
    %1849 = vmatpush.msra.mxu0 %v430
    %1850 = vmatpush.msra.mxu0 %v412
    %1851 = vmatpush.msra.mxu0 %v394
    %1852 = vmatpush.msra.mxu0 %v376
    %1853 = vmatmul.f32.gmra.mxu0 %v70
    %v1854 = vpop.f32.mrf.mxu0
    %v1855 = vadd.f32 %v1835, %v1854
    %1856 = vdwg.mxu0
    %1857 = vmatpush.msra.mxu0 0.0
    %1858 = vmatpush.msra.mxu0 0.0
    %1859 = vmatpush.msra.mxu0 0.0
    %1860 = vmatpush.msra.mxu0 0.0
    %1861 = vmatpush.msra.mxu0 0.0
    %1862 = vmatpush.msra.mxu0 0.0
    %1863 = vmatpush.msra.mxu0 0.0
    %1864 = vmatpush.msra.mxu0 0.0
    %1865 = vmatpush.msra.mxu0 0.0
    %1866 = vmatpush.msra.mxu0 0.0
    %1867 = vmatpush.msra.mxu0 %v852
    %1868 = vmatpush.msra.mxu0 %v736
    %1869 = vmatpush.msra.mxu0 %v718
    %1870 = vmatpush.msra.mxu0 %v700
    %1871 = vmatpush.msra.mxu0 %v682
    %1872 = vmatpush.msra.mxu0 %v664
    %1873 = vmatmul.f32.gmra.mxu0 %v800
    %v1874 = vpop.f32.mrf.mxu0
    %v1875 = vadd.f32 %v1855, %v1874
    %1876 = vdwg.mxu0
    %1877 = vmatpush.msra.mxu0 %v359
    %1878 = vmatpush.msra.mxu0 %v341
    %1879 = vmatpush.msra.mxu0 %v323
    %1880 = vmatpush.msra.mxu0 %v305
    %1881 = vmatpush.msra.mxu0 %v287
    %1882 = vmatpush.msra.mxu0 %v269
    %1883 = vmatpush.msra.mxu0 %v251
    %1884 = vmatpush.msra.mxu0 %v233
    %1885 = vmatpush.msra.mxu0 %v215
    %1886 = vmatpush.msra.mxu0 %v197
    %1887 = vmatpush.msra.mxu0 %v179
    %1888 = vmatpush.msra.mxu0 %v161
    %1889 = vmatpush.msra.mxu0 %v143
    %1890 = vmatpush.msra.mxu0 %v125
    %1891 = vmatpush.msra.mxu0 %v107
    %1892 = vmatpush.msra.mxu0 %v89
    %1893 = vmatmul.f32.gmra.mxu0 %v69
    %v1894 = vpop.f32.mrf.mxu0
    %v1895 = vadd.f32 %v779, %v1894
    %1896 = vdwg.mxu0
    %1897 = vmatpush.msra.mxu0 %v647
    %1898 = vmatpush.msra.mxu0 %v629
    %1899 = vmatpush.msra.mxu0 %v611
    %1900 = vmatpush.msra.mxu0 %v593
    %1901 = vmatpush.msra.mxu0 %v575
    %1902 = vmatpush.msra.mxu0 %v557
    %1903 = vmatpush.msra.mxu0 %v539
    %1904 = vmatpush.msra.mxu0 %v521
    %1905 = vmatpush.msra.mxu0 %v503
    %1906 = vmatpush.msra.mxu0 %v485
    %1907 = vmatpush.msra.mxu0 %v467
    %1908 = vmatpush.msra.mxu0 %v449
    %1909 = vmatpush.msra.mxu0 %v431
    %1910 = vmatpush.msra.mxu0 %v413
    %1911 = vmatpush.msra.mxu0 %v395
    %1912 = vmatpush.msra.mxu0 %v377
    %1913 = vmatmul.f32.gmra.mxu0 %v70
    %v1914 = vpop.f32.mrf.mxu0
    %v1915 = vadd.f32 %v1895, %v1914
    %1916 = vdwg.mxu0
    %1917 = vmatpush.msra.mxu0 0.0
    %1918 = vmatpush.msra.mxu0 0.0
    %1919 = vmatpush.msra.mxu0 0.0
    %1920 = vmatpush.msra.mxu0 0.0
    %1921 = vmatpush.msra.mxu0 0.0
    %1922 = vmatpush.msra.mxu0 0.0
    %1923 = vmatpush.msra.mxu0 0.0
    %1924 = vmatpush.msra.mxu0 0.0
    %1925 = vmatpush.msra.mxu0 0.0
    %1926 = vmatpush.msra.mxu0 0.0
    %1927 = vmatpush.msra.mxu0 %v855
    %1928 = vmatpush.msra.mxu0 %v737
    %1929 = vmatpush.msra.mxu0 %v719
    %1930 = vmatpush.msra.mxu0 %v701
    %1931 = vmatpush.msra.mxu0 %v683
    %1932 = vmatpush.msra.mxu0 %v665
    %1933 = vmatmul.f32.gmra.mxu0 %v800
    %v1934 = vpop.f32.mrf.mxu0
    %v1935 = vadd.f32 %v1915, %v1934
    %1936 = vdwg.mxu0
    %v1937 = vxor.u32 %v915, 2147483648
    %v1938 = vxor.u32 %v975, 2147483648
    %v1939 = vxor.u32 %v1035, 2147483648
    %v1940 = vmul.f32 %v1937, 1.442695
    %v1941 = vpow.pop %v1940
    %v1942 = vmul.f32 %v1938, 1.442695
    %v1943 = vpow.pop %v1942
    %v1944 = vmul.f32 %v1939, 1.442695
    %v1945 = vpow.pop %v1944
    %v1946 = vadd.f32 %v1941, 1.0
    %v1947 = vadd.f32 %v1943, 1.0
    %v1948 = vadd.f32 %v1945, 1.0
    %v1949 = vrcp.pop %v1946
    %v1950 = vmul.f32 %v1946, %v1949
    %v1951 = vsub.f32 1.0, %v1950
    %v1952 = vmul.f32 %v1949, %v1951
    %v1953 = vadd.f32 %v1949, %v1952
    %vm1954 = vweird.f32 %v1946
    %vm1955 = vweird.f32 %v1949
    %vm1956 = vmor %vm1954, %vm1955
    %v1957 = vsel %vm1956, %v1949, %v1953
    %v1958 = vand.u32 2147483647, %v1946
    %vm1959 = vcmp.eq.f32.partialorder %v1958, 8.507059e+37
    %v1960 = vand.u32 %v1946, 2147483648
    %v1961 = vor.u32 1.1754944e-38, %v1960
    %v1962 = vsel %vm1959, %v1961, %v1957
    %v1963 = vmul.f32 1.0, %v1962
    %v1964 = vrcp.pop %v1947
    %v1965 = vmul.f32 %v1947, %v1964
    %v1966 = vsub.f32 1.0, %v1965
    %v1967 = vmul.f32 %v1964, %v1966
    %v1968 = vadd.f32 %v1964, %v1967
    %vm1969 = vweird.f32 %v1947
    %vm1970 = vweird.f32 %v1964
    %vm1971 = vmor %vm1969, %vm1970
    %v1972 = vsel %vm1971, %v1964, %v1968
    %v1973 = vand.u32 2147483647, %v1947
    %vm1974 = vcmp.eq.f32.partialorder %v1973, 8.507059e+37
    %v1975 = vand.u32 %v1947, 2147483648
    %v1976 = vor.u32 1.1754944e-38, %v1975
    %v1977 = vsel %vm1974, %v1976, %v1972
    %v1978 = vmul.f32 1.0, %v1977
    %v1979 = vrcp.pop %v1948
    %v1980 = vmul.f32 %v1948, %v1979
    %v1981 = vsub.f32 1.0, %v1980
    %v1982 = vmul.f32 %v1979, %v1981
    %v1983 = vadd.f32 %v1979, %v1982
    %vm1984 = vweird.f32 %v1948
    %vm1985 = vweird.f32 %v1979
    %vm1986 = vmor %vm1984, %vm1985
    %v1987 = vsel %vm1986, %v1979, %v1983
    %v1988 = vand.u32 2147483647, %v1948
    %vm1989 = vcmp.eq.f32.partialorder %v1988, 8.507059e+37
    %v1990 = vand.u32 %v1948, 2147483648
    %v1991 = vor.u32 1.1754944e-38, %v1990
    %v1992 = vsel %vm1989, %v1991, %v1987
    %v1993 = vmul.f32 1.0, %v1992
    %v1994 = vxor.u32 %v1095, 2147483648
    %v1995 = vxor.u32 %v1155, 2147483648
    %v1996 = vxor.u32 %v1215, 2147483648
    %v1997 = vmul.f32 %v1994, 1.442695
    %v1998 = vpow.pop %v1997
    %v1999 = vmul.f32 %v1995, 1.442695
    %v2000 = vpow.pop %v1999
    %v2001 = vmul.f32 %v1996, 1.442695
    %v2002 = vpow.pop %v2001
    %v2003 = vadd.f32 %v1998, 1.0
    %v2004 = vadd.f32 %v2000, 1.0
    %v2005 = vadd.f32 %v2002, 1.0
    %v2006 = vrcp.pop %v2003
    %v2007 = vmul.f32 %v2003, %v2006
    %v2008 = vsub.f32 1.0, %v2007
    %v2009 = vmul.f32 %v2006, %v2008
    %v2010 = vadd.f32 %v2006, %v2009
    %vm2011 = vweird.f32 %v2003
    %vm2012 = vweird.f32 %v2006
    %vm2013 = vmor %vm2011, %vm2012
    %v2014 = vsel %vm2013, %v2006, %v2010
    %v2015 = vand.u32 2147483647, %v2003
    %vm2016 = vcmp.eq.f32.partialorder %v2015, 8.507059e+37
    %v2017 = vand.u32 %v2003, 2147483648
    %v2018 = vor.u32 1.1754944e-38, %v2017
    %v2019 = vsel %vm2016, %v2018, %v2014
    %v2020 = vmul.f32 1.0, %v2019
    %v2021 = vrcp.pop %v2004
    %v2022 = vmul.f32 %v2004, %v2021
    %v2023 = vsub.f32 1.0, %v2022
    %v2024 = vmul.f32 %v2021, %v2023
    %v2025 = vadd.f32 %v2021, %v2024
    %vm2026 = vweird.f32 %v2004
    %vm2027 = vweird.f32 %v2021
    %vm2028 = vmor %vm2026, %vm2027
    %v2029 = vsel %vm2028, %v2021, %v2025
    %v2030 = vand.u32 2147483647, %v2004
    %vm2031 = vcmp.eq.f32.partialorder %v2030, 8.507059e+37
    %v2032 = vand.u32 %v2004, 2147483648
    %v2033 = vor.u32 1.1754944e-38, %v2032
    %v2034 = vsel %vm2031, %v2033, %v2029
    %v2035 = vmul.f32 1.0, %v2034
    %v2036 = vrcp.pop %v2005
    %v2037 = vmul.f32 %v2005, %v2036
    %v2038 = vsub.f32 1.0, %v2037
    %v2039 = vmul.f32 %v2036, %v2038
    %v2040 = vadd.f32 %v2036, %v2039
    %vm2041 = vweird.f32 %v2005
    %vm2042 = vweird.f32 %v2036
    %vm2043 = vmor %vm2041, %vm2042
    %v2044 = vsel %vm2043, %v2036, %v2040
    %v2045 = vand.u32 2147483647, %v2005
    %vm2046 = vcmp.eq.f32.partialorder %v2045, 8.507059e+37
    %v2047 = vand.u32 %v2005, 2147483648
    %v2048 = vor.u32 1.1754944e-38, %v2047
    %v2049 = vsel %vm2046, %v2048, %v2044
    %v2050 = vmul.f32 1.0, %v2049
    %v2051 = vld [vmem:[#allocation8 + $0x12] sm:$0x7]
    %v2053 = vperm.slane %v2051, 0
    %v2054 = vperm.slane %v2051, 1
    %v2055 = vperm.slane %v2051, 2
    %v2059 = vmul.f32 %v1963, %v2053
    %v2060 = vmul.f32 %v1978, %v2054
    %v2061 = vmul.f32 %v1993, %v2055
    %v2062 = vadd.f32 %v1275, %v2059
    %v2063 = vadd.f32 %v1335, %v2060
    %v2064 = vadd.f32 %v1395, %v2061
    %v2065 = vtanh.pop %v2062
    %v2066 = vtanh.pop %v2063
    %v2067 = vtanh.pop %v2064
    %v2068 = vsub.f32 1.0, %v2020
    %v2069 = vsub.f32 1.0, %v2035
    %v2070 = vsub.f32 1.0, %v2050
    %v2071 = vmul.f32 %v2068, %v2065
    %v2072 = vmul.f32 %v2069, %v2066
    %v2073 = vmul.f32 %v2070, %v2067
    %v2074 = vxor.u32 %v1455, 2147483648
    %v2075 = vxor.u32 %v1515, 2147483648
    %v2076 = vxor.u32 %v1575, 2147483648
    %v2077 = vmul.f32 %v2074, 1.442695
    %v2078 = vpow.pop %v2077
    %v2079 = vmul.f32 %v2075, 1.442695
    %v2080 = vpow.pop %v2079
    %v2081 = vmul.f32 %v2076, 1.442695
    %v2082 = vpow.pop %v2081
    %v2083 = vadd.f32 %v2078, 1.0
    %v2084 = vadd.f32 %v2080, 1.0
    %v2085 = vadd.f32 %v2082, 1.0
    %v2086 = vrcp.pop %v2083
    %v2087 = vmul.f32 %v2083, %v2086
    %v2088 = vsub.f32 1.0, %v2087
    %v2089 = vmul.f32 %v2086, %v2088
    %v2090 = vadd.f32 %v2086, %v2089
    %vm2091 = vweird.f32 %v2083
    %vm2092 = vweird.f32 %v2086
    %vm2093 = vmor %vm2091, %vm2092
    %v2094 = vsel %vm2093, %v2086, %v2090
    %v2095 = vand.u32 2147483647, %v2083
    %vm2096 = vcmp.eq.f32.partialorder %v2095, 8.507059e+37
    %v2097 = vand.u32 %v2083, 2147483648
    %v2098 = vor.u32 1.1754944e-38, %v2097
    %v2099 = vsel %vm2096, %v2098, %v2094
    %v2100 = vmul.f32 1.0, %v2099
    %v2101 = vrcp.pop %v2084
    %v2102 = vmul.f32 %v2084, %v2101
    %v2103 = vsub.f32 1.0, %v2102
    %v2104 = vmul.f32 %v2101, %v2103
    %v2105 = vadd.f32 %v2101, %v2104
    %vm2106 = vweird.f32 %v2084
    %vm2107 = vweird.f32 %v2101
    %vm2108 = vmor %vm2106, %vm2107
    %v2109 = vsel %vm2108, %v2101, %v2105
    %v2110 = vand.u32 2147483647, %v2084
    %vm2111 = vcmp.eq.f32.partialorder %v2110, 8.507059e+37
    %v2112 = vand.u32 %v2084, 2147483648
    %v2113 = vor.u32 1.1754944e-38, %v2112
    %v2114 = vsel %vm2111, %v2113, %v2109
    %v2115 = vmul.f32 1.0, %v2114
    %v2116 = vrcp.pop %v2085
    %v2117 = vmul.f32 %v2085, %v2116
    %v2118 = vsub.f32 1.0, %v2117
    %v2119 = vmul.f32 %v2116, %v2118
    %v2120 = vadd.f32 %v2116, %v2119
    %vm2121 = vweird.f32 %v2085
    %vm2122 = vweird.f32 %v2116
    %vm2123 = vmor %vm2121, %vm2122
    %v2124 = vsel %vm2123, %v2116, %v2120
    %v2125 = vand.u32 2147483647, %v2085
    %vm2126 = vcmp.eq.f32.partialorder %v2125, 8.507059e+37
    %v2127 = vand.u32 %v2085, 2147483648
    %v2128 = vor.u32 1.1754944e-38, %v2127
    %v2129 = vsel %vm2126, %v2128, %v2124
    %v2130 = vmul.f32 1.0, %v2129
    %v2131 = vxor.u32 %v1635, 2147483648
    %v2132 = vxor.u32 %v1695, 2147483648
    %v2133 = vxor.u32 %v1755, 2147483648
    %v2134 = vmul.f32 %v2131, 1.442695
    %v2135 = vpow.pop %v2134
    %v2136 = vmul.f32 %v2132, 1.442695
    %v2137 = vpow.pop %v2136
    %v2138 = vmul.f32 %v2133, 1.442695
    %v2139 = vpow.pop %v2138
    %v2140 = vadd.f32 %v2135, 1.0
    %v2141 = vadd.f32 %v2137, 1.0
    %v2142 = vadd.f32 %v2139, 1.0
    %v2143 = vrcp.pop %v2140
    %v2144 = vmul.f32 %v2140, %v2143
    %v2145 = vsub.f32 1.0, %v2144
    %v2146 = vmul.f32 %v2143, %v2145
    %v2147 = vadd.f32 %v2143, %v2146
    %vm2148 = vweird.f32 %v2140
    %vm2149 = vweird.f32 %v2143
    %vm2150 = vmor %vm2148, %vm2149
    %v2151 = vsel %vm2150, %v2143, %v2147
    %v2152 = vand.u32 2147483647, %v2140
    %vm2153 = vcmp.eq.f32.partialorder %v2152, 8.507059e+37
    %v2154 = vand.u32 %v2140, 2147483648
    %v2155 = vor.u32 1.1754944e-38, %v2154
    %v2156 = vsel %vm2153, %v2155, %v2151
    %v2157 = vmul.f32 1.0, %v2156
    %v2158 = vrcp.pop %v2141
    %v2159 = vmul.f32 %v2141, %v2158
    %v2160 = vsub.f32 1.0, %v2159
    %v2161 = vmul.f32 %v2158, %v2160
    %v2162 = vadd.f32 %v2158, %v2161
    %vm2163 = vweird.f32 %v2141
    %vm2164 = vweird.f32 %v2158
    %vm2165 = vmor %vm2163, %vm2164
    %v2166 = vsel %vm2165, %v2158, %v2162
    %v2167 = vand.u32 2147483647, %v2141
    %vm2168 = vcmp.eq.f32.partialorder %v2167, 8.507059e+37
    %v2169 = vand.u32 %v2141, 2147483648
    %v2170 = vor.u32 1.1754944e-38, %v2169
    %v2171 = vsel %vm2168, %v2170, %v2166
    %v2172 = vmul.f32 1.0, %v2171
    %v2173 = vrcp.pop %v2142
    %v2174 = vmul.f32 %v2142, %v2173
    %v2175 = vsub.f32 1.0, %v2174
    %v2176 = vmul.f32 %v2173, %v2175
    %v2177 = vadd.f32 %v2173, %v2176
    %vm2178 = vweird.f32 %v2142
    %vm2179 = vweird.f32 %v2173
    %vm2180 = vmor %vm2178, %vm2179
    %v2181 = vsel %vm2180, %v2173, %v2177
    %v2182 = vand.u32 2147483647, %v2142
    %vm2183 = vcmp.eq.f32.partialorder %v2182, 8.507059e+37
    %v2184 = vand.u32 %v2142, 2147483648
    %v2185 = vor.u32 1.1754944e-38, %v2184
    %v2186 = vsel %vm2183, %v2185, %v2181
    %v2187 = vmul.f32 1.0, %v2186
    %v2188 = vld [vmem:[#allocation8 + $0x15] sm:$0x7]
    %v2190 = vperm.slane %v2188, 0
    %v2191 = vperm.slane %v2188, 1
    %v2192 = vperm.slane %v2188, 2
    %v2196 = vmul.f32 %v2100, %v2190
    %v2197 = vmul.f32 %v2115, %v2191
    %v2198 = vmul.f32 %v2130, %v2192
    %v2199 = vadd.f32 %v1815, %v2196
    %v2200 = vadd.f32 %v1875, %v2197
    %v2201 = vadd.f32 %v1935, %v2198
    %v2202 = vtanh.pop %v2199
    %v2203 = vtanh.pop %v2200
    %v2204 = vtanh.pop %v2201
    %v2205 = vsub.f32 1.0, %v2157
    %v2206 = vsub.f32 1.0, %v2172
    %v2207 = vsub.f32 1.0, %v2187
    %v2208 = vmul.f32 %v2205, %v2202
    %v2209 = vmul.f32 %v2206, %v2203
    %v2210 = vmul.f32 %v2207, %v2204
    %v2211 = vld [vmem:[%s2] sm:$0xff]
    %v2212 = vld [vmem:[%s2 + $0x8] sm:$0xff]
    %v2213 = vld [vmem:[%s2 + $0x10] sm:$0xff]
    %v2214 = vld [vmem:[%s2 + $0x18] sm:$0xff]
    %v2215 = vld [vmem:[%s2 + $0x20] sm:$0xff]
    %v2216 = vld [vmem:[%s2 + $0x28] sm:$0xff]
    %v2217 = vld [vmem:[%s2 + $0x30] sm:$0xff]
    %v2218 = vld [vmem:[%s2 + $0x38] sm:$0xff]
    %v2219 = vld [vmem:[%s2 + $0x40] sm:$0xff]
    %v2220 = vld [vmem:[%s2 + $0x48] sm:$0xff]
    %v2221 = vld [vmem:[%s2 + $0x50] sm:$0xff]
    %v2222 = vld [vmem:[%s2 + $0x58] sm:$0xff]
    %v2223 = vld [vmem:[%s2 + $0x60] sm:$0xff]
    %v2224 = vld [vmem:[%s2 + $0x68] sm:$0xff]
    %v2225 = vld [vmem:[%s2 + $0x70] sm:$0xff]
    %v2226 = vld [vmem:[%s2 + $0x78] sm:$0xff]
    %v2227 = vld [vmem:[%s2 + $0x80] sm:$0xff]
    %v2228 = vld [vmem:[%s2 + $0x88] sm:$0xff]
    %v2229 = vld [vmem:[%s2 + $0x90] sm:$0xff]
    %v2230 = vld [vmem:[%s2 + $0x98] sm:$0xff]
    %v2231 = vld [vmem:[%s2 + $0xa0] sm:$0xff]
    %v2232 = vld [vmem:[%s2 + $0xa8] sm:$0xff]
    %v2233 = vld [vmem:[%s2 + $0xb0] sm:$0xff]
    %v2234 = vld [vmem:[%s2 + $0xb8] sm:$0xff]
    %v2235 = vld [vmem:[%s2 + $0xc0] sm:$0xff]
    %v2236 = vld [vmem:[%s2 + $0xc8] sm:$0xff]
    %v2237 = vld [vmem:[%s2 + $0xd0] sm:$0xff]
    %v2238 = vld [vmem:[%s2 + $0xd8] sm:$0xff]
    %v2239 = vld [vmem:[%s2 + $0xe0] sm:$0xff]
    %v2240 = vld [vmem:[%s2 + $0xe8] sm:$0xff]
    %v2241 = vld [vmem:[%s2 + $0xf0] sm:$0xff]
    %v2242 = vld [vmem:[%s2 + $0xf8] sm:$0xff]
    %v2243 = vld [vmem:[%s2 + $0x100] sm:$0xff]
    %v2244 = vld [vmem:[%s2 + $0x108] sm:$0xff]
    %v2245 = vld [vmem:[%s2 + $0x110] sm:$0xff]
    %v2246 = vld [vmem:[%s2 + $0x118] sm:$0xff]
    %v2247 = vld [vmem:[%s2 + $0x120] sm:$0xff]
    %v2248 = vld [vmem:[%s2 + $0x128] sm:$0xff]
    %v2249 = vld [vmem:[%s2 + $0x130] sm:$0xff]
    %v2250 = vld [vmem:[%s2 + $0x138] sm:$0xff]
    %v2251 = vld [vmem:[%s2 + $0x140] sm:$0xff]
    %v2252 = vld [vmem:[%s2 + $0x148] sm:$0xff]
    %v2253 = vld [vmem:[%s2 + $0x150] sm:$0xff]
    %v2254 = vld [vmem:[%s2 + $0x158] sm:$0xff]
    %v2255 = vld [vmem:[%s2 + $0x160] sm:$0xff]
    %v2256 = vld [vmem:[%s2 + $0x168] sm:$0xff]
    %v2257 = vld [vmem:[%s2 + $0x170] sm:$0xff]
    %v2258 = vld [vmem:[%s2 + $0x178] sm:$0xff]
    %v2259 = vld [vmem:[%s2 + $0x180] sm:$0xff]
    %v2260 = vld [vmem:[%s2 + $0x188] sm:$0xff]
    %v2261 = vld [vmem:[%s2 + $0x190] sm:$0xff]
    %v2262 = vld [vmem:[%s2 + $0x198] sm:$0xff]
    %v2263 = vld [vmem:[%s2 + $0x1a0] sm:$0xff]
    %v2264 = vld [vmem:[%s2 + $0x1a8] sm:$0xff]
    %v2265 = vld [vmem:[%s2 + $0x1b0] sm:$0xff]
    %v2266 = vld [vmem:[%s2 + $0x1b8] sm:$0xff]
    %v2267 = vld [vmem:[%s2 + $0x1c0] sm:$0xff]
    %v2268 = vld [vmem:[%s2 + $0x1c8] sm:$0xff]
    %v2269 = vld [vmem:[%s2 + $0x1d0] sm:$0xff]
    %v2270 = vld [vmem:[%s2 + $0x1d8] sm:$0xff]
    %v2271 = vld [vmem:[%s2 + $0x1e0] sm:$0xff]
    %v2272 = vld [vmem:[%s2 + $0x1e8] sm:$0xff]
    %v2273 = vld [vmem:[%s2 + $0x1f0] sm:$0xff]
    %v2274 = vld [vmem:[%s2 + $0x1f8] sm:$0xff]
    %v2275 = vld [vmem:[%s2 + $0x200] sm:$0xff]
    %v2276 = vld [vmem:[%s2 + $0x208] sm:$0xff]
    %v2277 = vld [vmem:[%s2 + $0x210] sm:$0xff]
    %v2278 = vld [vmem:[%s2 + $0x218] sm:$0xff]
    %v2279 = vld [vmem:[%s2 + $0x220] sm:$0xff]
    %v2280 = vld [vmem:[%s2 + $0x228] sm:$0xff]
    %v2281 = vld [vmem:[%s2 + $0x230] sm:$0xff]
    %v2282 = vld [vmem:[%s2 + $0x238] sm:$0xff]
    %v2283 = vld [vmem:[%s2 + $0x240] sm:$0xff]
    %v2284 = vld [vmem:[%s2 + $0x248] sm:$0xff]
    %v2285 = vld [vmem:[%s2 + $0x250] sm:$0xff]
    %v2286 = vld [vmem:[%s2 + $0x258] sm:$0xff]
    %v2287 = vld [vmem:[%s2 + $0x260] sm:$0xff]
    %v2288 = vld [vmem:[%s2 + $0x268] sm:$0xff]
    %v2289 = vld [vmem:[%s2 + $0x270] sm:$0xff]
    %v2290 = vld [vmem:[%s2 + $0x278] sm:$0xff]
    %v2291 = vld [vmem:[%s2 + $0x280] sm:$0xff]
    %v2292 = vld [vmem:[%s2 + $0x288] sm:$0xff]
    %v2293 = vld [vmem:[%s2 + $0x290] sm:$0xff]
    %v2294 = vld [vmem:[%s2 + $0x298] sm:$0xff]
    %v2295 = vld [vmem:[%s2 + $0x2a0] sm:$0xff]
    %v2296 = vld [vmem:[%s2 + $0x2a8] sm:$0xff]
    %v2297 = vld [vmem:[%s2 + $0x2b0] sm:$0xff]
    %v2298 = vld [vmem:[%s2 + $0x2b8] sm:$0xff]
    %v2299 = vld [vmem:[%s2 + $0x2c0] sm:$0xff]
    %v2300 = vld [vmem:[%s2 + $0x2c8] sm:$0xff]
    %v2301 = vld [vmem:[%s2 + $0x2d0] sm:$0xff]
    %v2302 = vld [vmem:[%s2 + $0x2d8] sm:$0xff]
    %v2303 = vld [vmem:[%s2 + $0x2e0] sm:$0xff]
    %v2304 = vld [vmem:[%s2 + $0x2e8] sm:$0xff]
    %v2305 = vld [vmem:[%s2 + $0x2f0] sm:$0xff]
    %v2306 = vld [vmem:[%s2 + $0x2f8] sm:$0xff]
    %v2307 = vld [vmem:[%s2 + $0x300] sm:$0xff]
    %v2308 = vld [vmem:[%s2 + $0x308] sm:$0xff]
    %v2309 = vld [vmem:[%s2 + $0x310] sm:$0xff]
    %v2310 = vld [vmem:[%s2 + $0x318] sm:$0xff]
    %v2311 = vld [vmem:[%s2 + $0x320] sm:$0xff]
    %v2312 = vld [vmem:[%s2 + $0x328] sm:$0xff]
    %v2313 = vld [vmem:[%s2 + $0x330] sm:$0xff]
    %v2314 = vld [vmem:[%s2 + $0x338] sm:$0xff]
    %v2315 = vld [vmem:[%s2 + $0x340] sm:$0xff]
    %v2316 = vld [vmem:[%s2 + $0x348] sm:$0xff]
    %v2317 = vld [vmem:[%s2 + $0x350] sm:$0xff]
    %v2318 = vld [vmem:[%s2 + $0x358] sm:$0xff]
    %v2319 = vld [vmem:[%s2 + $0x360] sm:$0xff]
    %v2320 = vld [vmem:[%s2 + $0x368] sm:$0xff]
    %v2321 = vld [vmem:[%s2 + $0x370] sm:$0xff]
    %v2322 = vld [vmem:[%s2 + $0x378] sm:$0xf]
    %v2323 = vld [vmem:[%s2 + $0x380] sm:$0xf]
    %v2324 = vld [vmem:[%s2 + $0x388] sm:$0xf]
    %s2325 = scalar_lea.vmem %s2, 912
    %v2326 = vld [vmem:[%s2325] sm:$0xff]
    %v2327 = vld [vmem:[%s2325 + $0x8] sm:$0xff]
    %v2328 = vld [vmem:[%s2325 + $0x10] sm:$0xff]
    %v2329 = vld [vmem:[%s2325 + $0x18] sm:$0xff]
    %v2330 = vld [vmem:[%s2325 + $0x20] sm:$0xff]
    %v2331 = vld [vmem:[%s2325 + $0x28] sm:$0xff]
    %v2332 = vld [vmem:[%s2325 + $0x30] sm:$0xff]
    %v2333 = vld [vmem:[%s2325 + $0x38] sm:$0xff]
    %v2334 = vld [vmem:[%s2325 + $0x40] sm:$0xff]
    %v2335 = vld [vmem:[%s2325 + $0x48] sm:$0xff]
    %v2336 = vld [vmem:[%s2325 + $0x50] sm:$0xff]
    %v2337 = vld [vmem:[%s2325 + $0x58] sm:$0xff]
    %v2338 = vld [vmem:[%s2325 + $0x60] sm:$0xff]
    %v2339 = vld [vmem:[%s2325 + $0x68] sm:$0xff]
    %v2340 = vld [vmem:[%s2325 + $0x70] sm:$0xff]
    %v2341 = vld [vmem:[%s2325 + $0x78] sm:$0xff]
    %v2342 = vld [vmem:[%s2325 + $0x80] sm:$0xff]
    %v2343 = vld [vmem:[%s2325 + $0x88] sm:$0xff]
    %v2344 = vld [vmem:[%s2325 + $0x90] sm:$0xff]
    %v2345 = vld [vmem:[%s2325 + $0x98] sm:$0xff]
    %v2346 = vld [vmem:[%s2325 + $0xa0] sm:$0xff]
    %v2347 = vld [vmem:[%s2325 + $0xa8] sm:$0xff]
    %v2348 = vld [vmem:[%s2325 + $0xb0] sm:$0xff]
    %v2349 = vld [vmem:[%s2325 + $0xb8] sm:$0xff]
    %v2350 = vld [vmem:[%s2325 + $0xc0] sm:$0xff]
    %v2351 = vld [vmem:[%s2325 + $0xc8] sm:$0xff]
    %v2352 = vld [vmem:[%s2325 + $0xd0] sm:$0xff]
    %v2353 = vld [vmem:[%s2325 + $0xd8] sm:$0xff]
    %v2354 = vld [vmem:[%s2325 + $0xe0] sm:$0xff]
    %v2355 = vld [vmem:[%s2325 + $0xe8] sm:$0xff]
    %v2356 = vld [vmem:[%s2325 + $0xf0] sm:$0xff]
    %v2357 = vld [vmem:[%s2325 + $0xf8] sm:$0xff]
    %v2358 = vld [vmem:[%s2325 + $0x100] sm:$0xff]
    %v2359 = vld [vmem:[%s2325 + $0x108] sm:$0xff]
    %v2360 = vld [vmem:[%s2325 + $0x110] sm:$0xff]
    %v2361 = vld [vmem:[%s2325 + $0x118] sm:$0xff]
    %v2362 = vld [vmem:[%s2325 + $0x120] sm:$0xff]
    %v2363 = vld [vmem:[%s2325 + $0x128] sm:$0xff]
    %v2364 = vld [vmem:[%s2325 + $0x130] sm:$0xff]
    %v2365 = vld [vmem:[%s2325 + $0x138] sm:$0xff]
    %v2366 = vld [vmem:[%s2325 + $0x140] sm:$0xff]
    %v2367 = vld [vmem:[%s2325 + $0x148] sm:$0xff]
    %v2368 = vld [vmem:[%s2325 + $0x150] sm:$0xff]
    %v2369 = vld [vmem:[%s2325 + $0x158] sm:$0xff]
    %v2370 = vld [vmem:[%s2325 + $0x160] sm:$0xff]
    %v2371 = vld [vmem:[%s2325 + $0x168] sm:$0xff]
    %v2372 = vld [vmem:[%s2325 + $0x170] sm:$0xff]
    %v2373 = vld [vmem:[%s2325 + $0x178] sm:$0xff]
    %v2374 = vld [vmem:[%s2325 + $0x180] sm:$0xff]
    %v2375 = vld [vmem:[%s2325 + $0x188] sm:$0xff]
    %v2376 = vld [vmem:[%s2325 + $0x190] sm:$0xff]
    %v2377 = vld [vmem:[%s2325 + $0x198] sm:$0xff]
    %v2378 = vld [vmem:[%s2325 + $0x1a0] sm:$0xff]
    %v2379 = vld [vmem:[%s2325 + $0x1a8] sm:$0xff]
    %v2380 = vld [vmem:[%s2325 + $0x1b0] sm:$0xff]
    %v2381 = vld [vmem:[%s2325 + $0x1b8] sm:$0xff]
    %v2382 = vld [vmem:[%s2325 + $0x1c0] sm:$0xff]
    %v2383 = vld [vmem:[%s2325 + $0x1c8] sm:$0xff]
    %v2384 = vld [vmem:[%s2325 + $0x1d0] sm:$0xff]
    %v2385 = vld [vmem:[%s2325 + $0x1d8] sm:$0xff]
    %v2386 = vld [vmem:[%s2325 + $0x1e0] sm:$0xff]
    %v2387 = vld [vmem:[%s2325 + $0x1e8] sm:$0xff]
    %v2388 = vld [vmem:[%s2325 + $0x1f0] sm:$0xff]
    %v2389 = vld [vmem:[%s2325 + $0x1f8] sm:$0xff]
    %v2390 = vld [vmem:[%s2325 + $0x200] sm:$0xff]
    %v2391 = vld [vmem:[%s2325 + $0x208] sm:$0xff]
    %v2392 = vld [vmem:[%s2325 + $0x210] sm:$0xff]
    %v2393 = vld [vmem:[%s2325 + $0x218] sm:$0xff]
    %v2394 = vld [vmem:[%s2325 + $0x220] sm:$0xff]
    %v2395 = vld [vmem:[%s2325 + $0x228] sm:$0xff]
    %v2396 = vld [vmem:[%s2325 + $0x230] sm:$0xff]
    %v2397 = vld [vmem:[%s2325 + $0x238] sm:$0xff]
    %v2398 = vld [vmem:[%s2325 + $0x240] sm:$0xff]
    %v2399 = vld [vmem:[%s2325 + $0x248] sm:$0xff]
    %v2400 = vld [vmem:[%s2325 + $0x250] sm:$0xff]
    %v2401 = vld [vmem:[%s2325 + $0x258] sm:$0xff]
    %v2402 = vld [vmem:[%s2325 + $0x260] sm:$0xff]
    %v2403 = vld [vmem:[%s2325 + $0x268] sm:$0xff]
    %v2404 = vld [vmem:[%s2325 + $0x270] sm:$0xff]
    %v2405 = vld [vmem:[%s2325 + $0x278] sm:$0xff]
    %v2406 = vld [vmem:[%s2325 + $0x280] sm:$0xff]
    %v2407 = vld [vmem:[%s2325 + $0x288] sm:$0xff]
    %v2408 = vld [vmem:[%s2325 + $0x290] sm:$0xff]
    %v2409 = vld [vmem:[%s2325 + $0x298] sm:$0xff]
    %v2410 = vld [vmem:[%s2325 + $0x2a0] sm:$0xff]
    %v2411 = vld [vmem:[%s2325 + $0x2a8] sm:$0xff]
    %v2412 = vld [vmem:[%s2325 + $0x2b0] sm:$0xff]
    %v2413 = vld [vmem:[%s2325 + $0x2b8] sm:$0xff]
    %v2414 = vld [vmem:[%s2325 + $0x2c0] sm:$0xff]
    %v2415 = vld [vmem:[%s2325 + $0x2c8] sm:$0xff]
    %v2416 = vld [vmem:[%s2325 + $0x2d0] sm:$0xff]
    %v2417 = vld [vmem:[%s2325 + $0x2d8] sm:$0xff]
    %v2418 = vld [vmem:[%s2325 + $0x2e0] sm:$0xff]
    %v2419 = vld [vmem:[%s2325 + $0x2e8] sm:$0xff]
    %v2420 = vld [vmem:[%s2325 + $0x2f0] sm:$0xff]
    %v2421 = vld [vmem:[%s2325 + $0x2f8] sm:$0xff]
    %v2422 = vld [vmem:[%s2325 + $0x300] sm:$0xff]
    %v2423 = vld [vmem:[%s2325 + $0x308] sm:$0xff]
    %v2424 = vld [vmem:[%s2325 + $0x310] sm:$0xff]
    %v2425 = vld [vmem:[%s2325 + $0x318] sm:$0xff]
    %v2426 = vld [vmem:[%s2325 + $0x320] sm:$0xff]
    %v2427 = vld [vmem:[%s2325 + $0x328] sm:$0xff]
    %v2428 = vld [vmem:[%s2325 + $0x330] sm:$0xff]
    %v2429 = vld [vmem:[%s2325 + $0x338] sm:$0xff]
    %v2430 = vld [vmem:[%s2325 + $0x340] sm:$0xff]
    %v2431 = vld [vmem:[%s2325 + $0x348] sm:$0xff]
    %v2432 = vld [vmem:[%s2325 + $0x350] sm:$0xff]
    %v2433 = vld [vmem:[%s2325 + $0x358] sm:$0xff]
    %v2434 = vld [vmem:[%s2325 + $0x360] sm:$0xff]
    %v2435 = vld [vmem:[%s2325 + $0x368] sm:$0xff]
    %v2436 = vld [vmem:[%s2325 + $0x370] sm:$0xff]
    %v2437 = vld [vmem:[%s2325 + $0x378] sm:$0xf]
    %v2438 = vld [vmem:[%s2325 + $0x380] sm:$0xf]
    %v2439 = vld [vmem:[%s2325 + $0x388] sm:$0xf]
    %v2441 = vsel %vm798, %v2210, 0
    %v2444 = vsel %vm802, %v2437, 0
    %v2447 = vsel %vm802, %v2438, 0
    %v2450 = vsel %vm802, %v2439, 0
    %2452 = vmatpush.msra.mxu0 %v2371
    %2453 = vmatpush.msra.mxu0 %v2368
    %2454 = vmatpush.msra.mxu0 %v2365
    %2455 = vmatpush.msra.mxu0 %v2362
    %2456 = vmatpush.msra.mxu0 %v2359
    %2457 = vmatpush.msra.mxu0 %v2356
    %2458 = vmatpush.msra.mxu0 %v2353
    %2459 = vmatpush.msra.mxu0 %v2350
    %2460 = vmatpush.msra.mxu0 %v2347
    %2461 = vmatpush.msra.mxu0 %v2344
    %2462 = vmatpush.msra.mxu0 %v2341
    %2463 = vmatpush.msra.mxu0 %v2338
    %2464 = vmatpush.msra.mxu0 %v2335
    %2465 = vmatpush.msra.mxu0 %v2332
    %2466 = vmatpush.msra.mxu0 %v2329
    %2467 = vmatpush.msra.mxu0 %v2326
    %2468 = vmatmul.f32.gmra.mxu0 %v2208
    %v2469 = vpop.f32.mrf.mxu0
    %v2470 = vadd.f32 0.0, %v2469
    %2471 = vdwg.mxu0
    %2472 = vmatpush.msra.mxu0 %v2419
    %2473 = vmatpush.msra.mxu0 %v2416
    %2474 = vmatpush.msra.mxu0 %v2413
    %2475 = vmatpush.msra.mxu0 %v2410
    %2476 = vmatpush.msra.mxu0 %v2407
    %2477 = vmatpush.msra.mxu0 %v2404
    %2478 = vmatpush.msra.mxu0 %v2401
    %2479 = vmatpush.msra.mxu0 %v2398
    %2480 = vmatpush.msra.mxu0 %v2395
    %2481 = vmatpush.msra.mxu0 %v2392
    %2482 = vmatpush.msra.mxu0 %v2389
    %2483 = vmatpush.msra.mxu0 %v2386
    %2484 = vmatpush.msra.mxu0 %v2383
    %2485 = vmatpush.msra.mxu0 %v2380
    %2486 = vmatpush.msra.mxu0 %v2377
    %2487 = vmatpush.msra.mxu0 %v2374
    %2488 = vmatmul.f32.gmra.mxu0 %v2209
    %v2489 = vpop.f32.mrf.mxu0
    %v2490 = vadd.f32 %v2470, %v2489
    %2491 = vdwg.mxu0
    %2492 = vmatpush.msra.mxu0 0.0
    %2493 = vmatpush.msra.mxu0 0.0
    %2494 = vmatpush.msra.mxu0 0.0
    %2495 = vmatpush.msra.mxu0 0.0
    %2496 = vmatpush.msra.mxu0 0.0
    %2497 = vmatpush.msra.mxu0 0.0
    %2498 = vmatpush.msra.mxu0 0.0
    %2499 = vmatpush.msra.mxu0 0.0
    %2500 = vmatpush.msra.mxu0 0.0
    %2501 = vmatpush.msra.mxu0 0.0
    %2502 = vmatpush.msra.mxu0 %v2444
    %2503 = vmatpush.msra.mxu0 %v2434
    %2504 = vmatpush.msra.mxu0 %v2431
    %2505 = vmatpush.msra.mxu0 %v2428
    %2506 = vmatpush.msra.mxu0 %v2425
    %2507 = vmatpush.msra.mxu0 %v2422
    %2508 = vmatmul.f32.gmra.mxu0 %v2441
    %v2509 = vpop.f32.mrf.mxu0
    %v2510 = vadd.f32 %v2490, %v2509
    %2511 = vdwg.mxu0
    %2512 = vmatpush.msra.mxu0 %v2372
    %2513 = vmatpush.msra.mxu0 %v2369
    %2514 = vmatpush.msra.mxu0 %v2366
    %2515 = vmatpush.msra.mxu0 %v2363
    %2516 = vmatpush.msra.mxu0 %v2360
    %2517 = vmatpush.msra.mxu0 %v2357
    %2518 = vmatpush.msra.mxu0 %v2354
    %2519 = vmatpush.msra.mxu0 %v2351
    %2520 = vmatpush.msra.mxu0 %v2348
    %2521 = vmatpush.msra.mxu0 %v2345
    %2522 = vmatpush.msra.mxu0 %v2342
    %2523 = vmatpush.msra.mxu0 %v2339
    %2524 = vmatpush.msra.mxu0 %v2336
    %2525 = vmatpush.msra.mxu0 %v2333
    %2526 = vmatpush.msra.mxu0 %v2330
    %2527 = vmatpush.msra.mxu0 %v2327
    %2528 = vmatmul.f32.gmra.mxu0 %v2208
    %v2529 = vpop.f32.mrf.mxu0
    %v2530 = vadd.f32 0.0, %v2529
    %2531 = vdwg.mxu0
    %2532 = vmatpush.msra.mxu0 %v2420
    %2533 = vmatpush.msra.mxu0 %v2417
    %2534 = vmatpush.msra.mxu0 %v2414
    %2535 = vmatpush.msra.mxu0 %v2411
    %2536 = vmatpush.msra.mxu0 %v2408
    %2537 = vmatpush.msra.mxu0 %v2405
    %2538 = vmatpush.msra.mxu0 %v2402
    %2539 = vmatpush.msra.mxu0 %v2399
    %2540 = vmatpush.msra.mxu0 %v2396
    %2541 = vmatpush.msra.mxu0 %v2393
    %2542 = vmatpush.msra.mxu0 %v2390
    %2543 = vmatpush.msra.mxu0 %v2387
    %2544 = vmatpush.msra.mxu0 %v2384
    %2545 = vmatpush.msra.mxu0 %v2381
    %2546 = vmatpush.msra.mxu0 %v2378
    %2547 = vmatpush.msra.mxu0 %v2375
    %2548 = vmatmul.f32.gmra.mxu0 %v2209
    %v2549 = vpop.f32.mrf.mxu0
    %v2550 = vadd.f32 %v2530, %v2549
    %2551 = vdwg.mxu0
    %2552 = vmatpush.msra.mxu0 0.0
    %2553 = vmatpush.msra.mxu0 0.0
    %2554 = vmatpush.msra.mxu0 0.0
    %2555 = vmatpush.msra.mxu0 0.0
    %2556 = vmatpush.msra.mxu0 0.0
    %2557 = vmatpush.msra.mxu0 0.0
    %2558 = vmatpush.msra.mxu0 0.0
    %2559 = vmatpush.msra.mxu0 0.0
    %2560 = vmatpush.msra.mxu0 0.0
    %2561 = vmatpush.msra.mxu0 0.0
    %2562 = vmatpush.msra.mxu0 %v2447
    %2563 = vmatpush.msra.mxu0 %v2435
    %2564 = vmatpush.msra.mxu0 %v2432
    %2565 = vmatpush.msra.mxu0 %v2429
    %2566 = vmatpush.msra.mxu0 %v2426
    %2567 = vmatpush.msra.mxu0 %v2423
    %2568 = vmatmul.f32.gmra.mxu0 %v2441
    %v2569 = vpop.f32.mrf.mxu0
    %v2570 = vadd.f32 %v2550, %v2569
    %2571 = vdwg.mxu0
    %2572 = vmatpush.msra.mxu0 %v2373
    %2573 = vmatpush.msra.mxu0 %v2370
    %2574 = vmatpush.msra.mxu0 %v2367
    %2575 = vmatpush.msra.mxu0 %v2364
    %2576 = vmatpush.msra.mxu0 %v2361
    %2577 = vmatpush.msra.mxu0 %v2358
    %2578 = vmatpush.msra.mxu0 %v2355
    %2579 = vmatpush.msra.mxu0 %v2352
    %2580 = vmatpush.msra.mxu0 %v2349
    %2581 = vmatpush.msra.mxu0 %v2346
    %2582 = vmatpush.msra.mxu0 %v2343
    %2583 = vmatpush.msra.mxu0 %v2340
    %2584 = vmatpush.msra.mxu0 %v2337
    %2585 = vmatpush.msra.mxu0 %v2334
    %2586 = vmatpush.msra.mxu0 %v2331
    %2587 = vmatpush.msra.mxu0 %v2328
    %2588 = vmatmul.f32.gmra.mxu0 %v2208
    %v2589 = vpop.f32.mrf.mxu0
    %v2590 = vadd.f32 0.0, %v2589
    %2591 = vdwg.mxu0
    %2592 = vmatpush.msra.mxu0 %v2421
    %2593 = vmatpush.msra.mxu0 %v2418
    %2594 = vmatpush.msra.mxu0 %v2415
    %2595 = vmatpush.msra.mxu0 %v2412
    %2596 = vmatpush.msra.mxu0 %v2409
    %2597 = vmatpush.msra.mxu0 %v2406
    %2598 = vmatpush.msra.mxu0 %v2403
    %2599 = vmatpush.msra.mxu0 %v2400
    %2600 = vmatpush.msra.mxu0 %v2397
    %2601 = vmatpush.msra.mxu0 %v2394
    %2602 = vmatpush.msra.mxu0 %v2391
    %2603 = vmatpush.msra.mxu0 %v2388
    %2604 = vmatpush.msra.mxu0 %v2385
    %2605 = vmatpush.msra.mxu0 %v2382
    %2606 = vmatpush.msra.mxu0 %v2379
    %2607 = vmatpush.msra.mxu0 %v2376
    %2608 = vmatmul.f32.gmra.mxu0 %v2209
    %v2609 = vpop.f32.mrf.mxu0
    %v2610 = vadd.f32 %v2590, %v2609
    %2611 = vdwg.mxu0
    %2612 = vmatpush.msra.mxu0 0.0
    %2613 = vmatpush.msra.mxu0 0.0
    %2614 = vmatpush.msra.mxu0 0.0
    %2615 = vmatpush.msra.mxu0 0.0
    %2616 = vmatpush.msra.mxu0 0.0
    %2617 = vmatpush.msra.mxu0 0.0
    %2618 = vmatpush.msra.mxu0 0.0
    %2619 = vmatpush.msra.mxu0 0.0
    %2620 = vmatpush.msra.mxu0 0.0
    %2621 = vmatpush.msra.mxu0 0.0
    %2622 = vmatpush.msra.mxu0 %v2450
    %2623 = vmatpush.msra.mxu0 %v2436
    %2624 = vmatpush.msra.mxu0 %v2433
    %2625 = vmatpush.msra.mxu0 %v2430
    %2626 = vmatpush.msra.mxu0 %v2427
    %2627 = vmatpush.msra.mxu0 %v2424
    %2628 = vmatmul.f32.gmra.mxu0 %v2441
    %v2629 = vpop.f32.mrf.mxu0
    %v2630 = vadd.f32 %v2610, %v2629
    %2631 = vdwg.mxu0
    %v2633 = vsel %vm798, %v2073, 0
    %v2636 = vsel %vm802, %v2322, 0
    %v2639 = vsel %vm802, %v2323, 0
    %v2642 = vsel %vm802, %v2324, 0
    %2644 = vmatpush.msra.mxu0 %v2256
    %2645 = vmatpush.msra.mxu0 %v2253
    %2646 = vmatpush.msra.mxu0 %v2250
    %2647 = vmatpush.msra.mxu0 %v2247
    %2648 = vmatpush.msra.mxu0 %v2244
    %2649 = vmatpush.msra.mxu0 %v2241
    %2650 = vmatpush.msra.mxu0 %v2238
    %2651 = vmatpush.msra.mxu0 %v2235
    %2652 = vmatpush.msra.mxu0 %v2232
    %2653 = vmatpush.msra.mxu0 %v2229
    %2654 = vmatpush.msra.mxu0 %v2226
    %2655 = vmatpush.msra.mxu0 %v2223
    %2656 = vmatpush.msra.mxu0 %v2220
    %2657 = vmatpush.msra.mxu0 %v2217
    %2658 = vmatpush.msra.mxu0 %v2214
    %2659 = vmatpush.msra.mxu0 %v2211
    %2660 = vmatmul.f32.gmra.mxu0 %v2071
    %v2661 = vpop.f32.mrf.mxu0
    %v2662 = vadd.f32 %v2510, %v2661
    %2663 = vdwg.mxu0
    %2664 = vmatpush.msra.mxu0 %v2304
    %2665 = vmatpush.msra.mxu0 %v2301
    %2666 = vmatpush.msra.mxu0 %v2298
    %2667 = vmatpush.msra.mxu0 %v2295
    %2668 = vmatpush.msra.mxu0 %v2292
    %2669 = vmatpush.msra.mxu0 %v2289
    %2670 = vmatpush.msra.mxu0 %v2286
    %2671 = vmatpush.msra.mxu0 %v2283
    %2672 = vmatpush.msra.mxu0 %v2280
    %2673 = vmatpush.msra.mxu0 %v2277
    %2674 = vmatpush.msra.mxu0 %v2274
    %2675 = vmatpush.msra.mxu0 %v2271
    %2676 = vmatpush.msra.mxu0 %v2268
    %2677 = vmatpush.msra.mxu0 %v2265
    %2678 = vmatpush.msra.mxu0 %v2262
    %2679 = vmatpush.msra.mxu0 %v2259
    %2680 = vmatmul.f32.gmra.mxu0 %v2072
    %v2681 = vpop.f32.mrf.mxu0
    %v2682 = vadd.f32 %v2662, %v2681
    %2683 = vdwg.mxu0
    %2684 = vmatpush.msra.mxu0 0.0
    %2685 = vmatpush.msra.mxu0 0.0
    %2686 = vmatpush.msra.mxu0 0.0
    %2687 = vmatpush.msra.mxu0 0.0
    %2688 = vmatpush.msra.mxu0 0.0
    %2689 = vmatpush.msra.mxu0 0.0
    %2690 = vmatpush.msra.mxu0 0.0
    %2691 = vmatpush.msra.mxu0 0.0
    %2692 = vmatpush.msra.mxu0 0.0
    %2693 = vmatpush.msra.mxu0 0.0
    %2694 = vmatpush.msra.mxu0 %v2636
    %2695 = vmatpush.msra.mxu0 %v2319
    %2696 = vmatpush.msra.mxu0 %v2316
    %2697 = vmatpush.msra.mxu0 %v2313
    %2698 = vmatpush.msra.mxu0 %v2310
    %2699 = vmatpush.msra.mxu0 %v2307
    %2700 = vmatmul.f32.gmra.mxu0 %v2633
    %v2701 = vpop.f32.mrf.mxu0
    %v2702 = vadd.f32 %v2682, %v2701
    %2703 = vdwg.mxu0
    %2704 = vmatpush.msra.mxu0 %v2257
    %2705 = vmatpush.msra.mxu0 %v2254
    %2706 = vmatpush.msra.mxu0 %v2251
    %2707 = vmatpush.msra.mxu0 %v2248
    %2708 = vmatpush.msra.mxu0 %v2245
    %2709 = vmatpush.msra.mxu0 %v2242
    %2710 = vmatpush.msra.mxu0 %v2239
    %2711 = vmatpush.msra.mxu0 %v2236
    %2712 = vmatpush.msra.mxu0 %v2233
    %2713 = vmatpush.msra.mxu0 %v2230
    %2714 = vmatpush.msra.mxu0 %v2227
    %2715 = vmatpush.msra.mxu0 %v2224
    %2716 = vmatpush.msra.mxu0 %v2221
    %2717 = vmatpush.msra.mxu0 %v2218
    %2718 = vmatpush.msra.mxu0 %v2215
    %2719 = vmatpush.msra.mxu0 %v2212
    %2720 = vmatmul.f32.gmra.mxu0 %v2071
    %v2721 = vpop.f32.mrf.mxu0
    %v2722 = vadd.f32 %v2570, %v2721
    %2723 = vdwg.mxu0
    %2724 = vmatpush.msra.mxu0 %v2305
    %2725 = vmatpush.msra.mxu0 %v2302
    %2726 = vmatpush.msra.mxu0 %v2299
    %2727 = vmatpush.msra.mxu0 %v2296
    %2728 = vmatpush.msra.mxu0 %v2293
    %2729 = vmatpush.msra.mxu0 %v2290
    %2730 = vmatpush.msra.mxu0 %v2287
    %2731 = vmatpush.msra.mxu0 %v2284
    %2732 = vmatpush.msra.mxu0 %v2281
    %2733 = vmatpush.msra.mxu0 %v2278
    %2734 = vmatpush.msra.mxu0 %v2275
    %2735 = vmatpush.msra.mxu0 %v2272
    %2736 = vmatpush.msra.mxu0 %v2269
    %2737 = vmatpush.msra.mxu0 %v2266
    %2738 = vmatpush.msra.mxu0 %v2263
    %2739 = vmatpush.msra.mxu0 %v2260
    %2740 = vmatmul.f32.gmra.mxu0 %v2072
    %v2741 = vpop.f32.mrf.mxu0
    %v2742 = vadd.f32 %v2722, %v2741
    %2743 = vdwg.mxu0
    %2744 = vmatpush.msra.mxu0 0.0
    %2745 = vmatpush.msra.mxu0 0.0
    %2746 = vmatpush.msra.mxu0 0.0
    %2747 = vmatpush.msra.mxu0 0.0
    %2748 = vmatpush.msra.mxu0 0.0
    %2749 = vmatpush.msra.mxu0 0.0
    %2750 = vmatpush.msra.mxu0 0.0
    %2751 = vmatpush.msra.mxu0 0.0
    %2752 = vmatpush.msra.mxu0 0.0
    %2753 = vmatpush.msra.mxu0 0.0
    %2754 = vmatpush.msra.mxu0 %v2639
    %2755 = vmatpush.msra.mxu0 %v2320
    %2756 = vmatpush.msra.mxu0 %v2317
    %2757 = vmatpush.msra.mxu0 %v2314
    %2758 = vmatpush.msra.mxu0 %v2311
    %2759 = vmatpush.msra.mxu0 %v2308
    %2760 = vmatmul.f32.gmra.mxu0 %v2633
    %v2761 = vpop.f32.mrf.mxu0
    %v2762 = vadd.f32 %v2742, %v2761
    %2763 = vdwg.mxu0
    %2764 = vmatpush.msra.mxu0 %v2258
    %2765 = vmatpush.msra.mxu0 %v2255
    %2766 = vmatpush.msra.mxu0 %v2252
    %2767 = vmatpush.msra.mxu0 %v2249
    %2768 = vmatpush.msra.mxu0 %v2246
    %2769 = vmatpush.msra.mxu0 %v2243
    %2770 = vmatpush.msra.mxu0 %v2240
    %2771 = vmatpush.msra.mxu0 %v2237
    %2772 = vmatpush.msra.mxu0 %v2234
    %2773 = vmatpush.msra.mxu0 %v2231
    %2774 = vmatpush.msra.mxu0 %v2228
    %2775 = vmatpush.msra.mxu0 %v2225
    %2776 = vmatpush.msra.mxu0 %v2222
    %2777 = vmatpush.msra.mxu0 %v2219
    %2778 = vmatpush.msra.mxu0 %v2216
    %2779 = vmatpush.msra.mxu0 %v2213
    %2780 = vmatmul.f32.gmra.mxu0 %v2071
    %v2781 = vpop.f32.mrf.mxu0
    %v2782 = vadd.f32 %v2630, %v2781
    %2783 = vdwg.mxu0
    %2784 = vmatpush.msra.mxu0 %v2306
    %2785 = vmatpush.msra.mxu0 %v2303
    %2786 = vmatpush.msra.mxu0 %v2300
    %2787 = vmatpush.msra.mxu0 %v2297
    %2788 = vmatpush.msra.mxu0 %v2294
    %2789 = vmatpush.msra.mxu0 %v2291
    %2790 = vmatpush.msra.mxu0 %v2288
    %2791 = vmatpush.msra.mxu0 %v2285
    %2792 = vmatpush.msra.mxu0 %v2282
    %2793 = vmatpush.msra.mxu0 %v2279
    %2794 = vmatpush.msra.mxu0 %v2276
    %2795 = vmatpush.msra.mxu0 %v2273
    %2796 = vmatpush.msra.mxu0 %v2270
    %2797 = vmatpush.msra.mxu0 %v2267
    %2798 = vmatpush.msra.mxu0 %v2264
    %2799 = vmatpush.msra.mxu0 %v2261
    %2800 = vmatmul.f32.gmra.mxu0 %v2072
    %v2801 = vpop.f32.mrf.mxu0
    %v2802 = vadd.f32 %v2782, %v2801
    %2803 = vdwg.mxu0
    %2804 = vmatpush.msra.mxu0 0.0
    %2805 = vmatpush.msra.mxu0 0.0
    %2806 = vmatpush.msra.mxu0 0.0
    %2807 = vmatpush.msra.mxu0 0.0
    %2808 = vmatpush.msra.mxu0 0.0
    %2809 = vmatpush.msra.mxu0 0.0
    %2810 = vmatpush.msra.mxu0 0.0
    %2811 = vmatpush.msra.mxu0 0.0
    %2812 = vmatpush.msra.mxu0 0.0
    %2813 = vmatpush.msra.mxu0 0.0
    %2814 = vmatpush.msra.mxu0 %v2642
    %2815 = vmatpush.msra.mxu0 %v2321
    %2816 = vmatpush.msra.mxu0 %v2318
    %2817 = vmatpush.msra.mxu0 %v2315
    %2818 = vmatpush.msra.mxu0 %v2312
    %2819 = vmatpush.msra.mxu0 %v2309
    %2820 = vmatmul.f32.gmra.mxu0 %v2633
    %v2821 = vpop.f32.mrf.mxu0
    %v2822 = vadd.f32 %v2802, %v2821
    %2823 = vdwg.mxu0
    %v2824 = vld [vmem:[#allocation8 + $0x18] sm:$0x7]
    %v2826 = vperm.slane %v2824, 0
    %v2827 = vperm.slane %v2824, 1
    %v2828 = vperm.slane %v2824, 2
    %v2832 = vadd.f32 %v2702, %v2826
    %v2833 = vadd.f32 %v2762, %v2827
    %v2834 = vadd.f32 %v2822, %v2828
    %v2836 = vsel %vm798, %v2834, 0
    %2838 = vmatpush.xpose.msra.mxu0 0.0
    %2839 = vmatpush.xpose.msra.mxu0 0.0
    %2840 = vmatpush.xpose.msra.mxu0 0.0
    %2841 = vmatpush.xpose.msra.mxu0 0.0
    %2842 = vmatpush.xpose.msra.mxu0 0.0
    %2843 = vmatpush.xpose.msra.mxu0 0.0
    %2844 = vmatpush.xpose.msra.mxu0 0.0
    %2845 = vmatpush.xpose.msra.mxu0 0.0
    %2846 = vmatpush.xpose.msra.mxu0 0.0
    %2847 = vmatpush.xpose.msra.mxu0 0.0
    %2848 = vmatpush.xpose.msra.mxu0 0.0
    %2849 = vmatpush.xpose.msra.mxu0 0.0
    %2850 = vmatpush.xpose.msra.mxu0 0.0
    %2851 = vmatpush.xpose.msra.mxu0 0.0
    %2852 = vmatpush.xpose.msra.mxu0 0.0
    %2853 = vmatpush.xpose.msra.mxu0 %v2832
    %2854 = vmatmul.f32.gmra.mxu0 %v2832
    %v2855 = vpop.f32.mrf.mxu0
    %v2856 = vadd.f32 0.0, %v2855
    %2857 = vdwg.mxu0
    %2858 = vmatpush.xpose.msra.mxu0 0.0
    %2859 = vmatpush.xpose.msra.mxu0 0.0
    %2860 = vmatpush.xpose.msra.mxu0 0.0
    %2861 = vmatpush.xpose.msra.mxu0 0.0
    %2862 = vmatpush.xpose.msra.mxu0 0.0
    %2863 = vmatpush.xpose.msra.mxu0 0.0
    %2864 = vmatpush.xpose.msra.mxu0 0.0
    %2865 = vmatpush.xpose.msra.mxu0 0.0
    %2866 = vmatpush.xpose.msra.mxu0 0.0
    %2867 = vmatpush.xpose.msra.mxu0 0.0
    %2868 = vmatpush.xpose.msra.mxu0 0.0
    %2869 = vmatpush.xpose.msra.mxu0 0.0
    %2870 = vmatpush.xpose.msra.mxu0 0.0
    %2871 = vmatpush.xpose.msra.mxu0 0.0
    %2872 = vmatpush.xpose.msra.mxu0 0.0
    %2873 = vmatpush.xpose.msra.mxu0 %v2833
    %2874 = vmatmul.f32.gmra.mxu0 %v2833
    %v2875 = vpop.f32.mrf.mxu0
    %v2876 = vadd.f32 %v2856, %v2875
    %2877 = vdwg.mxu0
    %2878 = vmatpush.xpose.msra.mxu0 0.0
    %2879 = vmatpush.xpose.msra.mxu0 0.0
    %2880 = vmatpush.xpose.msra.mxu0 0.0
    %2881 = vmatpush.xpose.msra.mxu0 0.0
    %2882 = vmatpush.xpose.msra.mxu0 0.0
    %2883 = vmatpush.xpose.msra.mxu0 0.0
    %2884 = vmatpush.xpose.msra.mxu0 0.0
    %2885 = vmatpush.xpose.msra.mxu0 0.0
    %2886 = vmatpush.xpose.msra.mxu0 0.0
    %2887 = vmatpush.xpose.msra.mxu0 0.0
    %2888 = vmatpush.xpose.msra.mxu0 0.0
    %2889 = vmatpush.xpose.msra.mxu0 0.0
    %2890 = vmatpush.xpose.msra.mxu0 0.0
    %2891 = vmatpush.xpose.msra.mxu0 0.0
    %2892 = vmatpush.xpose.msra.mxu0 0.0
    %2893 = vmatpush.xpose.msra.mxu0 %v2836
    %2894 = vmatmul.f32.gmra.mxu0 %v2836
    %v2895 = vpop.f32.mrf.mxu0
    %v2896 = vadd.f32 %v2876, %v2895
    %2897 = vdwg.mxu0
    %v2898 = vmul.f32 %v2896, 0.057735026
    %vm2899 = vcmask 64512
    %v2900 = vsel %vm2899, %v2898, -inf
    %2901 = vmax.xlane.f32.xlu0 %v2900
    %v2902 = vpop.xlane.xlu0 %2901
    %v2903 = vsub.f32 %v2898, %v2902
    %v2904 = vmul.f32 %v2903, 1.442695
    %v2905 = vpow.pop %v2904
    %v2906 = vsel %vm2899, %v2905, 0.0
    %2907 = vadd.xlane.f32.xlu0 %v2906
    %v2908 = vpop.xlane.xlu0 %2907
    %v2909 = vrcp.pop %v2908
    %v2910 = vmul.f32 %v2905, %v2909
    %v2911 = vsel %vm2899, %v2910, 0.0
    %v2912 = vrot.slane %v2911, 4
    %v2913 = vadd.f32 %v2911, %v2912
    %v2914 = vrot.slane %v2913, 2
    %v2915 = vadd.f32 %v2913, %v2914
    %v2916 = vrot.slane %v2915, 1
    %v2917 = vadd.f32 %v2915, %v2916
    %v2918 = vmul.f32 %v2917, 0.125
    %v2920 = vsel %vm2899, %v2918, 0
    %2922 = vmatpush.msra.mxu0 0.0
    %2923 = vmatpush.msra.mxu0 0.0
    %2924 = vmatpush.msra.mxu0 0.0
    %2925 = vmatpush.msra.mxu0 0.0
    %2926 = vmatpush.msra.mxu0 0.0
    %2927 = vmatpush.msra.mxu0 0.0
    %2928 = vmatpush.msra.mxu0 0.0
    %2929 = vmatpush.msra.mxu0 0.0
    %2930 = vmatpush.msra.mxu0 0.0
    %2931 = vmatpush.msra.mxu0 0.0
    %2932 = vmatpush.msra.mxu0 0.0
    %2933 = vmatpush.msra.mxu0 0.0
    %2934 = vmatpush.msra.mxu0 0.0
    %2935 = vmatpush.msra.mxu0 0.0
    %2936 = vmatpush.msra.mxu0 0.0
    %2937 = vmatpush.msra.mxu0 %v2832
    %2938 = vmatmul.f32.gmra.mxu0 %v2920
    %v2939 = vpop.f32.mrf.mxu0
    %v2940 = vadd.f32 0.0, %v2939
    %2941 = vdwg.mxu0
    %2942 = vmatpush.msra.mxu0 0.0
    %2943 = vmatpush.msra.mxu0 0.0
    %2944 = vmatpush.msra.mxu0 0.0
    %2945 = vmatpush.msra.mxu0 0.0
    %2946 = vmatpush.msra.mxu0 0.0
    %2947 = vmatpush.msra.mxu0 0.0
    %2948 = vmatpush.msra.mxu0 0.0
    %2949 = vmatpush.msra.mxu0 0.0
    %2950 = vmatpush.msra.mxu0 0.0
    %2951 = vmatpush.msra.mxu0 0.0
    %2952 = vmatpush.msra.mxu0 0.0
    %2953 = vmatpush.msra.mxu0 0.0
    %2954 = vmatpush.msra.mxu0 0.0
    %2955 = vmatpush.msra.mxu0 0.0
    %2956 = vmatpush.msra.mxu0 0.0
    %2957 = vmatpush.msra.mxu0 %v2833
    %2958 = vmatmul.f32.gmra.mxu0 %v2920
    %v2959 = vpop.f32.mrf.mxu0
    %v2960 = vadd.f32 0.0, %v2959
    %2961 = vdwg.mxu0
    %2962 = vmatpush.msra.mxu0 0.0
    %2963 = vmatpush.msra.mxu0 0.0
    %2964 = vmatpush.msra.mxu0 0.0
    %2965 = vmatpush.msra.mxu0 0.0
    %2966 = vmatpush.msra.mxu0 0.0
    %2967 = vmatpush.msra.mxu0 0.0
    %2968 = vmatpush.msra.mxu0 0.0
    %2969 = vmatpush.msra.mxu0 0.0
    %2970 = vmatpush.msra.mxu0 0.0
    %2971 = vmatpush.msra.mxu0 0.0
    %2972 = vmatpush.msra.mxu0 0.0
    %2973 = vmatpush.msra.mxu0 0.0
    %2974 = vmatpush.msra.mxu0 0.0
    %2975 = vmatpush.msra.mxu0 0.0
    %2976 = vmatpush.msra.mxu0 0.0
    %2977 = vmatpush.msra.mxu0 %v2834
    %2978 = vmatmul.f32.gmra.mxu0 %v2920
    %v2979 = vpop.f32.mrf.mxu0
    %v2980 = vadd.f32 0.0, %v2979
    %2981 = vdwg.mxu0
    %v2982 = vld [vmem:[#allocation8 + $0x1b] sm:$0x7]
    %v2984 = vperm.slane %v2982, 0
    %v2985 = vperm.slane %v2982, 1
    %v2986 = vperm.slane %v2982, 2
    %v2990 = vmul.f32 %v2940, %v2984
    %v2991 = vmul.f32 %v2960, %v2985
    %v2992 = vmul.f32 %v2980, %v2986
    %vm2993 = vcmask 1040384
    %v2994 = vsel %vm2993, %v2990, 0.0
    %v2995 = vsel %vm2993, %v2991, 0.0
    %v2996 = vadd.f32 %v2994, %v2995
    %vm2997 = vcmask 352256
    %v2998 = vsel %vm2997, %v2992, 0.0
    %v2999 = vadd.f32 %v2996, %v2998
    %3000 = vadd.xlane.f32.xlu0 %v2999
    %v3001 = vpop.xlane.xlu0 %3000
    %v3002 = vld [vmem:[#allocation8 + $0x1e] sm:$0x1]
    %v3003 = vadd.f32 %v3001, %v3002
    %v3004 = vxor.u32 %v3003, 2147483648
    %v3005 = vmul.f32 %v3004, 1.442695
    %v3006 = vpow.pop %v3005
    %v3007 = vadd.f32 %v3006, 1.0
    %v3008 = vrcp.pop %v3007
    %v3009 = vmul.f32 %v3007, %v3008
    %v3010 = vsub.f32 1.0, %v3009
    %v3011 = vmul.f32 %v3008, %v3010
    %v3012 = vadd.f32 %v3008, %v3011
    %vm3013 = vweird.f32 %v3007
    %vm3014 = vweird.f32 %v3008
    %vm3015 = vmor %vm3013, %vm3014
    %v3016 = vsel %vm3015, %v3008, %v3012
    %v3017 = vand.u32 2147483647, %v3007
    %vm3018 = vcmp.eq.f32.partialorder %v3017, 8.507059e+37
    %v3019 = vand.u32 %v3007, 2147483648
    %v3020 = vor.u32 1.1754944e-38, %v3019
    %v3021 = vsel %vm3018, %v3020, %v3016
    %v3022 = vmul.f32 1.0, %v3021
    %vm3023 = vcmask 0
    %3024 = vst.msk [vmem:[#allocation10] sm:$0x1] %vm3023, %v3022
    %v3025 = vld [vmem:[#allocation2] sm:$0x1]
    %v3026 = vsub.f32 %v3025, %v3022
    %v3027 = vmul.f32 %v3026, %v3026
    %3028 = vst.msk [vmem:[#allocation9] sm:$0x1] %vm3023, %v3027
    // Predicated region
    $region34: #{model_forward.1} parent=1 // pred_check
      _
    $region35: #{model_forward.1} parent=1 // pred_check_branch
      %3030 = sbr.rel (0) target = $region37
    $region36: #{model_forward.1} parent=1 // pred_region
      %3032 = vsyncadd [#allocation5], 0
      %s3034 = sshll.u32 [#allocation9], 4
      %s3035 = int_to_ptr.vmem [resolvable:$true] %s3034
      %s3036 = sshll.u32 %s5, 4
      %s3037 = int_to_ptr.hbm [resolvable:$true] %s3036
      %3039 = dma.vmem_to_hbm [thread:$0]  %s3035, 16, %s3037, [#allocation5]
    $region37: #{model_forward.1} parent=1 // pred_fallthru
      _
    // Predicated region
    $region38: #{model_forward.1} parent=1 // pred_check
      _
    $region39: #{model_forward.1} parent=1 // pred_check_branch
      %3041 = sbr.rel (0) target = $region41
    $region40: #{model_forward.1} parent=1 // pred_region
      %3043 = vsyncadd [#allocation11], 0
      %s3045 = sshll.u32 [#allocation10], 4
      %s3046 = int_to_ptr.vmem [resolvable:$true] %s3045
      %s3047 = sshll.u32 %s6, 4
      %s3048 = int_to_ptr.hbm [resolvable:$true] %s3047
      %3050 = dma.vmem_to_hbm [thread:$0]  %s3046, 16, %s3048, [#allocation11]
    $region41: #{model_forward.1} parent=1 // pred_fallthru
      _
    // Predicated region
    $region42: #{model_forward.1} parent=1 // pred_check
      _
    $region43: #{model_forward.1} parent=1 // pred_check_branch
      %3052 = sbr.rel (0) target = $region45
    $region44: #{model_forward.1} parent=1 // pred_region
      %3054 = dma.done [#allocation5], 16
    $region45: #{model_forward.1} parent=1 // pred_fallthru
      _
    // Predicated region
    $region46: #{model_forward.1} parent=1 // pred_check
      _
    $region47: #{model_forward.1} parent=1 // pred_check_branch
      %3056 = sbr.rel (0) target = $region49
    $region48: #{model_forward.1} parent=1 // pred_region
      %3058 = dma.done [#allocation11], 16
    $region49: #{model_forward.1} parent=1 // pred_fallthru
      _
    %3059 = vsyncpa [#allocation4], 1
    %3060 = vsyncpa [#allocation7], 1
    %3061 = vsyncpa [#allocation5], 1
    %3062 = vsyncpa [#allocation11], 1

</llo_original>
